<compile_context>
chip_gen: v7x
topology: tpu7x:2x2x1
jax: 0.10.0
libtpu: 0.0.40
codegen_flags: <defaults>
</compile_context>

<pallas_src>
import functools

import jax
import jax.numpy as jnp
import numpy as np
from jax.experimental import pallas as pl
from jax.experimental.pallas import tpu as pltpu

PAD = 0          # padding_idx of the embedding table
_LANE = 128      # TPU lane width: hidden dim padded to a multiple of this
_SUBLANE = 8


def _round_up(n, m):
    return ((n + m - 1) // m) * m


def _divisors_desc(n):
    return [d for d in range(n, 0, -1) if n % d == 0]


# --------------------------------------------------------------------------------------
# Kernel: recurrent part of one RAN direction.
# Grid = (batch_blocks [parallel], time_blocks [arbitrary, sequential]).
# Only the fused (B,Hp)x(Hp,2Hp) c-projection lives on the serial critical path; the
# x-projection was hoisted outside as one large bf16 matmul.
# --------------------------------------------------------------------------------------
def _ran_recurrence_kernel(x_ref, xp_ref, c0_ref, wifc_ref, b_ref,
                           h_ref, c_fin_ref, c_scr, *, t_blk, hp, reverse):
    t = pl.program_id(1)  # time-block index (inner, sequential axis)

    @pl.when(t == 0)
    def _():
        c_scr[...] = c0_ref[...]

    # Grid-invariant operands, loaded once per grid step (hoisted above the unroll).
    w_ifc = wifc_ref[...]                     # (Hp, 2Hp) f32 fused [W_ic | W_fc]
    b_if = b_ref[...]                         # (1, 2Hp)  f32 fused [b_i  | b_f ]

    c = c_scr[...]                            # (b_blk, Hp) f32 running cell state
    for j in range(t_blk):                    # static unroll over this block's timesteps
        s = (t_blk - 1 - j) if reverse else j
        x_t = x_ref[s].astype(jnp.float32)    # (b_blk, Hp)   residual input (bf16 stream)
        xp_t = xp_ref[s].astype(jnp.float32)  # (b_blk, 3Hp)  x @ [W_ix|W_fx|W_cx]

        # Single fused recurrent matmul, kept in f32 so no rounding error feeds back into c.
        cif = jnp.dot(c, w_ifc, preferred_element_type=jnp.float32)     # (b_blk, 2Hp)
        gates = jax.nn.sigmoid(xp_t[:, :2 * hp] + cif + b_if)           # lane-aligned splits
        i_g = gates[:, :hp]
        f_g = gates[:, hp:]
        c = i_g * xp_t[:, 2 * hp:] + f_g * c                            # f32 accumulation
        h_ref[s] = (jnp.tanh(c) + x_t).astype(h_ref.dtype)              # residual=True

    # TODO(synk): xs_mask gating (c = m*c_new + (1-m)*c_prev) not wired up — the reference
    # forward() is exercised with xs_mask=None.

    c_scr[...] = c

    @pl.when(t == pl.num_programs(1) - 1)
    def _():
        c_fin_ref[...] = c


# --------------------------------------------------------------------------------------
# Wrapper for one direction.
# --------------------------------------------------------------------------------------
def _tensorcores_per_chip():
    # Only v7x has 2 TensorCores per chip; the batch 'parallel' axis is pure overhead on
    # 1-TC chips (v5e/v6e).  Conservative best-effort detection; fall back to 1.
    try:
        kind = jax.devices()[0].device_kind.lower()
    except Exception:
        return 1
    return 2 if ("v7" in kind or "7x" in kind) else 1


def _vmem_bytes(t_blk, b_blk, hp, n_buf=2):
    stream_in = t_blk * b_blk * (hp + 3 * hp) * 2              # x + xp streams, bf16
    stream_out = t_blk * b_blk * hp * 4                        # h block, f32
    invariant = hp * 2 * hp * 4 + 2 * hp * 4 + 2 * b_blk * hp * 4   # w_ifc + bias + c0/c_fin
    scratch = b_blk * hp * 4
    return n_buf * (stream_in + stream_out) + 2 * invariant + scratch


def ran_direction(x_bf, c0, w_x3, w_ifc, b_if, *, reverse):
    """Run one RAN direction over the full time-major (lane-padded) sequence.

    x_bf  : (L, B, Hp) bf16      c0 : (B, Hp) f32
    w_x3  : (Hp, 3Hp) bf16  = [W_ix | W_fx | W_cx]
    w_ifc : (Hp, 2Hp) f32   = [W_ic | W_fc]
    b_if  : (1, 2Hp)  f32   = [b_i  | b_f ]
    Returns (h_seq (L,B,Hp) f32 in ORIGINAL time order, c_final (B,Hp) f32).
    """
    L, B, Hp = x_bf.shape
    assert Hp % _LANE == 0, "hidden dim must be lane-padded"
    assert c0.shape == (B, Hp), "residual RAN requires input_size == output_size"

    # ---- Hoisted input projection: one large bf16 matmul, streamed as ONE bf16 array. ----
    xp = jnp.dot(x_bf.reshape(L * B, Hp), w_x3, preferred_element_type=jnp.float32)
    xp = xp.astype(jnp.bfloat16).reshape(L, B, 3 * Hp)

    # ---- Blocking choices. ----
    # Batch split only pays on a 2-TC chip and only when both halves stay (8,128)-tileable.
    if _tensorcores_per_chip() >= 2 and B >= 2 * _SUBLANE and B % (2 * _SUBLANE) == 0:
        b_blk, nb = B // 2, 2
    else:
        b_blk, nb = B, 1

    # Largest divisor of L (capped at 32 unrolled steps) whose working set fits a
    # conservative VMEM budget (safe even against v7x's 64 MiB per TC).
    budget = 24 << 20
    t_blk = 1
    for d in _divisors_desc(L):
        if d <= 32 and _vmem_bytes(d, b_blk, Hp) <= budget:
            t_blk = d
            break
    nt = L // t_blk

    if reverse:
        tmap = lambda bi, ti: (nt - 1 - ti, bi, 0)   # time-reversed block order (no flips)
    else:
        tmap = lambda bi, ti: (ti, bi, 0)
    bmap = lambda bi, ti: (bi, 0)
    wmap = lambda bi, ti: (0, 0)

    kernel = functools.partial(_ran_recurrence_kernel, t_blk=t_blk, hp=Hp, reverse=reverse)

    vmem_limit = int(min(max(2 * _vmem_bytes(t_blk, b_blk, Hp), 32 << 20), 56 << 20))

    # TODO(synk): mark the grid-invariant w_ifc / b_if / c0 specs pipeline_mode=pl.Buffered(1)
    # once single-buffered inputs are confirmed supported by the installed jax version.
    h_out, c_fin = pl.pallas_call(
        kernel,
        out_shape=(jax.ShapeDtypeStruct((L, B, Hp), jnp.float32),
                   jax.ShapeDtypeStruct((B, Hp), jnp.float32)),
        grid_spec=pltpu.PrefetchScalarGridSpec(
            num_scalar_prefetch=0,
            grid=(nb, nt),
            in_specs=[
                pl.BlockSpec((t_blk, b_blk, Hp), tmap),        # x (bf16, residual)
                pl.BlockSpec((t_blk, b_blk, 3 * Hp), tmap),    # xp (bf16, fused x-projection)
                pl.BlockSpec((b_blk, Hp), bmap),               # c0 (f32)
                pl.BlockSpec((Hp, 2 * Hp), wmap),              # [W_ic|W_fc] (f32)
                pl.BlockSpec((1, 2 * Hp), wmap),               # [b_i|b_f]   (f32)
            ],
            out_specs=[
                pl.BlockSpec((t_blk, b_blk, Hp), tmap),        # h sequence (original order)
                pl.BlockSpec((b_blk, Hp), bmap),               # final cell state
            ],
            scratch_shapes=[pltpu.VMEM((b_blk, Hp), jnp.float32)],
        ),
        compiler_params=pltpu.CompilerParams(
            dimension_semantics=("parallel", "arbitrary"),     # batch parallel, time sequential
            vmem_limit_bytes=vmem_limit),
    )(x_bf, xp, c0, w_ifc, b_if)
    return h_out, c_fin


# --------------------------------------------------------------------------------------
# Parameter plumbing / full Encoder.forward equivalent.
# --------------------------------------------------------------------------------------
def _pad_mat(w, hp):
    h_in, h_out = w.shape
    if h_in == hp and h_out == hp:
        return w
    return jnp.zeros((hp, hp), w.dtype).at[:h_in, :h_out].set(w)


def _pad_vec(v, hp):
    h = v.shape[0]
    if h == hp:
        return v
    return jnp.zeros((hp,), v.dtype).at[:h].set(v)


def _fused_direction_weights(p, hp):
    """Build the fused, lane-padded weight matrices for one RAN direction."""
    w_x3 = jnp.concatenate([_pad_mat(p["wix"], hp), _pad_mat(p["wfx"], hp),
                            _pad_mat(p["wcx"], hp)], axis=1).astype(jnp.bfloat16)
    w_ifc = jnp.concatenate([_pad_mat(p["wic"], hp), _pad_mat(p["wfc"], hp)],
                            axis=1).astype(jnp.float32)
    b_if = jnp.concatenate([_pad_vec(p["bi"], hp),
                            _pad_vec(p["bf"], hp)]).reshape(1, 2 * hp).astype(jnp.float32)
    return w_x3, w_ifc, b_if


def encoder_forward(xs, params, laycnt):
    """Equivalent of Encoder.forward(xs) with xs_mask=None, h0=None."""
    L, B = xs.shape
    H = params["fwd"]["wic"].shape[0]
    # Lane-pad the hidden dim; zero padding is exactly preserved by the RAN recurrence
    # (sigmoid(0)=0.5 gates a zero candidate / zero state), so results are unchanged.
    Hp = _round_up(H, _LANE)

    emb = params["emb"]
    if Hp != H:
        emb = jnp.pad(emb, ((0, 0), (0, Hp - H)))

    fwd_w = _fused_direction_weights(params["fwd"], Hp)
    bwd_w = _fused_direction_weights(params["bwd"], Hp)

    out = emb[xs]                                   # (L, B, Hp) f32 embedding lookup
    x = out.astype(jnp.bfloat16)
    c = jnp.zeros((B, Hp), jnp.float32)             # c0 (h0=None in the reference)

    for _ in range(laycnt):
        h_fwd, c = ran_direction(x, c, *fwd_w, reverse=False)
        out, c = ran_direction(h_fwd.astype(jnp.bfloat16), c, *bwd_w, reverse=True)
        x = out.astype(jnp.bfloat16)
    return out[..., :H]                             # drop lane padding


def init_params(key, src_vocab_size, H):
    ks = jax.random.split(key, 15)
    scale = 0.1
    emb = scale * jax.random.normal(ks[0], (src_vocab_size, H), jnp.float32)
    emb = emb.at[PAD].set(0.0)                      # padding_idx=PAD

    def direction(keys):
        return {
            "wix": scale * jax.random.normal(keys[0], (H, H), jnp.float32),
            "wfx": scale * jax.random.normal(keys[1], (H, H), jnp.float32),
            "wcx": scale * jax.random.normal(keys[2], (H, H), jnp.float32),
            "wic": scale * jax.random.normal(keys[3], (H, H), jnp.float32),
            "wfc": scale * jax.random.normal(keys[4], (H, H), jnp.float32),
            "bi": scale * jax.random.normal(keys[5], (H,), jnp.float32),
            "bf": scale * jax.random.normal(keys[6], (H,), jnp.float32),
        }

    return {"emb": emb, "fwd": direction(ks[1:8]), "bwd": direction(ks[8:15])}


# --------------------------------------------------------------------------------------
# Pure-JAX reference (mirrors Encoder.forward / snaker with xs_mask=None, h0=None).
# --------------------------------------------------------------------------------------
def _ran_cell_ref(x_t, c, p):
    i = jax.nn.sigmoid(x_t @ p["wix"] + c @ p["wic"] + p["bi"])
    f = jax.nn.sigmoid(x_t @ p["wfx"] + c @ p["wfc"] + p["bf"])
    c = i * (x_t @ p["wcx"]) + f * c
    h = jnp.tanh(c) + x_t
    return c, h


def encoder_forward_ref(xs, params, laycnt):
    L, B = xs.shape
    H = params["fwd"]["wic"].shape[0]
    x = params["emb"][xs]
    c = jnp.zeros((B, H), jnp.float32)
    for _ in range(laycnt):
        first = []
        for k in range(L):                           # forward RAN
            c, h = _ran_cell_ref(x[k], c, params["fwd"])
            first.append(h)
        second = [None] * L
        for k in reversed(range(L)):                 # backward RAN
            c, h = _ran_cell_ref(first[k], c, params["bwd"])
            second[k] = h
        x = jnp.stack(second, axis=0)
    return x


if __name__ == "__main__":
    L, B, H = 8, 8, 32           # seq len, batch, src_wemb_size == hidden size
    VOCAB = 50
    LAYCNT = 2                   # wargs.enc_layer_cnt

    key = jax.random.PRNGKey(0)
    k_tok, k_par = jax.random.split(key)
    xs = jax.random.randint(k_tok, (L, B), 0, VOCAB, dtype=jnp.int32)
    params = init_params(k_par, VOCAB, H)

    fwd = jax.jit(encoder_forward, static_argnames=("laycnt",))
    out = jax.block_until_ready(fwd(xs, params, laycnt=LAYCNT))
    assert out.shape == (L, B, H) and out.dtype == jnp.float32

    ref = jax.block_until_ready(encoder_forward_ref(xs, params, LAYCNT))
    np.testing.assert_allclose(np.asarray(out), np.asarray(ref), atol=1e-2, rtol=1e-2)
    print("KERNEL_OK")
</pallas_src>

<mosaic_0001>
module attributes {stable_mosaic.version = 11 : i64} {
  func.func @_ran_recurrence_kernel(%arg0: i32, %arg1: i32, %arg2: memref<8x8x128xbf16, #tpu.memory_space<vmem>>, %arg3: memref<8x8x384xbf16, #tpu.memory_space<vmem>>, %arg4: memref<8x128xf32, #tpu.memory_space<vmem>>, %arg5: memref<128x256xf32, #tpu.memory_space<vmem>>, %arg6: memref<1x256xf32, #tpu.memory_space<vmem>>, %arg7: memref<8x8x128xf32, #tpu.memory_space<vmem>>, %arg8: memref<8x128xf32, #tpu.memory_space<vmem>>, %arg9: memref<8x128xf32, #tpu.memory_space<vmem>>) attributes {dimension_semantics = [#tpu.dimension_semantics<parallel>, #tpu.dimension_semantics<arbitrary>], iteration_bounds = array<i64: 1, 1>, scalar_prefetch = 0 : i64, scratch_operands = 1 : i64, tpu.core_type = #tpu.core_type<tc>, window_params = [{transform_indices = @transform_0, window_bounds = array<i64: 8, 8, 128>}, {transform_indices = @transform_1, window_bounds = array<i64: 8, 8, 384>}, {transform_indices = @transform_2, window_bounds = array<i64: 8, 128>}, {pipeline_mode = #tpu.pipeline_mode<synchronous>, transform_indices = @transform_3, window_bounds = array<i64: 128, 256>}, {pipeline_mode = #tpu.pipeline_mode<synchronous>, transform_indices = @transform_4, window_bounds = array<i64: 1, 256>}, {transform_indices = @transform_5, window_bounds = array<i64: 8, 8, 128>}, {transform_indices = @transform_6, window_bounds = array<i64: 8, 128>}]} {
    %c0_i32 = arith.constant 0 : i32
    %0 = arith.cmpi eq, %arg1, %c0_i32 : i32
    %1 = arith.extui %0 : i1 to i32
    %c0_i32_0 = arith.constant 0 : i32
    %2 = arith.cmpi ne, %1, %c0_i32_0 : i32
    scf.if %2 {
      %c0_90 = arith.constant 0 : index
      %c0_91 = arith.constant 0 : index
      %226 = vector.load %arg4[%c0_90, %c0_91] : memref<8x128xf32, #tpu.memory_space<vmem>>, vector<8x128xf32>
      %c0_92 = arith.constant 0 : index
      %c0_93 = arith.constant 0 : index
      %227 = vector.load %arg9[%c0_92, %c0_93] : memref<8x128xf32, #tpu.memory_space<vmem>>, vector<8x128xf32>
      tpu.vector_store %arg9[%c0_92, %c0_93], %226 {strides = array<i32>} : memref<8x128xf32, #tpu.memory_space<vmem>>, vector<8x128xf32>,
    } else {
    }
    %c0 = arith.constant 0 : index
    %c0_1 = arith.constant 0 : index
    %3 = vector.load %arg5[%c0, %c0_1] : memref<128x256xf32, #tpu.memory_space<vmem>>, vector<128x256xf32>
    %c0_2 = arith.constant 0 : index
    %c0_3 = arith.constant 0 : index
    %4 = vector.load %arg6[%c0_2, %c0_3] : memref<1x256xf32, #tpu.memory_space<vmem>>, vector<1x256xf32>
    %c0_4 = arith.constant 0 : index
    %c0_5 = arith.constant 0 : index
    %5 = vector.load %arg9[%c0_4, %c0_5] : memref<8x128xf32, #tpu.memory_space<vmem>>, vector<8x128xf32>
    %c0_6 = arith.constant 0 : index
    %c0_7 = arith.constant 0 : index
    %c0_8 = arith.constant 0 : index
    %6 = vector.load %arg2[%c0_6, %c0_7, %c0_8] : memref<8x8x128xbf16, #tpu.memory_space<vmem>>, vector<1x8x128xbf16>
    %7 = vector.shape_cast %6 : vector<1x8x128xbf16> to vector<8x128xbf16>
    %8 = arith.extf %7 : vector<8x128xbf16> to vector<8x128xf32>
    %c0_9 = arith.constant 0 : index
    %c0_10 = arith.constant 0 : index
    %c0_11 = arith.constant 0 : index
    %9 = vector.load %arg3[%c0_9, %c0_10, %c0_11] : memref<8x8x384xbf16, #tpu.memory_space<vmem>>, vector<1x8x384xbf16>
    %10 = vector.shape_cast %9 : vector<1x8x384xbf16> to vector<8x384xbf16>
    %11 = arith.extf %10 : vector<8x384xbf16> to vector<8x384xf32>
    %cst = arith.constant dense<0.000000e+00> : vector<8x256xf32>
    %12 = tpu.matmul %5, %3, %cst {dimension_numbers = #tpu.dot_dimension_numbers<[1], [0], [0], [1], [0, 0, 1, 1], [], []>} : vector<8x128xf32>, vector<128x256xf32>, vector<8x256xf32> -> vector<8x256xf32>
    %13 = vector.extract_strided_slice %11 {offsets = [0, 0], sizes = [8, 256], strides = [1, 1]} : vector<8x384xf32> to vector<8x256xf32>
    %14 = arith.addf %13, %12 : vector<8x256xf32>
    %15 = vector.broadcast %4 : vector<1x256xf32> to vector<8x256xf32>
    %16 = arith.addf %14, %15 : vector<8x256xf32>
    %17 = arith.negf %16 : vector<8x256xf32>
    %18 = math.exp %17 : vector<8x256xf32>
    %cst_12 = arith.constant 1.000000e+00 : f32
    %19 = vector.broadcast %cst_12 : f32 to vector<8x256xf32>
    %20 = arith.addf %19, %18 : vector<8x256xf32>
    %21 = arith.divf %19, %20 : vector<8x256xf32>
    %22 = vector.extract_strided_slice %21 {offsets = [0, 0], sizes = [8, 128], strides = [1, 1]} : vector<8x256xf32> to vector<8x128xf32>
    %23 = vector.extract_strided_slice %21 {offsets = [0, 128], sizes = [8, 128], strides = [1, 1]} : vector<8x256xf32> to vector<8x128xf32>
    %24 = vector.extract_strided_slice %11 {offsets = [0, 256], sizes = [8, 128], strides = [1, 1]} : vector<8x384xf32> to vector<8x128xf32>
    %25 = arith.mulf %22, %24 : vector<8x128xf32>
    %26 = arith.mulf %23, %5 : vector<8x128xf32>
    %27 = arith.addf %25, %26 : vector<8x128xf32>
    %28 = math.tanh %27 : vector<8x128xf32>
    %29 = arith.addf %28, %8 : vector<8x128xf32>
    %c0_13 = arith.constant 0 : index
    %c0_14 = arith.constant 0 : index
    %c0_15 = arith.constant 0 : index
    %30 = vector.load %arg7[%c0_13, %c0_14, %c0_15] : memref<8x8x128xf32, #tpu.memory_space<vmem>>, vector<1x8x128xf32>
    %31 = vector.shape_cast %30 : vector<1x8x128xf32> to vector<8x128xf32>
    %32 = vector.shape_cast %29 : vector<8x128xf32> to vector<1x8x128xf32>
    tpu.vector_store %arg7[%c0_13, %c0_14, %c0_15], %32 {strides = array<i32>} : memref<8x8x128xf32, #tpu.memory_space<vmem>>, vector<1x8x128xf32>,
    %c1 = arith.constant 1 : index
    %c0_16 = arith.constant 0 : index
    %c0_17 = arith.constant 0 : index
    %33 = vector.load %arg2[%c1, %c0_16, %c0_17] : memref<8x8x128xbf16, #tpu.memory_space<vmem>>, vector<1x8x128xbf16>
    %34 = vector.shape_cast %33 : vector<1x8x128xbf16> to vector<8x128xbf16>
    %35 = arith.extf %34 : vector<8x128xbf16> to vector<8x128xf32>
    %c1_18 = arith.constant 1 : index
    %c0_19 = arith.constant 0 : index
    %c0_20 = arith.constant 0 : index
    %36 = vector.load %arg3[%c1_18, %c0_19, %c0_20] : memref<8x8x384xbf16, #tpu.memory_space<vmem>>, vector<1x8x384xbf16>
    %37 = vector.shape_cast %36 : vector<1x8x384xbf16> to vector<8x384xbf16>
    %38 = arith.extf %37 : vector<8x384xbf16> to vector<8x384xf32>
    %cst_21 = arith.constant dense<0.000000e+00> : vector<8x256xf32>
    %39 = tpu.matmul %27, %3, %cst_21 {dimension_numbers = #tpu.dot_dimension_numbers<[1], [0], [0], [1], [0, 0, 1, 1], [], []>} : vector<8x128xf32>, vector<128x256xf32>, vector<8x256xf32> -> vector<8x256xf32>
    %40 = vector.extract_strided_slice %38 {offsets = [0, 0], sizes = [8, 256], strides = [1, 1]} : vector<8x384xf32> to vector<8x256xf32>
    %41 = arith.addf %40, %39 : vector<8x256xf32>
    %42 = vector.broadcast %4 : vector<1x256xf32> to vector<8x256xf32>
    %43 = arith.addf %41, %42 : vector<8x256xf32>
    %44 = arith.negf %43 : vector<8x256xf32>
    %45 = math.exp %44 : vector<8x256xf32>
    %cst_22 = arith.constant 1.000000e+00 : f32
    %46 = vector.broadcast %cst_22 : f32 to vector<8x256xf32>
    %47 = arith.addf %46, %45 : vector<8x256xf32>
    %48 = arith.divf %46, %47 : vector<8x256xf32>
    %49 = vector.extract_strided_slice %48 {offsets = [0, 0], sizes = [8, 128], strides = [1, 1]} : vector<8x256xf32> to vector<8x128xf32>
    %50 = vector.extract_strided_slice %48 {offsets = [0, 128], sizes = [8, 128], strides = [1, 1]} : vector<8x256xf32> to vector<8x128xf32>
    %51 = vector.extract_strided_slice %38 {offsets = [0, 256], sizes = [8, 128], strides = [1, 1]} : vector<8x384xf32> to vector<8x128xf32>
    %52 = arith.mulf %49, %51 : vector<8x128xf32>
    %53 = arith.mulf %50, %27 : vector<8x128xf32>
    %54 = arith.addf %52, %53 : vector<8x128xf32>
    %55 = math.tanh %54 : vector<8x128xf32>
    %56 = arith.addf %55, %35 : vector<8x128xf32>
    %c1_23 = arith.constant 1 : index
    %c0_24 = arith.constant 0 : index
    %c0_25 = arith.constant 0 : index
    %57 = vector.load %arg7[%c1_23, %c0_24, %c0_25] : memref<8x8x128xf32, #tpu.memory_space<vmem>>, vector<1x8x128xf32>
    %58 = vector.shape_cast %57 : vector<1x8x128xf32> to vector<8x128xf32>
    %59 = vector.shape_cast %56 : vector<8x128xf32> to vector<1x8x128xf32>
    tpu.vector_store %arg7[%c1_23, %c0_24, %c0_25], %59 {strides = array<i32>} : memref<8x8x128xf32, #tpu.memory_space<vmem>>, vector<1x8x128xf32>,
    %c2 = arith.constant 2 : index
    %c0_26 = arith.constant 0 : index
    %c0_27 = arith.constant 0 : index
    %60 = vector.load %arg2[%c2, %c0_26, %c0_27] : memref<8x8x128xbf16, #tpu.memory_space<vmem>>, vector<1x8x128xbf16>
    %61 = vector.shape_cast %60 : vector<1x8x128xbf16> to vector<8x128xbf16>
    %62 = arith.extf %61 : vector<8x128xbf16> to vector<8x128xf32>
    %c2_28 = arith.constant 2 : index
    %c0_29 = arith.constant 0 : index
    %c0_30 = arith.constant 0 : index
    %63 = vector.load %arg3[%c2_28, %c0_29, %c0_30] : memref<8x8x384xbf16, #tpu.memory_space<vmem>>, vector<1x8x384xbf16>
    %64 = vector.shape_cast %63 : vector<1x8x384xbf16> to vector<8x384xbf16>
    %65 = arith.extf %64 : vector<8x384xbf16> to vector<8x384xf32>
    %cst_31 = arith.constant dense<0.000000e+00> : vector<8x256xf32>
    %66 = tpu.matmul %54, %3, %cst_31 {dimension_numbers = #tpu.dot_dimension_numbers<[1], [0], [0], [1], [0, 0, 1, 1], [], []>} : vector<8x128xf32>, vector<128x256xf32>, vector<8x256xf32> -> vector<8x256xf32>
    %67 = vector.extract_strided_slice %65 {offsets = [0, 0], sizes = [8, 256], strides = [1, 1]} : vector<8x384xf32> to vector<8x256xf32>
    %68 = arith.addf %67, %66 : vector<8x256xf32>
    %69 = vector.broadcast %4 : vector<1x256xf32> to vector<8x256xf32>
    %70 = arith.addf %68, %69 : vector<8x256xf32>
    %71 = arith.negf %70 : vector<8x256xf32>
    %72 = math.exp %71 : vector<8x256xf32>
    %cst_32 = arith.constant 1.000000e+00 : f32
    %73 = vector.broadcast %cst_32 : f32 to vector<8x256xf32>
    %74 = arith.addf %73, %72 : vector<8x256xf32>
    %75 = arith.divf %73, %74 : vector<8x256xf32>
    %76 = vector.extract_strided_slice %75 {offsets = [0, 0], sizes = [8, 128], strides = [1, 1]} : vector<8x256xf32> to vector<8x128xf32>
    %77 = vector.extract_strided_slice %75 {offsets = [0, 128], sizes = [8, 128], strides = [1, 1]} : vector<8x256xf32> to vector<8x128xf32>
    %78 = vector.extract_strided_slice %65 {offsets = [0, 256], sizes = [8, 128], strides = [1, 1]} : vector<8x384xf32> to vector<8x128xf32>
    %79 = arith.mulf %76, %78 : vector<8x128xf32>
    %80 = arith.mulf %77, %54 : vector<8x128xf32>
    %81 = arith.addf %79, %80 : vector<8x128xf32>
    %82 = math.tanh %81 : vector<8x128xf32>
    %83 = arith.addf %82, %62 : vector<8x128xf32>
    %c2_33 = arith.constant 2 : index
    %c0_34 = arith.constant 0 : index
    %c0_35 = arith.constant 0 : index
    %84 = vector.load %arg7[%c2_33, %c0_34, %c0_35] : memref<8x8x128xf32, #tpu.memory_space<vmem>>, vector<1x8x128xf32>
    %85 = vector.shape_cast %84 : vector<1x8x128xf32> to vector<8x128xf32>
    %86 = vector.shape_cast %83 : vector<8x128xf32> to vector<1x8x128xf32>
    tpu.vector_store %arg7[%c2_33, %c0_34, %c0_35], %86 {strides = array<i32>} : memref<8x8x128xf32, #tpu.memory_space<vmem>>, vector<1x8x128xf32>,
    %c3 = arith.constant 3 : index
    %c0_36 = arith.constant 0 : index
    %c0_37 = arith.constant 0 : index
    %87 = vector.load %arg2[%c3, %c0_36, %c0_37] : memref<8x8x128xbf16, #tpu.memory_space<vmem>>, vector<1x8x128xbf16>
    %88 = vector.shape_cast %87 : vector<1x8x128xbf16> to vector<8x128xbf16>
    %89 = arith.extf %88 : vector<8x128xbf16> to vector<8x128xf32>
    %c3_38 = arith.constant 3 : index
    %c0_39 = arith.constant 0 : index
    %c0_40 = arith.constant 0 : index
    %90 = vector.load %arg3[%c3_38, %c0_39, %c0_40] : memref<8x8x384xbf16, #tpu.memory_space<vmem>>, vector<1x8x384xbf16>
    %91 = vector.shape_cast %90 : vector<1x8x384xbf16> to vector<8x384xbf16>
    %92 = arith.extf %91 : vector<8x384xbf16> to vector<8x384xf32>
    %cst_41 = arith.constant dense<0.000000e+00> : vector<8x256xf32>
    %93 = tpu.matmul %81, %3, %cst_41 {dimension_numbers = #tpu.dot_dimension_numbers<[1], [0], [0], [1], [0, 0, 1, 1], [], []>} : vector<8x128xf32>, vector<128x256xf32>, vector<8x256xf32> -> vector<8x256xf32>
    %94 = vector.extract_strided_slice %92 {offsets = [0, 0], sizes = [8, 256], strides = [1, 1]} : vector<8x384xf32> to vector<8x256xf32>
    %95 = arith.addf %94, %93 : vector<8x256xf32>
    %96 = vector.broadcast %4 : vector<1x256xf32> to vector<8x256xf32>
    %97 = arith.addf %95, %96 : vector<8x256xf32>
    %98 = arith.negf %97 : vector<8x256xf32>
    %99 = math.exp %98 : vector<8x256xf32>
    %cst_42 = arith.constant 1.000000e+00 : f32
    %100 = vector.broadcast %cst_42 : f32 to vector<8x256xf32>
    %101 = arith.addf %100, %99 : vector<8x256xf32>
    %102 = arith.divf %100, %101 : vector<8x256xf32>
    %103 = vector.extract_strided_slice %102 {offsets = [0, 0], sizes = [8, 128], strides = [1, 1]} : vector<8x256xf32> to vector<8x128xf32>
    %104 = vector.extract_strided_slice %102 {offsets = [0, 128], sizes = [8, 128], strides = [1, 1]} : vector<8x256xf32> to vector<8x128xf32>
    %105 = vector.extract_strided_slice %92 {offsets = [0, 256], sizes = [8, 128], strides = [1, 1]} : vector<8x384xf32> to vector<8x128xf32>
    %106 = arith.mulf %103, %105 : vector<8x128xf32>
    %107 = arith.mulf %104, %81 : vector<8x128xf32>
    %108 = arith.addf %106, %107 : vector<8x128xf32>
    %109 = math.tanh %108 : vector<8x128xf32>
    %110 = arith.addf %109, %89 : vector<8x128xf32>
    %c3_43 = arith.constant 3 : index
    %c0_44 = arith.constant 0 : index
    %c0_45 = arith.constant 0 : index
    %111 = vector.load %arg7[%c3_43, %c0_44, %c0_45] : memref<8x8x128xf32, #tpu.memory_space<vmem>>, vector<1x8x128xf32>
    %112 = vector.shape_cast %111 : vector<1x8x128xf32> to vector<8x128xf32>
    %113 = vector.shape_cast %110 : vector<8x128xf32> to vector<1x8x128xf32>
    tpu.vector_store %arg7[%c3_43, %c0_44, %c0_45], %113 {strides = array<i32>} : memref<8x8x128xf32, #tpu.memory_space<vmem>>, vector<1x8x128xf32>,
    %c4 = arith.constant 4 : index
    %c0_46 = arith.constant 0 : index
    %c0_47 = arith.constant 0 : index
    %114 = vector.load %arg2[%c4, %c0_46, %c0_47] : memref<8x8x128xbf16, #tpu.memory_space<vmem>>, vector<1x8x128xbf16>
    %115 = vector.shape_cast %114 : vector<1x8x128xbf16> to vector<8x128xbf16>
    %116 = arith.extf %115 : vector<8x128xbf16> to vector<8x128xf32>
    %c4_48 = arith.constant 4 : index
    %c0_49 = arith.constant 0 : index
    %c0_50 = arith.constant 0 : index
    %117 = vector.load %arg3[%c4_48, %c0_49, %c0_50] : memref<8x8x384xbf16, #tpu.memory_space<vmem>>, vector<1x8x384xbf16>
    %118 = vector.shape_cast %117 : vector<1x8x384xbf16> to vector<8x384xbf16>
    %119 = arith.extf %118 : vector<8x384xbf16> to vector<8x384xf32>
    %cst_51 = arith.constant dense<0.000000e+00> : vector<8x256xf32>
    %120 = tpu.matmul %108, %3, %cst_51 {dimension_numbers = #tpu.dot_dimension_numbers<[1], [0], [0], [1], [0, 0, 1, 1], [], []>} : vector<8x128xf32>, vector<128x256xf32>, vector<8x256xf32> -> vector<8x256xf32>
    %121 = vector.extract_strided_slice %119 {offsets = [0, 0], sizes = [8, 256], strides = [1, 1]} : vector<8x384xf32> to vector<8x256xf32>
    %122 = arith.addf %121, %120 : vector<8x256xf32>
    %123 = vector.broadcast %4 : vector<1x256xf32> to vector<8x256xf32>
    %124 = arith.addf %122, %123 : vector<8x256xf32>
    %125 = arith.negf %124 : vector<8x256xf32>
    %126 = math.exp %125 : vector<8x256xf32>
    %cst_52 = arith.constant 1.000000e+00 : f32
    %127 = vector.broadcast %cst_52 : f32 to vector<8x256xf32>
    %128 = arith.addf %127, %126 : vector<8x256xf32>
    %129 = arith.divf %127, %128 : vector<8x256xf32>
    %130 = vector.extract_strided_slice %129 {offsets = [0, 0], sizes = [8, 128], strides = [1, 1]} : vector<8x256xf32> to vector<8x128xf32>
    %131 = vector.extract_strided_slice %129 {offsets = [0, 128], sizes = [8, 128], strides = [1, 1]} : vector<8x256xf32> to vector<8x128xf32>
    %132 = vector.extract_strided_slice %119 {offsets = [0, 256], sizes = [8, 128], strides = [1, 1]} : vector<8x384xf32> to vector<8x128xf32>
    %133 = arith.mulf %130, %132 : vector<8x128xf32>
    %134 = arith.mulf %131, %108 : vector<8x128xf32>
    %135 = arith.addf %133, %134 : vector<8x128xf32>
    %136 = math.tanh %135 : vector<8x128xf32>
    %137 = arith.addf %136, %116 : vector<8x128xf32>
    %c4_53 = arith.constant 4 : index
    %c0_54 = arith.constant 0 : index
    %c0_55 = arith.constant 0 : index
    %138 = vector.load %arg7[%c4_53, %c0_54, %c0_55] : memref<8x8x128xf32, #tpu.memory_space<vmem>>, vector<1x8x128xf32>
    %139 = vector.shape_cast %138 : vector<1x8x128xf32> to vector<8x128xf32>
    %140 = vector.shape_cast %137 : vector<8x128xf32> to vector<1x8x128xf32>
    tpu.vector_store %arg7[%c4_53, %c0_54, %c0_55], %140 {strides = array<i32>} : memref<8x8x128xf32, #tpu.memory_space<vmem>>, vector<1x8x128xf32>,
    %c5 = arith.constant 5 : index
    %c0_56 = arith.constant 0 : index
    %c0_57 = arith.constant 0 : index
    %141 = vector.load %arg2[%c5, %c0_56, %c0_57] : memref<8x8x128xbf16, #tpu.memory_space<vmem>>, vector<1x8x128xbf16>
    %142 = vector.shape_cast %141 : vector<1x8x128xbf16> to vector<8x128xbf16>
    %143 = arith.extf %142 : vector<8x128xbf16> to vector<8x128xf32>
    %c5_58 = arith.constant 5 : index
    %c0_59 = arith.constant 0 : index
    %c0_60 = arith.constant 0 : index
    %144 = vector.load %arg3[%c5_58, %c0_59, %c0_60] : memref<8x8x384xbf16, #tpu.memory_space<vmem>>, vector<1x8x384xbf16>
    %145 = vector.shape_cast %144 : vector<1x8x384xbf16> to vector<8x384xbf16>
    %146 = arith.extf %145 : vector<8x384xbf16> to vector<8x384xf32>
    %cst_61 = arith.constant dense<0.000000e+00> : vector<8x256xf32>
    %147 = tpu.matmul %135, %3, %cst_61 {dimension_numbers = #tpu.dot_dimension_numbers<[1], [0], [0], [1], [0, 0, 1, 1], [], []>} : vector<8x128xf32>, vector<128x256xf32>, vector<8x256xf32> -> vector<8x256xf32>
    %148 = vector.extract_strided_slice %146 {offsets = [0, 0], sizes = [8, 256], strides = [1, 1]} : vector<8x384xf32> to vector<8x256xf32>
    %149 = arith.addf %148, %147 : vector<8x256xf32>
    %150 = vector.broadcast %4 : vector<1x256xf32> to vector<8x256xf32>
    %151 = arith.addf %149, %150 : vector<8x256xf32>
    %152 = arith.negf %151 : vector<8x256xf32>
    %153 = math.exp %152 : vector<8x256xf32>
    %cst_62 = arith.constant 1.000000e+00 : f32
    %154 = vector.broadcast %cst_62 : f32 to vector<8x256xf32>
    %155 = arith.addf %154, %153 : vector<8x256xf32>
    %156 = arith.divf %154, %155 : vector<8x256xf32>
    %157 = vector.extract_strided_slice %156 {offsets = [0, 0], sizes = [8, 128], strides = [1, 1]} : vector<8x256xf32> to vector<8x128xf32>
    %158 = vector.extract_strided_slice %156 {offsets = [0, 128], sizes = [8, 128], strides = [1, 1]} : vector<8x256xf32> to vector<8x128xf32>
    %159 = vector.extract_strided_slice %146 {offsets = [0, 256], sizes = [8, 128], strides = [1, 1]} : vector<8x384xf32> to vector<8x128xf32>
    %160 = arith.mulf %157, %159 : vector<8x128xf32>
    %161 = arith.mulf %158, %135 : vector<8x128xf32>
    %162 = arith.addf %160, %161 : vector<8x128xf32>
    %163 = math.tanh %162 : vector<8x128xf32>
    %164 = arith.addf %163, %143 : vector<8x128xf32>
    %c5_63 = arith.constant 5 : index
    %c0_64 = arith.constant 0 : index
    %c0_65 = arith.constant 0 : index
    %165 = vector.load %arg7[%c5_63, %c0_64, %c0_65] : memref<8x8x128xf32, #tpu.memory_space<vmem>>, vector<1x8x128xf32>
    %166 = vector.shape_cast %165 : vector<1x8x128xf32> to vector<8x128xf32>
    %167 = vector.shape_cast %164 : vector<8x128xf32> to vector<1x8x128xf32>
    tpu.vector_store %arg7[%c5_63, %c0_64, %c0_65], %167 {strides = array<i32>} : memref<8x8x128xf32, #tpu.memory_space<vmem>>, vector<1x8x128xf32>,
    %c6 = arith.constant 6 : index
    %c0_66 = arith.constant 0 : index
    %c0_67 = arith.constant 0 : index
    %168 = vector.load %arg2[%c6, %c0_66, %c0_67] : memref<8x8x128xbf16, #tpu.memory_space<vmem>>, vector<1x8x128xbf16>
    %169 = vector.shape_cast %168 : vector<1x8x128xbf16> to vector<8x128xbf16>
    %170 = arith.extf %169 : vector<8x128xbf16> to vector<8x128xf32>
    %c6_68 = arith.constant 6 : index
    %c0_69 = arith.constant 0 : index
    %c0_70 = arith.constant 0 : index
    %171 = vector.load %arg3[%c6_68, %c0_69, %c0_70] : memref<8x8x384xbf16, #tpu.memory_space<vmem>>, vector<1x8x384xbf16>
    %172 = vector.shape_cast %171 : vector<1x8x384xbf16> to vector<8x384xbf16>
    %173 = arith.extf %172 : vector<8x384xbf16> to vector<8x384xf32>
    %cst_71 = arith.constant dense<0.000000e+00> : vector<8x256xf32>
    %174 = tpu.matmul %162, %3, %cst_71 {dimension_numbers = #tpu.dot_dimension_numbers<[1], [0], [0], [1], [0, 0, 1, 1], [], []>} : vector<8x128xf32>, vector<128x256xf32>, vector<8x256xf32> -> vector<8x256xf32>
    %175 = vector.extract_strided_slice %173 {offsets = [0, 0], sizes = [8, 256], strides = [1, 1]} : vector<8x384xf32> to vector<8x256xf32>
    %176 = arith.addf %175, %174 : vector<8x256xf32>
    %177 = vector.broadcast %4 : vector<1x256xf32> to vector<8x256xf32>
    %178 = arith.addf %176, %177 : vector<8x256xf32>
    %179 = arith.negf %178 : vector<8x256xf32>
    %180 = math.exp %179 : vector<8x256xf32>
    %cst_72 = arith.constant 1.000000e+00 : f32
    %181 = vector.broadcast %cst_72 : f32 to vector<8x256xf32>
    %182 = arith.addf %181, %180 : vector<8x256xf32>
    %183 = arith.divf %181, %182 : vector<8x256xf32>
    %184 = vector.extract_strided_slice %183 {offsets = [0, 0], sizes = [8, 128], strides = [1, 1]} : vector<8x256xf32> to vector<8x128xf32>
    %185 = vector.extract_strided_slice %183 {offsets = [0, 128], sizes = [8, 128], strides = [1, 1]} : vector<8x256xf32> to vector<8x128xf32>
    %186 = vector.extract_strided_slice %173 {offsets = [0, 256], sizes = [8, 128], strides = [1, 1]} : vector<8x384xf32> to vector<8x128xf32>
    %187 = arith.mulf %184, %186 : vector<8x128xf32>
    %188 = arith.mulf %185, %162 : vector<8x128xf32>
    %189 = arith.addf %187, %188 : vector<8x128xf32>
    %190 = math.tanh %189 : vector<8x128xf32>
    %191 = arith.addf %190, %170 : vector<8x128xf32>
    %c6_73 = arith.constant 6 : index
    %c0_74 = arith.constant 0 : index
    %c0_75 = arith.constant 0 : index
    %192 = vector.load %arg7[%c6_73, %c0_74, %c0_75] : memref<8x8x128xf32, #tpu.memory_space<vmem>>, vector<1x8x128xf32>
    %193 = vector.shape_cast %192 : vector<1x8x128xf32> to vector<8x128xf32>
    %194 = vector.shape_cast %191 : vector<8x128xf32> to vector<1x8x128xf32>
    tpu.vector_store %arg7[%c6_73, %c0_74, %c0_75], %194 {strides = array<i32>} : memref<8x8x128xf32, #tpu.memory_space<vmem>>, vector<1x8x128xf32>,
    %c7 = arith.constant 7 : index
    %c0_76 = arith.constant 0 : index
    %c0_77 = arith.constant 0 : index
    %195 = vector.load %arg2[%c7, %c0_76, %c0_77] : memref<8x8x128xbf16, #tpu.memory_space<vmem>>, vector<1x8x128xbf16>
    %196 = vector.shape_cast %195 : vector<1x8x128xbf16> to vector<8x128xbf16>
    %197 = arith.extf %196 : vector<8x128xbf16> to vector<8x128xf32>
    %c7_78 = arith.constant 7 : index
    %c0_79 = arith.constant 0 : index
    %c0_80 = arith.constant 0 : index
    %198 = vector.load %arg3[%c7_78, %c0_79, %c0_80] : memref<8x8x384xbf16, #tpu.memory_space<vmem>>, vector<1x8x384xbf16>
    %199 = vector.shape_cast %198 : vector<1x8x384xbf16> to vector<8x384xbf16>
    %200 = arith.extf %199 : vector<8x384xbf16> to vector<8x384xf32>
    %cst_81 = arith.constant dense<0.000000e+00> : vector<8x256xf32>
    %201 = tpu.matmul %189, %3, %cst_81 {dimension_numbers = #tpu.dot_dimension_numbers<[1], [0], [0], [1], [0, 0, 1, 1], [], []>} : vector<8x128xf32>, vector<128x256xf32>, vector<8x256xf32> -> vector<8x256xf32>
    %202 = vector.extract_strided_slice %200 {offsets = [0, 0], sizes = [8, 256], strides = [1, 1]} : vector<8x384xf32> to vector<8x256xf32>
    %203 = arith.addf %202, %201 : vector<8x256xf32>
    %204 = vector.broadcast %4 : vector<1x256xf32> to vector<8x256xf32>
    %205 = arith.addf %203, %204 : vector<8x256xf32>
    %206 = arith.negf %205 : vector<8x256xf32>
    %207 = math.exp %206 : vector<8x256xf32>
    %cst_82 = arith.constant 1.000000e+00 : f32
    %208 = vector.broadcast %cst_82 : f32 to vector<8x256xf32>
    %209 = arith.addf %208, %207 : vector<8x256xf32>
    %210 = arith.divf %208, %209 : vector<8x256xf32>
    %211 = vector.extract_strided_slice %210 {offsets = [0, 0], sizes = [8, 128], strides = [1, 1]} : vector<8x256xf32> to vector<8x128xf32>
    %212 = vector.extract_strided_slice %210 {offsets = [0, 128], sizes = [8, 128], strides = [1, 1]} : vector<8x256xf32> to vector<8x128xf32>
    %213 = vector.extract_strided_slice %200 {offsets = [0, 256], sizes = [8, 128], strides = [1, 1]} : vector<8x384xf32> to vector<8x128xf32>
    %214 = arith.mulf %211, %213 : vector<8x128xf32>
    %215 = arith.mulf %212, %189 : vector<8x128xf32>
    %216 = arith.addf %214, %215 : vector<8x128xf32>
    %217 = math.tanh %216 : vector<8x128xf32>
    %218 = arith.addf %217, %197 : vector<8x128xf32>
    %c7_83 = arith.constant 7 : index
    %c0_84 = arith.constant 0 : index
    %c0_85 = arith.constant 0 : index
    %219 = vector.load %arg7[%c7_83, %c0_84, %c0_85] : memref<8x8x128xf32, #tpu.memory_space<vmem>>, vector<1x8x128xf32>
    %220 = vector.shape_cast %219 : vector<1x8x128xf32> to vector<8x128xf32>
    %221 = vector.shape_cast %218 : vector<8x128xf32> to vector<1x8x128xf32>
    tpu.vector_store %arg7[%c7_83, %c0_84, %c0_85], %221 {strides = array<i32>} : memref<8x8x128xf32, #tpu.memory_space<vmem>>, vector<1x8x128xf32>,
    %c0_86 = arith.constant 0 : index
    %c0_87 = arith.constant 0 : index
    %222 = vector.load %arg9[%c0_86, %c0_87] : memref<8x128xf32, #tpu.memory_space<vmem>>, vector<8x128xf32>
    tpu.vector_store %arg9[%c0_86, %c0_87], %216 {strides = array<i32>} : memref<8x128xf32, #tpu.memory_space<vmem>>, vector<8x128xf32>,
    %c0_i32_88 = arith.constant 0 : i32
    %223 = arith.cmpi eq, %arg1, %c0_i32_88 : i32
    %224 = arith.extui %223 : i1 to i32
    %c0_i32_89 = arith.constant 0 : i32
    %225 = arith.cmpi ne, %224, %c0_i32_89 : i32
    scf.if %225 {
      %c0_90 = arith.constant 0 : index
      %c0_91 = arith.constant 0 : index
      %226 = vector.load %arg8[%c0_90, %c0_91] : memref<8x128xf32, #tpu.memory_space<vmem>>, vector<8x128xf32>
      tpu.vector_store %arg8[%c0_90, %c0_91], %216 {strides = array<i32>} : memref<8x128xf32, #tpu.memory_space<vmem>>, vector<8x128xf32>,
    } else {
    }
    return
  }
  func.func @transform_0(%arg0: i32, %arg1: i32) -> (i32, i32, i32) {
    %c0_i32 = arith.constant 0 : i32
    %c0_i32_0 = arith.constant 0 : i32
    return %arg1, %arg0, %c0_i32 : i32, i32, i32
  }
  func.func @transform_1(%arg0: i32, %arg1: i32) -> (i32, i32, i32) {
    %c0_i32 = arith.constant 0 : i32
    %c0_i32_0 = arith.constant 0 : i32
    return %arg1, %arg0, %c0_i32 : i32, i32, i32
  }
  func.func @transform_2(%arg0: i32, %arg1: i32) -> (i32, i32) {
    %c0_i32 = arith.constant 0 : i32
    %c0_i32_0 = arith.constant 0 : i32
    return %arg0, %c0_i32 : i32, i32
  }
  func.func @transform_3(%arg0: i32, %arg1: i32) -> (i32, i32) {
    %c0_i32 = arith.constant 0 : i32
    %c0_i32_0 = arith.constant 0 : i32
    %c0_i32_1 = arith.constant 0 : i32
    return %c0_i32, %c0_i32_0 : i32, i32
  }
  func.func @transform_4(%arg0: i32, %arg1: i32) -> (i32, i32) {
    %c0_i32 = arith.constant 0 : i32
    %c0_i32_0 = arith.constant 0 : i32
    %c0_i32_1 = arith.constant 0 : i32
    return %c0_i32, %c0_i32_0 : i32, i32
  }
  func.func @transform_5(%arg0: i32, %arg1: i32) -> (i32, i32, i32) {
    %c0_i32 = arith.constant 0 : i32
    %c0_i32_0 = arith.constant 0 : i32
    return %arg1, %arg0, %c0_i32 : i32, i32, i32
  }
  func.func @transform_6(%arg0: i32, %arg1: i32) -> (i32, i32) {
    %c0_i32 = arith.constant 0 : i32
    %c0_i32_0 = arith.constant 0 : i32
    return %arg0, %c0_i32 : i32, i32
  }
}

module attributes {stable_mosaic.version = 11 : i64} {
  func.func @_ran_recurrence_kernel(%arg0: i32, %arg1: i32, %arg2: memref<8x8x128xbf16, #tpu.memory_space<vmem>>, %arg3: memref<8x8x384xbf16, #tpu.memory_space<vmem>>, %arg4: memref<8x128xf32, #tpu.memory_space<vmem>>, %arg5: memref<128x256xf32, #tpu.memory_space<vmem>>, %arg6: memref<1x256xf32, #tpu.memory_space<vmem>>, %arg7: memref<8x8x128xf32, #tpu.memory_space<vmem>>, %arg8: memref<8x128xf32, #tpu.memory_space<vmem>>, %arg9: memref<8x128xf32, #tpu.memory_space<vmem>>) attributes {dimension_semantics = [#tpu.dimension_semantics<parallel>, #tpu.dimension_semantics<arbitrary>], iteration_bounds = array<i64: 1, 1>, scalar_prefetch = 0 : i64, scratch_operands = 1 : i64, tpu.core_type = #tpu.core_type<tc>, window_params = [{transform_indices = @transform_0, window_bounds = array<i64: 8, 8, 128>}, {transform_indices = @transform_1, window_bounds = array<i64: 8, 8, 384>}, {transform_indices = @transform_2, window_bounds = array<i64: 8, 128>}, {pipeline_mode = #tpu.pipeline_mode<synchronous>, transform_indices = @transform_3, window_bounds = array<i64: 128, 256>}, {pipeline_mode = #tpu.pipeline_mode<synchronous>, transform_indices = @transform_4, window_bounds = array<i64: 1, 256>}, {transform_indices = @transform_5, window_bounds = array<i64: 8, 8, 128>}, {transform_indices = @transform_6, window_bounds = array<i64: 8, 128>}]} {
    %c0_i32 = arith.constant 0 : i32
    %0 = arith.cmpi eq, %arg1, %c0_i32 : i32
    %1 = arith.extui %0 : i1 to i32
    %c0_i32_0 = arith.constant 0 : i32
    %2 = arith.cmpi ne, %1, %c0_i32_0 : i32
    scf.if %2 {
      %c0_90 = arith.constant 0 : index
      %c0_91 = arith.constant 0 : index
      %226 = vector.load %arg4[%c0_90, %c0_91] : memref<8x128xf32, #tpu.memory_space<vmem>>, vector<8x128xf32>
      %c0_92 = arith.constant 0 : index
      %c0_93 = arith.constant 0 : index
      %227 = vector.load %arg9[%c0_92, %c0_93] : memref<8x128xf32, #tpu.memory_space<vmem>>, vector<8x128xf32>
      tpu.vector_store %arg9[%c0_92, %c0_93], %226 {strides = array<i32>} : memref<8x128xf32, #tpu.memory_space<vmem>>, vector<8x128xf32>,
    } else {
    }
    %c0 = arith.constant 0 : index
    %c0_1 = arith.constant 0 : index
    %3 = vector.load %arg5[%c0, %c0_1] : memref<128x256xf32, #tpu.memory_space<vmem>>, vector<128x256xf32>
    %c0_2 = arith.constant 0 : index
    %c0_3 = arith.constant 0 : index
    %4 = vector.load %arg6[%c0_2, %c0_3] : memref<1x256xf32, #tpu.memory_space<vmem>>, vector<1x256xf32>
    %c0_4 = arith.constant 0 : index
    %c0_5 = arith.constant 0 : index
    %5 = vector.load %arg9[%c0_4, %c0_5] : memref<8x128xf32, #tpu.memory_space<vmem>>, vector<8x128xf32>
    %c7 = arith.constant 7 : index
    %c0_6 = arith.constant 0 : index
    %c0_7 = arith.constant 0 : index
    %6 = vector.load %arg2[%c7, %c0_6, %c0_7] : memref<8x8x128xbf16, #tpu.memory_space<vmem>>, vector<1x8x128xbf16>
    %7 = vector.shape_cast %6 : vector<1x8x128xbf16> to vector<8x128xbf16>
    %8 = arith.extf %7 : vector<8x128xbf16> to vector<8x128xf32>
    %c7_8 = arith.constant 7 : index
    %c0_9 = arith.constant 0 : index
    %c0_10 = arith.constant 0 : index
    %9 = vector.load %arg3[%c7_8, %c0_9, %c0_10] : memref<8x8x384xbf16, #tpu.memory_space<vmem>>, vector<1x8x384xbf16>
    %10 = vector.shape_cast %9 : vector<1x8x384xbf16> to vector<8x384xbf16>
    %11 = arith.extf %10 : vector<8x384xbf16> to vector<8x384xf32>
    %cst = arith.constant dense<0.000000e+00> : vector<8x256xf32>
    %12 = tpu.matmul %5, %3, %cst {dimension_numbers = #tpu.dot_dimension_numbers<[1], [0], [0], [1], [0, 0, 1, 1], [], []>} : vector<8x128xf32>, vector<128x256xf32>, vector<8x256xf32> -> vector<8x256xf32>
    %13 = vector.extract_strided_slice %11 {offsets = [0, 0], sizes = [8, 256], strides = [1, 1]} : vector<8x384xf32> to vector<8x256xf32>
    %14 = arith.addf %13, %12 : vector<8x256xf32>
    %15 = vector.broadcast %4 : vector<1x256xf32> to vector<8x256xf32>
    %16 = arith.addf %14, %15 : vector<8x256xf32>
    %17 = arith.negf %16 : vector<8x256xf32>
    %18 = math.exp %17 : vector<8x256xf32>
    %cst_11 = arith.constant 1.000000e+00 : f32
    %19 = vector.broadcast %cst_11 : f32 to vector<8x256xf32>
    %20 = arith.addf %19, %18 : vector<8x256xf32>
    %21 = arith.divf %19, %20 : vector<8x256xf32>
    %22 = vector.extract_strided_slice %21 {offsets = [0, 0], sizes = [8, 128], strides = [1, 1]} : vector<8x256xf32> to vector<8x128xf32>
    %23 = vector.extract_strided_slice %21 {offsets = [0, 128], sizes = [8, 128], strides = [1, 1]} : vector<8x256xf32> to vector<8x128xf32>
    %24 = vector.extract_strided_slice %11 {offsets = [0, 256], sizes = [8, 128], strides = [1, 1]} : vector<8x384xf32> to vector<8x128xf32>
    %25 = arith.mulf %22, %24 : vector<8x128xf32>
    %26 = arith.mulf %23, %5 : vector<8x128xf32>
    %27 = arith.addf %25, %26 : vector<8x128xf32>
    %28 = math.tanh %27 : vector<8x128xf32>
    %29 = arith.addf %28, %8 : vector<8x128xf32>
    %c7_12 = arith.constant 7 : index
    %c0_13 = arith.constant 0 : index
    %c0_14 = arith.constant 0 : index
    %30 = vector.load %arg7[%c7_12, %c0_13, %c0_14] : memref<8x8x128xf32, #tpu.memory_space<vmem>>, vector<1x8x128xf32>
    %31 = vector.shape_cast %30 : vector<1x8x128xf32> to vector<8x128xf32>
    %32 = vector.shape_cast %29 : vector<8x128xf32> to vector<1x8x128xf32>
    tpu.vector_store %arg7[%c7_12, %c0_13, %c0_14], %32 {strides = array<i32>} : memref<8x8x128xf32, #tpu.memory_space<vmem>>, vector<1x8x128xf32>,
    %c6 = arith.constant 6 : index
    %c0_15 = arith.constant 0 : index
    %c0_16 = arith.constant 0 : index
    %33 = vector.load %arg2[%c6, %c0_15, %c0_16] : memref<8x8x128xbf16, #tpu.memory_space<vmem>>, vector<1x8x128xbf16>
    %34 = vector.shape_cast %33 : vector<1x8x128xbf16> to vector<8x128xbf16>
    %35 = arith.extf %34 : vector<8x128xbf16> to vector<8x128xf32>
    %c6_17 = arith.constant 6 : index
    %c0_18 = arith.constant 0 : index
    %c0_19 = arith.constant 0 : index
    %36 = vector.load %arg3[%c6_17, %c0_18, %c0_19] : memref<8x8x384xbf16, #tpu.memory_space<vmem>>, vector<1x8x384xbf16>
    %37 = vector.shape_cast %36 : vector<1x8x384xbf16> to vector<8x384xbf16>
    %38 = arith.extf %37 : vector<8x384xbf16> to vector<8x384xf32>
    %cst_20 = arith.constant dense<0.000000e+00> : vector<8x256xf32>
    %39 = tpu.matmul %27, %3, %cst_20 {dimension_numbers = #tpu.dot_dimension_numbers<[1], [0], [0], [1], [0, 0, 1, 1], [], []>} : vector<8x128xf32>, vector<128x256xf32>, vector<8x256xf32> -> vector<8x256xf32>
    %40 = vector.extract_strided_slice %38 {offsets = [0, 0], sizes = [8, 256], strides = [1, 1]} : vector<8x384xf32> to vector<8x256xf32>
    %41 = arith.addf %40, %39 : vector<8x256xf32>
    %42 = vector.broadcast %4 : vector<1x256xf32> to vector<8x256xf32>
    %43 = arith.addf %41, %42 : vector<8x256xf32>
    %44 = arith.negf %43 : vector<8x256xf32>
    %45 = math.exp %44 : vector<8x256xf32>
    %cst_21 = arith.constant 1.000000e+00 : f32
    %46 = vector.broadcast %cst_21 : f32 to vector<8x256xf32>
    %47 = arith.addf %46, %45 : vector<8x256xf32>
    %48 = arith.divf %46, %47 : vector<8x256xf32>
    %49 = vector.extract_strided_slice %48 {offsets = [0, 0], sizes = [8, 128], strides = [1, 1]} : vector<8x256xf32> to vector<8x128xf32>
    %50 = vector.extract_strided_slice %48 {offsets = [0, 128], sizes = [8, 128], strides = [1, 1]} : vector<8x256xf32> to vector<8x128xf32>
    %51 = vector.extract_strided_slice %38 {offsets = [0, 256], sizes = [8, 128], strides = [1, 1]} : vector<8x384xf32> to vector<8x128xf32>
    %52 = arith.mulf %49, %51 : vector<8x128xf32>
    %53 = arith.mulf %50, %27 : vector<8x128xf32>
    %54 = arith.addf %52, %53 : vector<8x128xf32>
    %55 = math.tanh %54 : vector<8x128xf32>
    %56 = arith.addf %55, %35 : vector<8x128xf32>
    %c6_22 = arith.constant 6 : index
    %c0_23 = arith.constant 0 : index
    %c0_24 = arith.constant 0 : index
    %57 = vector.load %arg7[%c6_22, %c0_23, %c0_24] : memref<8x8x128xf32, #tpu.memory_space<vmem>>, vector<1x8x128xf32>
    %58 = vector.shape_cast %57 : vector<1x8x128xf32> to vector<8x128xf32>
    %59 = vector.shape_cast %56 : vector<8x128xf32> to vector<1x8x128xf32>
    tpu.vector_store %arg7[%c6_22, %c0_23, %c0_24], %59 {strides = array<i32>} : memref<8x8x128xf32, #tpu.memory_space<vmem>>, vector<1x8x128xf32>,
    %c5 = arith.constant 5 : index
    %c0_25 = arith.constant 0 : index
    %c0_26 = arith.constant 0 : index
    %60 = vector.load %arg2[%c5, %c0_25, %c0_26] : memref<8x8x128xbf16, #tpu.memory_space<vmem>>, vector<1x8x128xbf16>
    %61 = vector.shape_cast %60 : vector<1x8x128xbf16> to vector<8x128xbf16>
    %62 = arith.extf %61 : vector<8x128xbf16> to vector<8x128xf32>
    %c5_27 = arith.constant 5 : index
    %c0_28 = arith.constant 0 : index
    %c0_29 = arith.constant 0 : index
    %63 = vector.load %arg3[%c5_27, %c0_28, %c0_29] : memref<8x8x384xbf16, #tpu.memory_space<vmem>>, vector<1x8x384xbf16>
    %64 = vector.shape_cast %63 : vector<1x8x384xbf16> to vector<8x384xbf16>
    %65 = arith.extf %64 : vector<8x384xbf16> to vector<8x384xf32>
    %cst_30 = arith.constant dense<0.000000e+00> : vector<8x256xf32>
    %66 = tpu.matmul %54, %3, %cst_30 {dimension_numbers = #tpu.dot_dimension_numbers<[1], [0], [0], [1], [0, 0, 1, 1], [], []>} : vector<8x128xf32>, vector<128x256xf32>, vector<8x256xf32> -> vector<8x256xf32>
    %67 = vector.extract_strided_slice %65 {offsets = [0, 0], sizes = [8, 256], strides = [1, 1]} : vector<8x384xf32> to vector<8x256xf32>
    %68 = arith.addf %67, %66 : vector<8x256xf32>
    %69 = vector.broadcast %4 : vector<1x256xf32> to vector<8x256xf32>
    %70 = arith.addf %68, %69 : vector<8x256xf32>
    %71 = arith.negf %70 : vector<8x256xf32>
    %72 = math.exp %71 : vector<8x256xf32>
    %cst_31 = arith.constant 1.000000e+00 : f32
    %73 = vector.broadcast %cst_31 : f32 to vector<8x256xf32>
    %74 = arith.addf %73, %72 : vector<8x256xf32>
    %75 = arith.divf %73, %74 : vector<8x256xf32>
    %76 = vector.extract_strided_slice %75 {offsets = [0, 0], sizes = [8, 128], strides = [1, 1]} : vector<8x256xf32> to vector<8x128xf32>
    %77 = vector.extract_strided_slice %75 {offsets = [0, 128], sizes = [8, 128], strides = [1, 1]} : vector<8x256xf32> to vector<8x128xf32>
    %78 = vector.extract_strided_slice %65 {offsets = [0, 256], sizes = [8, 128], strides = [1, 1]} : vector<8x384xf32> to vector<8x128xf32>
    %79 = arith.mulf %76, %78 : vector<8x128xf32>
    %80 = arith.mulf %77, %54 : vector<8x128xf32>
    %81 = arith.addf %79, %80 : vector<8x128xf32>
    %82 = math.tanh %81 : vector<8x128xf32>
    %83 = arith.addf %82, %62 : vector<8x128xf32>
    %c5_32 = arith.constant 5 : index
    %c0_33 = arith.constant 0 : index
    %c0_34 = arith.constant 0 : index
    %84 = vector.load %arg7[%c5_32, %c0_33, %c0_34] : memref<8x8x128xf32, #tpu.memory_space<vmem>>, vector<1x8x128xf32>
    %85 = vector.shape_cast %84 : vector<1x8x128xf32> to vector<8x128xf32>
    %86 = vector.shape_cast %83 : vector<8x128xf32> to vector<1x8x128xf32>
    tpu.vector_store %arg7[%c5_32, %c0_33, %c0_34], %86 {strides = array<i32>} : memref<8x8x128xf32, #tpu.memory_space<vmem>>, vector<1x8x128xf32>,
    %c4 = arith.constant 4 : index
    %c0_35 = arith.constant 0 : index
    %c0_36 = arith.constant 0 : index
    %87 = vector.load %arg2[%c4, %c0_35, %c0_36] : memref<8x8x128xbf16, #tpu.memory_space<vmem>>, vector<1x8x128xbf16>
    %88 = vector.shape_cast %87 : vector<1x8x128xbf16> to vector<8x128xbf16>
    %89 = arith.extf %88 : vector<8x128xbf16> to vector<8x128xf32>
    %c4_37 = arith.constant 4 : index
    %c0_38 = arith.constant 0 : index
    %c0_39 = arith.constant 0 : index
    %90 = vector.load %arg3[%c4_37, %c0_38, %c0_39] : memref<8x8x384xbf16, #tpu.memory_space<vmem>>, vector<1x8x384xbf16>
    %91 = vector.shape_cast %90 : vector<1x8x384xbf16> to vector<8x384xbf16>
    %92 = arith.extf %91 : vector<8x384xbf16> to vector<8x384xf32>
    %cst_40 = arith.constant dense<0.000000e+00> : vector<8x256xf32>
    %93 = tpu.matmul %81, %3, %cst_40 {dimension_numbers = #tpu.dot_dimension_numbers<[1], [0], [0], [1], [0, 0, 1, 1], [], []>} : vector<8x128xf32>, vector<128x256xf32>, vector<8x256xf32> -> vector<8x256xf32>
    %94 = vector.extract_strided_slice %92 {offsets = [0, 0], sizes = [8, 256], strides = [1, 1]} : vector<8x384xf32> to vector<8x256xf32>
    %95 = arith.addf %94, %93 : vector<8x256xf32>
    %96 = vector.broadcast %4 : vector<1x256xf32> to vector<8x256xf32>
    %97 = arith.addf %95, %96 : vector<8x256xf32>
    %98 = arith.negf %97 : vector<8x256xf32>
    %99 = math.exp %98 : vector<8x256xf32>
    %cst_41 = arith.constant 1.000000e+00 : f32
    %100 = vector.broadcast %cst_41 : f32 to vector<8x256xf32>
    %101 = arith.addf %100, %99 : vector<8x256xf32>
    %102 = arith.divf %100, %101 : vector<8x256xf32>
    %103 = vector.extract_strided_slice %102 {offsets = [0, 0], sizes = [8, 128], strides = [1, 1]} : vector<8x256xf32> to vector<8x128xf32>
    %104 = vector.extract_strided_slice %102 {offsets = [0, 128], sizes = [8, 128], strides = [1, 1]} : vector<8x256xf32> to vector<8x128xf32>
    %105 = vector.extract_strided_slice %92 {offsets = [0, 256], sizes = [8, 128], strides = [1, 1]} : vector<8x384xf32> to vector<8x128xf32>
    %106 = arith.mulf %103, %105 : vector<8x128xf32>
    %107 = arith.mulf %104, %81 : vector<8x128xf32>
    %108 = arith.addf %106, %107 : vector<8x128xf32>
    %109 = math.tanh %108 : vector<8x128xf32>
    %110 = arith.addf %109, %89 : vector<8x128xf32>
    %c4_42 = arith.constant 4 : index
    %c0_43 = arith.constant 0 : index
    %c0_44 = arith.constant 0 : index
    %111 = vector.load %arg7[%c4_42, %c0_43, %c0_44] : memref<8x8x128xf32, #tpu.memory_space<vmem>>, vector<1x8x128xf32>
    %112 = vector.shape_cast %111 : vector<1x8x128xf32> to vector<8x128xf32>
    %113 = vector.shape_cast %110 : vector<8x128xf32> to vector<1x8x128xf32>
    tpu.vector_store %arg7[%c4_42, %c0_43, %c0_44], %113 {strides = array<i32>} : memref<8x8x128xf32, #tpu.memory_space<vmem>>, vector<1x8x128xf32>,
    %c3 = arith.constant 3 : index
    %c0_45 = arith.constant 0 : index
    %c0_46 = arith.constant 0 : index
    %114 = vector.load %arg2[%c3, %c0_45, %c0_46] : memref<8x8x128xbf16, #tpu.memory_space<vmem>>, vector<1x8x128xbf16>
    %115 = vector.shape_cast %114 : vector<1x8x128xbf16> to vector<8x128xbf16>
    %116 = arith.extf %115 : vector<8x128xbf16> to vector<8x128xf32>
    %c3_47 = arith.constant 3 : index
    %c0_48 = arith.constant 0 : index
    %c0_49 = arith.constant 0 : index
    %117 = vector.load %arg3[%c3_47, %c0_48, %c0_49] : memref<8x8x384xbf16, #tpu.memory_space<vmem>>, vector<1x8x384xbf16>
    %118 = vector.shape_cast %117 : vector<1x8x384xbf16> to vector<8x384xbf16>
    %119 = arith.extf %118 : vector<8x384xbf16> to vector<8x384xf32>
    %cst_50 = arith.constant dense<0.000000e+00> : vector<8x256xf32>
    %120 = tpu.matmul %108, %3, %cst_50 {dimension_numbers = #tpu.dot_dimension_numbers<[1], [0], [0], [1], [0, 0, 1, 1], [], []>} : vector<8x128xf32>, vector<128x256xf32>, vector<8x256xf32> -> vector<8x256xf32>
    %121 = vector.extract_strided_slice %119 {offsets = [0, 0], sizes = [8, 256], strides = [1, 1]} : vector<8x384xf32> to vector<8x256xf32>
    %122 = arith.addf %121, %120 : vector<8x256xf32>
    %123 = vector.broadcast %4 : vector<1x256xf32> to vector<8x256xf32>
    %124 = arith.addf %122, %123 : vector<8x256xf32>
    %125 = arith.negf %124 : vector<8x256xf32>
    %126 = math.exp %125 : vector<8x256xf32>
    %cst_51 = arith.constant 1.000000e+00 : f32
    %127 = vector.broadcast %cst_51 : f32 to vector<8x256xf32>
    %128 = arith.addf %127, %126 : vector<8x256xf32>
    %129 = arith.divf %127, %128 : vector<8x256xf32>
    %130 = vector.extract_strided_slice %129 {offsets = [0, 0], sizes = [8, 128], strides = [1, 1]} : vector<8x256xf32> to vector<8x128xf32>
    %131 = vector.extract_strided_slice %129 {offsets = [0, 128], sizes = [8, 128], strides = [1, 1]} : vector<8x256xf32> to vector<8x128xf32>
    %132 = vector.extract_strided_slice %119 {offsets = [0, 256], sizes = [8, 128], strides = [1, 1]} : vector<8x384xf32> to vector<8x128xf32>
    %133 = arith.mulf %130, %132 : vector<8x128xf32>
    %134 = arith.mulf %131, %108 : vector<8x128xf32>
    %135 = arith.addf %133, %134 : vector<8x128xf32>
    %136 = math.tanh %135 : vector<8x128xf32>
    %137 = arith.addf %136, %116 : vector<8x128xf32>
    %c3_52 = arith.constant 3 : index
    %c0_53 = arith.constant 0 : index
    %c0_54 = arith.constant 0 : index
    %138 = vector.load %arg7[%c3_52, %c0_53, %c0_54] : memref<8x8x128xf32, #tpu.memory_space<vmem>>, vector<1x8x128xf32>
    %139 = vector.shape_cast %138 : vector<1x8x128xf32> to vector<8x128xf32>
    %140 = vector.shape_cast %137 : vector<8x128xf32> to vector<1x8x128xf32>
    tpu.vector_store %arg7[%c3_52, %c0_53, %c0_54], %140 {strides = array<i32>} : memref<8x8x128xf32, #tpu.memory_space<vmem>>, vector<1x8x128xf32>,
    %c2 = arith.constant 2 : index
    %c0_55 = arith.constant 0 : index
    %c0_56 = arith.constant 0 : index
    %141 = vector.load %arg2[%c2, %c0_55, %c0_56] : memref<8x8x128xbf16, #tpu.memory_space<vmem>>, vector<1x8x128xbf16>
    %142 = vector.shape_cast %141 : vector<1x8x128xbf16> to vector<8x128xbf16>
    %143 = arith.extf %142 : vector<8x128xbf16> to vector<8x128xf32>
    %c2_57 = arith.constant 2 : index
    %c0_58 = arith.constant 0 : index
    %c0_59 = arith.constant 0 : index
    %144 = vector.load %arg3[%c2_57, %c0_58, %c0_59] : memref<8x8x384xbf16, #tpu.memory_space<vmem>>, vector<1x8x384xbf16>
    %145 = vector.shape_cast %144 : vector<1x8x384xbf16> to vector<8x384xbf16>
    %146 = arith.extf %145 : vector<8x384xbf16> to vector<8x384xf32>
    %cst_60 = arith.constant dense<0.000000e+00> : vector<8x256xf32>
    %147 = tpu.matmul %135, %3, %cst_60 {dimension_numbers = #tpu.dot_dimension_numbers<[1], [0], [0], [1], [0, 0, 1, 1], [], []>} : vector<8x128xf32>, vector<128x256xf32>, vector<8x256xf32> -> vector<8x256xf32>
    %148 = vector.extract_strided_slice %146 {offsets = [0, 0], sizes = [8, 256], strides = [1, 1]} : vector<8x384xf32> to vector<8x256xf32>
    %149 = arith.addf %148, %147 : vector<8x256xf32>
    %150 = vector.broadcast %4 : vector<1x256xf32> to vector<8x256xf32>
    %151 = arith.addf %149, %150 : vector<8x256xf32>
    %152 = arith.negf %151 : vector<8x256xf32>
    %153 = math.exp %152 : vector<8x256xf32>
    %cst_61 = arith.constant 1.000000e+00 : f32
    %154 = vector.broadcast %cst_61 : f32 to vector<8x256xf32>
    %155 = arith.addf %154, %153 : vector<8x256xf32>
    %156 = arith.divf %154, %155 : vector<8x256xf32>
    %157 = vector.extract_strided_slice %156 {offsets = [0, 0], sizes = [8, 128], strides = [1, 1]} : vector<8x256xf32> to vector<8x128xf32>
    %158 = vector.extract_strided_slice %156 {offsets = [0, 128], sizes = [8, 128], strides = [1, 1]} : vector<8x256xf32> to vector<8x128xf32>
    %159 = vector.extract_strided_slice %146 {offsets = [0, 256], sizes = [8, 128], strides = [1, 1]} : vector<8x384xf32> to vector<8x128xf32>
    %160 = arith.mulf %157, %159 : vector<8x128xf32>
    %161 = arith.mulf %158, %135 : vector<8x128xf32>
    %162 = arith.addf %160, %161 : vector<8x128xf32>
    %163 = math.tanh %162 : vector<8x128xf32>
    %164 = arith.addf %163, %143 : vector<8x128xf32>
    %c2_62 = arith.constant 2 : index
    %c0_63 = arith.constant 0 : index
    %c0_64 = arith.constant 0 : index
    %165 = vector.load %arg7[%c2_62, %c0_63, %c0_64] : memref<8x8x128xf32, #tpu.memory_space<vmem>>, vector<1x8x128xf32>
    %166 = vector.shape_cast %165 : vector<1x8x128xf32> to vector<8x128xf32>
    %167 = vector.shape_cast %164 : vector<8x128xf32> to vector<1x8x128xf32>
    tpu.vector_store %arg7[%c2_62, %c0_63, %c0_64], %167 {strides = array<i32>} : memref<8x8x128xf32, #tpu.memory_space<vmem>>, vector<1x8x128xf32>,
    %c1 = arith.constant 1 : index
    %c0_65 = arith.constant 0 : index
    %c0_66 = arith.constant 0 : index
    %168 = vector.load %arg2[%c1, %c0_65, %c0_66] : memref<8x8x128xbf16, #tpu.memory_space<vmem>>, vector<1x8x128xbf16>
    %169 = vector.shape_cast %168 : vector<1x8x128xbf16> to vector<8x128xbf16>
    %170 = arith.extf %169 : vector<8x128xbf16> to vector<8x128xf32>
    %c1_67 = arith.constant 1 : index
    %c0_68 = arith.constant 0 : index
    %c0_69 = arith.constant 0 : index
    %171 = vector.load %arg3[%c1_67, %c0_68, %c0_69] : memref<8x8x384xbf16, #tpu.memory_space<vmem>>, vector<1x8x384xbf16>
    %172 = vector.shape_cast %171 : vector<1x8x384xbf16> to vector<8x384xbf16>
    %173 = arith.extf %172 : vector<8x384xbf16> to vector<8x384xf32>
    %cst_70 = arith.constant dense<0.000000e+00> : vector<8x256xf32>
    %174 = tpu.matmul %162, %3, %cst_70 {dimension_numbers = #tpu.dot_dimension_numbers<[1], [0], [0], [1], [0, 0, 1, 1], [], []>} : vector<8x128xf32>, vector<128x256xf32>, vector<8x256xf32> -> vector<8x256xf32>
    %175 = vector.extract_strided_slice %173 {offsets = [0, 0], sizes = [8, 256], strides = [1, 1]} : vector<8x384xf32> to vector<8x256xf32>
    %176 = arith.addf %175, %174 : vector<8x256xf32>
    %177 = vector.broadcast %4 : vector<1x256xf32> to vector<8x256xf32>
    %178 = arith.addf %176, %177 : vector<8x256xf32>
    %179 = arith.negf %178 : vector<8x256xf32>
    %180 = math.exp %179 : vector<8x256xf32>
    %cst_71 = arith.constant 1.000000e+00 : f32
    %181 = vector.broadcast %cst_71 : f32 to vector<8x256xf32>
    %182 = arith.addf %181, %180 : vector<8x256xf32>
    %183 = arith.divf %181, %182 : vector<8x256xf32>
    %184 = vector.extract_strided_slice %183 {offsets = [0, 0], sizes = [8, 128], strides = [1, 1]} : vector<8x256xf32> to vector<8x128xf32>
    %185 = vector.extract_strided_slice %183 {offsets = [0, 128], sizes = [8, 128], strides = [1, 1]} : vector<8x256xf32> to vector<8x128xf32>
    %186 = vector.extract_strided_slice %173 {offsets = [0, 256], sizes = [8, 128], strides = [1, 1]} : vector<8x384xf32> to vector<8x128xf32>
    %187 = arith.mulf %184, %186 : vector<8x128xf32>
    %188 = arith.mulf %185, %162 : vector<8x128xf32>
    %189 = arith.addf %187, %188 : vector<8x128xf32>
    %190 = math.tanh %189 : vector<8x128xf32>
    %191 = arith.addf %190, %170 : vector<8x128xf32>
    %c1_72 = arith.constant 1 : index
    %c0_73 = arith.constant 0 : index
    %c0_74 = arith.constant 0 : index
    %192 = vector.load %arg7[%c1_72, %c0_73, %c0_74] : memref<8x8x128xf32, #tpu.memory_space<vmem>>, vector<1x8x128xf32>
    %193 = vector.shape_cast %192 : vector<1x8x128xf32> to vector<8x128xf32>
    %194 = vector.shape_cast %191 : vector<8x128xf32> to vector<1x8x128xf32>
    tpu.vector_store %arg7[%c1_72, %c0_73, %c0_74], %194 {strides = array<i32>} : memref<8x8x128xf32, #tpu.memory_space<vmem>>, vector<1x8x128xf32>,
    %c0_75 = arith.constant 0 : index
    %c0_76 = arith.constant 0 : index
    %c0_77 = arith.constant 0 : index
    %195 = vector.load %arg2[%c0_75, %c0_76, %c0_77] : memref<8x8x128xbf16, #tpu.memory_space<vmem>>, vector<1x8x128xbf16>
    %196 = vector.shape_cast %195 : vector<1x8x128xbf16> to vector<8x128xbf16>
    %197 = arith.extf %196 : vector<8x128xbf16> to vector<8x128xf32>
    %c0_78 = arith.constant 0 : index
    %c0_79 = arith.constant 0 : index
    %c0_80 = arith.constant 0 : index
    %198 = vector.load %arg3[%c0_78, %c0_79, %c0_80] : memref<8x8x384xbf16, #tpu.memory_space<vmem>>, vector<1x8x384xbf16>
    %199 = vector.shape_cast %198 : vector<1x8x384xbf16> to vector<8x384xbf16>
    %200 = arith.extf %199 : vector<8x384xbf16> to vector<8x384xf32>
    %cst_81 = arith.constant dense<0.000000e+00> : vector<8x256xf32>
    %201 = tpu.matmul %189, %3, %cst_81 {dimension_numbers = #tpu.dot_dimension_numbers<[1], [0], [0], [1], [0, 0, 1, 1], [], []>} : vector<8x128xf32>, vector<128x256xf32>, vector<8x256xf32> -> vector<8x256xf32>
    %202 = vector.extract_strided_slice %200 {offsets = [0, 0], sizes = [8, 256], strides = [1, 1]} : vector<8x384xf32> to vector<8x256xf32>
    %203 = arith.addf %202, %201 : vector<8x256xf32>
    %204 = vector.broadcast %4 : vector<1x256xf32> to vector<8x256xf32>
    %205 = arith.addf %203, %204 : vector<8x256xf32>
    %206 = arith.negf %205 : vector<8x256xf32>
    %207 = math.exp %206 : vector<8x256xf32>
    %cst_82 = arith.constant 1.000000e+00 : f32
    %208 = vector.broadcast %cst_82 : f32 to vector<8x256xf32>
    %209 = arith.addf %208, %207 : vector<8x256xf32>
    %210 = arith.divf %208, %209 : vector<8x256xf32>
    %211 = vector.extract_strided_slice %210 {offsets = [0, 0], sizes = [8, 128], strides = [1, 1]} : vector<8x256xf32> to vector<8x128xf32>
    %212 = vector.extract_strided_slice %210 {offsets = [0, 128], sizes = [8, 128], strides = [1, 1]} : vector<8x256xf32> to vector<8x128xf32>
    %213 = vector.extract_strided_slice %200 {offsets = [0, 256], sizes = [8, 128], strides = [1, 1]} : vector<8x384xf32> to vector<8x128xf32>
    %214 = arith.mulf %211, %213 : vector<8x128xf32>
    %215 = arith.mulf %212, %189 : vector<8x128xf32>
    %216 = arith.addf %214, %215 : vector<8x128xf32>
    %217 = math.tanh %216 : vector<8x128xf32>
    %218 = arith.addf %217, %197 : vector<8x128xf32>
    %c0_83 = arith.constant 0 : index
    %c0_84 = arith.constant 0 : index
    %c0_85 = arith.constant 0 : index
    %219 = vector.load %arg7[%c0_83, %c0_84, %c0_85] : memref<8x8x128xf32, #tpu.memory_space<vmem>>, vector<1x8x128xf32>
    %220 = vector.shape_cast %219 : vector<1x8x128xf32> to vector<8x128xf32>
    %221 = vector.shape_cast %218 : vector<8x128xf32> to vector<1x8x128xf32>
    tpu.vector_store %arg7[%c0_83, %c0_84, %c0_85], %221 {strides = array<i32>} : memref<8x8x128xf32, #tpu.memory_space<vmem>>, vector<1x8x128xf32>,
    %c0_86 = arith.constant 0 : index
    %c0_87 = arith.constant 0 : index
    %222 = vector.load %arg9[%c0_86, %c0_87] : memref<8x128xf32, #tpu.memory_space<vmem>>, vector<8x128xf32>
    tpu.vector_store %arg9[%c0_86, %c0_87], %216 {strides = array<i32>} : memref<8x128xf32, #tpu.memory_space<vmem>>, vector<8x128xf32>,
    %c0_i32_88 = arith.constant 0 : i32
    %223 = arith.cmpi eq, %arg1, %c0_i32_88 : i32
    %224 = arith.extui %223 : i1 to i32
    %c0_i32_89 = arith.constant 0 : i32
    %225 = arith.cmpi ne, %224, %c0_i32_89 : i32
    scf.if %225 {
      %c0_90 = arith.constant 0 : index
      %c0_91 = arith.constant 0 : index
      %226 = vector.load %arg8[%c0_90, %c0_91] : memref<8x128xf32, #tpu.memory_space<vmem>>, vector<8x128xf32>
      tpu.vector_store %arg8[%c0_90, %c0_91], %216 {strides = array<i32>} : memref<8x128xf32, #tpu.memory_space<vmem>>, vector<8x128xf32>,
    } else {
    }
    return
  }
  func.func @transform_0(%arg0: i32, %arg1: i32) -> (i32, i32, i32) {
    %c0_i32 = arith.constant 0 : i32
    %0 = arith.subi %c0_i32, %arg1 : i32
    %c0_i32_0 = arith.constant 0 : i32
    %c0_i32_1 = arith.constant 0 : i32
    return %0, %arg0, %c0_i32_0 : i32, i32, i32
  }
  func.func @transform_1(%arg0: i32, %arg1: i32) -> (i32, i32, i32) {
    %c0_i32 = arith.constant 0 : i32
    %0 = arith.subi %c0_i32, %arg1 : i32
    %c0_i32_0 = arith.constant 0 : i32
    %c0_i32_1 = arith.constant 0 : i32
    return %0, %arg0, %c0_i32_0 : i32, i32, i32
  }
  func.func @transform_2(%arg0: i32, %arg1: i32) -> (i32, i32) {
    %c0_i32 = arith.constant 0 : i32
    %c0_i32_0 = arith.constant 0 : i32
    return %arg0, %c0_i32 : i32, i32
  }
  func.func @transform_3(%arg0: i32, %arg1: i32) -> (i32, i32) {
    %c0_i32 = arith.constant 0 : i32
    %c0_i32_0 = arith.constant 0 : i32
    %c0_i32_1 = arith.constant 0 : i32
    return %c0_i32, %c0_i32_0 : i32, i32
  }
  func.func @transform_4(%arg0: i32, %arg1: i32) -> (i32, i32) {
    %c0_i32 = arith.constant 0 : i32
    %c0_i32_0 = arith.constant 0 : i32
    %c0_i32_1 = arith.constant 0 : i32
    return %c0_i32, %c0_i32_0 : i32, i32
  }
  func.func @transform_5(%arg0: i32, %arg1: i32) -> (i32, i32, i32) {
    %c0_i32 = arith.constant 0 : i32
    %0 = arith.subi %c0_i32, %arg1 : i32
    %c0_i32_0 = arith.constant 0 : i32
    %c0_i32_1 = arith.constant 0 : i32
    return %0, %arg0, %c0_i32_0 : i32, i32, i32
  }
  func.func @transform_6(%arg0: i32, %arg1: i32) -> (i32, i32) {
    %c0_i32 = arith.constant 0 : i32
    %c0_i32_0 = arith.constant 0 : i32
    return %arg0, %c0_i32 : i32, i32
  }
}

module attributes {stable_mosaic.version = 11 : i64} {
  func.func @_ran_recurrence_kernel(%arg0: i32, %arg1: i32, %arg2: memref<8x8x128xbf16, #tpu.memory_space<vmem>>, %arg3: memref<8x8x384xbf16, #tpu.memory_space<vmem>>, %arg4: memref<8x128xf32, #tpu.memory_space<vmem>>, %arg5: memref<128x256xf32, #tpu.memory_space<vmem>>, %arg6: memref<1x256xf32, #tpu.memory_space<vmem>>, %arg7: memref<8x8x128xf32, #tpu.memory_space<vmem>>, %arg8: memref<8x128xf32, #tpu.memory_space<vmem>>, %arg9: memref<8x128xf32, #tpu.memory_space<vmem>>) attributes {dimension_semantics = [#tpu.dimension_semantics<parallel>, #tpu.dimension_semantics<arbitrary>], iteration_bounds = array<i64: 1, 1>, scalar_prefetch = 0 : i64, scratch_operands = 1 : i64, tpu.core_type = #tpu.core_type<tc>, window_params = [{transform_indices = @transform_0, window_bounds = array<i64: 8, 8, 128>}, {transform_indices = @transform_1, window_bounds = array<i64: 8, 8, 384>}, {transform_indices = @transform_2, window_bounds = array<i64: 8, 128>}, {pipeline_mode = #tpu.pipeline_mode<synchronous>, transform_indices = @transform_3, window_bounds = array<i64: 128, 256>}, {pipeline_mode = #tpu.pipeline_mode<synchronous>, transform_indices = @transform_4, window_bounds = array<i64: 1, 256>}, {transform_indices = @transform_5, window_bounds = array<i64: 8, 8, 128>}, {transform_indices = @transform_6, window_bounds = array<i64: 8, 128>}]} {
    %c0_i32 = arith.constant 0 : i32
    %0 = arith.cmpi eq, %arg1, %c0_i32 : i32
    %1 = arith.extui %0 : i1 to i32
    %c0_i32_0 = arith.constant 0 : i32
    %2 = arith.cmpi ne, %1, %c0_i32_0 : i32
    scf.if %2 {
      %c0_90 = arith.constant 0 : index
      %c0_91 = arith.constant 0 : index
      %226 = vector.load %arg4[%c0_90, %c0_91] : memref<8x128xf32, #tpu.memory_space<vmem>>, vector<8x128xf32>
      %c0_92 = arith.constant 0 : index
      %c0_93 = arith.constant 0 : index
      %227 = vector.load %arg9[%c0_92, %c0_93] : memref<8x128xf32, #tpu.memory_space<vmem>>, vector<8x128xf32>
      tpu.vector_store %arg9[%c0_92, %c0_93], %226 {strides = array<i32>} : memref<8x128xf32, #tpu.memory_space<vmem>>, vector<8x128xf32>,
    } else {
    }
    %c0 = arith.constant 0 : index
    %c0_1 = arith.constant 0 : index
    %3 = vector.load %arg5[%c0, %c0_1] : memref<128x256xf32, #tpu.memory_space<vmem>>, vector<128x256xf32>
    %c0_2 = arith.constant 0 : index
    %c0_3 = arith.constant 0 : index
    %4 = vector.load %arg6[%c0_2, %c0_3] : memref<1x256xf32, #tpu.memory_space<vmem>>, vector<1x256xf32>
    %c0_4 = arith.constant 0 : index
    %c0_5 = arith.constant 0 : index
    %5 = vector.load %arg9[%c0_4, %c0_5] : memref<8x128xf32, #tpu.memory_space<vmem>>, vector<8x128xf32>
    %c7 = arith.constant 7 : index
    %c0_6 = arith.constant 0 : index
    %c0_7 = arith.constant 0 : index
    %6 = vector.load %arg2[%c7, %c0_6, %c0_7] : memref<8x8x128xbf16, #tpu.memory_space<vmem>>, vector<1x8x128xbf16>
    %7 = vector.shape_cast %6 : vector<1x8x128xbf16> to vector<8x128xbf16>
    %8 = arith.extf %7 : vector<8x128xbf16> to vector<8x128xf32>
    %c7_8 = arith.constant 7 : index
    %c0_9 = arith.constant 0 : index
    %c0_10 = arith.constant 0 : index
    %9 = vector.load %arg3[%c7_8, %c0_9, %c0_10] : memref<8x8x384xbf16, #tpu.memory_space<vmem>>, vector<1x8x384xbf16>
    %10 = vector.shape_cast %9 : vector<1x8x384xbf16> to vector<8x384xbf16>
    %11 = arith.extf %10 : vector<8x384xbf16> to vector<8x384xf32>
    %cst = arith.constant dense<0.000000e+00> : vector<8x256xf32>
    %12 = tpu.matmul %5, %3, %cst {dimension_numbers = #tpu.dot_dimension_numbers<[1], [0], [0], [1], [0, 0, 1, 1], [], []>} : vector<8x128xf32>, vector<128x256xf32>, vector<8x256xf32> -> vector<8x256xf32>
    %13 = vector.extract_strided_slice %11 {offsets = [0, 0], sizes = [8, 256], strides = [1, 1]} : vector<8x384xf32> to vector<8x256xf32>
    %14 = arith.addf %13, %12 : vector<8x256xf32>
    %15 = vector.broadcast %4 : vector<1x256xf32> to vector<8x256xf32>
    %16 = arith.addf %14, %15 : vector<8x256xf32>
    %17 = arith.negf %16 : vector<8x256xf32>
    %18 = math.exp %17 : vector<8x256xf32>
    %cst_11 = arith.constant 1.000000e+00 : f32
    %19 = vector.broadcast %cst_11 : f32 to vector<8x256xf32>
    %20 = arith.addf %19, %18 : vector<8x256xf32>
    %21 = arith.divf %19, %20 : vector<8x256xf32>
    %22 = vector.extract_strided_slice %21 {offsets = [0, 0], sizes = [8, 128], strides = [1, 1]} : vector<8x256xf32> to vector<8x128xf32>
    %23 = vector.extract_strided_slice %21 {offsets = [0, 128], sizes = [8, 128], strides = [1, 1]} : vector<8x256xf32> to vector<8x128xf32>
    %24 = vector.extract_strided_slice %11 {offsets = [0, 256], sizes = [8, 128], strides = [1, 1]} : vector<8x384xf32> to vector<8x128xf32>
    %25 = arith.mulf %22, %24 : vector<8x128xf32>
    %26 = arith.mulf %23, %5 : vector<8x128xf32>
    %27 = arith.addf %25, %26 : vector<8x128xf32>
    %28 = math.tanh %27 : vector<8x128xf32>
    %29 = arith.addf %28, %8 : vector<8x128xf32>
    %c7_12 = arith.constant 7 : index
    %c0_13 = arith.constant 0 : index
    %c0_14 = arith.constant 0 : index
    %30 = vector.load %arg7[%c7_12, %c0_13, %c0_14] : memref<8x8x128xf32, #tpu.memory_space<vmem>>, vector<1x8x128xf32>
    %31 = vector.shape_cast %30 : vector<1x8x128xf32> to vector<8x128xf32>
    %32 = vector.shape_cast %29 : vector<8x128xf32> to vector<1x8x128xf32>
    tpu.vector_store %arg7[%c7_12, %c0_13, %c0_14], %32 {strides = array<i32>} : memref<8x8x128xf32, #tpu.memory_space<vmem>>, vector<1x8x128xf32>,
    %c6 = arith.constant 6 : index
    %c0_15 = arith.constant 0 : index
    %c0_16 = arith.constant 0 : index
    %33 = vector.load %arg2[%c6, %c0_15, %c0_16] : memref<8x8x128xbf16, #tpu.memory_space<vmem>>, vector<1x8x128xbf16>
    %34 = vector.shape_cast %33 : vector<1x8x128xbf16> to vector<8x128xbf16>
    %35 = arith.extf %34 : vector<8x128xbf16> to vector<8x128xf32>
    %c6_17 = arith.constant 6 : index
    %c0_18 = arith.constant 0 : index
    %c0_19 = arith.constant 0 : index
    %36 = vector.load %arg3[%c6_17, %c0_18, %c0_19] : memref<8x8x384xbf16, #tpu.memory_space<vmem>>, vector<1x8x384xbf16>
    %37 = vector.shape_cast %36 : vector<1x8x384xbf16> to vector<8x384xbf16>
    %38 = arith.extf %37 : vector<8x384xbf16> to vector<8x384xf32>
    %cst_20 = arith.constant dense<0.000000e+00> : vector<8x256xf32>
    %39 = tpu.matmul %27, %3, %cst_20 {dimension_numbers = #tpu.dot_dimension_numbers<[1], [0], [0], [1], [0, 0, 1, 1], [], []>} : vector<8x128xf32>, vector<128x256xf32>, vector<8x256xf32> -> vector<8x256xf32>
    %40 = vector.extract_strided_slice %38 {offsets = [0, 0], sizes = [8, 256], strides = [1, 1]} : vector<8x384xf32> to vector<8x256xf32>
    %41 = arith.addf %40, %39 : vector<8x256xf32>
    %42 = vector.broadcast %4 : vector<1x256xf32> to vector<8x256xf32>
    %43 = arith.addf %41, %42 : vector<8x256xf32>
    %44 = arith.negf %43 : vector<8x256xf32>
    %45 = math.exp %44 : vector<8x256xf32>
    %cst_21 = arith.constant 1.000000e+00 : f32
    %46 = vector.broadcast %cst_21 : f32 to vector<8x256xf32>
    %47 = arith.addf %46, %45 : vector<8x256xf32>
    %48 = arith.divf %46, %47 : vector<8x256xf32>
    %49 = vector.extract_strided_slice %48 {offsets = [0, 0], sizes = [8, 128], strides = [1, 1]} : vector<8x256xf32> to vector<8x128xf32>
    %50 = vector.extract_strided_slice %48 {offsets = [0, 128], sizes = [8, 128], strides = [1, 1]} : vector<8x256xf32> to vector<8x128xf32>
    %51 = vector.extract_strided_slice %38 {offsets = [0, 256], sizes = [8, 128], strides = [1, 1]} : vector<8x384xf32> to vector<8x128xf32>
    %52 = arith.mulf %49, %51 : vector<8x128xf32>
    %53 = arith.mulf %50, %27 : vector<8x128xf32>
    %54 = arith.addf %52, %53 : vector<8x128xf32>
    %55 = math.tanh %54 : vector<8x128xf32>
    %56 = arith.addf %55, %35 : vector<8x128xf32>
    %c6_22 = arith.constant 6 : index
    %c0_23 = arith.constant 0 : index
    %c0_24 = arith.constant 0 : index
    %57 = vector.load %arg7[%c6_22, %c0_23, %c0_24] : memref<8x8x128xf32, #tpu.memory_space<vmem>>, vector<1x8x128xf32>
    %58 = vector.shape_cast %57 : vector<1x8x128xf32> to vector<8x128xf32>
    %59 = vector.shape_cast %56 : vector<8x128xf32> to vector<1x8x128xf32>
    tpu.vector_store %arg7[%c6_22, %c0_23, %c0_24], %59 {strides = array<i32>} : memref<8x8x128xf32, #tpu.memory_space<vmem>>, vector<1x8x128xf32>,
    %c5 = arith.constant 5 : index
    %c0_25 = arith.constant 0 : index
    %c0_26 = arith.constant 0 : index
    %60 = vector.load %arg2[%c5, %c0_25, %c0_26] : memref<8x8x128xbf16, #tpu.memory_space<vmem>>, vector<1x8x128xbf16>
    %61 = vector.shape_cast %60 : vector<1x8x128xbf16> to vector<8x128xbf16>
    %62 = arith.extf %61 : vector<8x128xbf16> to vector<8x128xf32>
    %c5_27 = arith.constant 5 : index
    %c0_28 = arith.constant 0 : index
    %c0_29 = arith.constant 0 : index
    %63 = vector.load %arg3[%c5_27, %c0_28, %c0_29] : memref<8x8x384xbf16, #tpu.memory_space<vmem>>, vector<1x8x384xbf16>
    %64 = vector.shape_cast %63 : vector<1x8x384xbf16> to vector<8x384xbf16>
    %65 = arith.extf %64 : vector<8x384xbf16> to vector<8x384xf32>
    %cst_30 = arith.constant dense<0.000000e+00> : vector<8x256xf32>
    %66 = tpu.matmul %54, %3, %cst_30 {dimension_numbers = #tpu.dot_dimension_numbers<[1], [0], [0], [1], [0, 0, 1, 1], [], []>} : vector<8x128xf32>, vector<128x256xf32>, vector<8x256xf32> -> vector<8x256xf32>
    %67 = vector.extract_strided_slice %65 {offsets = [0, 0], sizes = [8, 256], strides = [1, 1]} : vector<8x384xf32> to vector<8x256xf32>
    %68 = arith.addf %67, %66 : vector<8x256xf32>
    %69 = vector.broadcast %4 : vector<1x256xf32> to vector<8x256xf32>
    %70 = arith.addf %68, %69 : vector<8x256xf32>
    %71 = arith.negf %70 : vector<8x256xf32>
    %72 = math.exp %71 : vector<8x256xf32>
    %cst_31 = arith.constant 1.000000e+00 : f32
    %73 = vector.broadcast %cst_31 : f32 to vector<8x256xf32>
    %74 = arith.addf %73, %72 : vector<8x256xf32>
    %75 = arith.divf %73, %74 : vector<8x256xf32>
    %76 = vector.extract_strided_slice %75 {offsets = [0, 0], sizes = [8, 128], strides = [1, 1]} : vector<8x256xf32> to vector<8x128xf32>
    %77 = vector.extract_strided_slice %75 {offsets = [0, 128], sizes = [8, 128], strides = [1, 1]} : vector<8x256xf32> to vector<8x128xf32>
    %78 = vector.extract_strided_slice %65 {offsets = [0, 256], sizes = [8, 128], strides = [1, 1]} : vector<8x384xf32> to vector<8x128xf32>
    %79 = arith.mulf %76, %78 : vector<8x128xf32>
    %80 = arith.mulf %77, %54 : vector<8x128xf32>
    %81 = arith.addf %79, %80 : vector<8x128xf32>
    %82 = math.tanh %81 : vector<8x128xf32>
    %83 = arith.addf %82, %62 : vector<8x128xf32>
    %c5_32 = arith.constant 5 : index
    %c0_33 = arith.constant 0 : index
    %c0_34 = arith.constant 0 : index
    %84 = vector.load %arg7[%c5_32, %c0_33, %c0_34] : memref<8x8x128xf32, #tpu.memory_space<vmem>>, vector<1x8x128xf32>
    %85 = vector.shape_cast %84 : vector<1x8x128xf32> to vector<8x128xf32>
    %86 = vector.shape_cast %83 : vector<8x128xf32> to vector<1x8x128xf32>
    tpu.vector_store %arg7[%c5_32, %c0_33, %c0_34], %86 {strides = array<i32>} : memref<8x8x128xf32, #tpu.memory_space<vmem>>, vector<1x8x128xf32>,
    %c4 = arith.constant 4 : index
    %c0_35 = arith.constant 0 : index
    %c0_36 = arith.constant 0 : index
    %87 = vector.load %arg2[%c4, %c0_35, %c0_36] : memref<8x8x128xbf16, #tpu.memory_space<vmem>>, vector<1x8x128xbf16>
    %88 = vector.shape_cast %87 : vector<1x8x128xbf16> to vector<8x128xbf16>
    %89 = arith.extf %88 : vector<8x128xbf16> to vector<8x128xf32>
    %c4_37 = arith.constant 4 : index
    %c0_38 = arith.constant 0 : index
    %c0_39 = arith.constant 0 : index
    %90 = vector.load %arg3[%c4_37, %c0_38, %c0_39] : memref<8x8x384xbf16, #tpu.memory_space<vmem>>, vector<1x8x384xbf16>
    %91 = vector.shape_cast %90 : vector<1x8x384xbf16> to vector<8x384xbf16>
    %92 = arith.extf %91 : vector<8x384xbf16> to vector<8x384xf32>
    %cst_40 = arith.constant dense<0.000000e+00> : vector<8x256xf32>
    %93 = tpu.matmul %81, %3, %cst_40 {dimension_numbers = #tpu.dot_dimension_numbers<[1], [0], [0], [1], [0, 0, 1, 1], [], []>} : vector<8x128xf32>, vector<128x256xf32>, vector<8x256xf32> -> vector<8x256xf32>
    %94 = vector.extract_strided_slice %92 {offsets = [0, 0], sizes = [8, 256], strides = [1, 1]} : vector<8x384xf32> to vector<8x256xf32>
    %95 = arith.addf %94, %93 : vector<8x256xf32>
    %96 = vector.broadcast %4 : vector<1x256xf32> to vector<8x256xf32>
    %97 = arith.addf %95, %96 : vector<8x256xf32>
    %98 = arith.negf %97 : vector<8x256xf32>
    %99 = math.exp %98 : vector<8x256xf32>
    %cst_41 = arith.constant 1.000000e+00 : f32
    %100 = vector.broadcast %cst_41 : f32 to vector<8x256xf32>
    %101 = arith.addf %100, %99 : vector<8x256xf32>
    %102 = arith.divf %100, %101 : vector<8x256xf32>
    %103 = vector.extract_strided_slice %102 {offsets = [0, 0], sizes = [8, 128], strides = [1, 1]} : vector<8x256xf32> to vector<8x128xf32>
    %104 = vector.extract_strided_slice %102 {offsets = [0, 128], sizes = [8, 128], strides = [1, 1]} : vector<8x256xf32> to vector<8x128xf32>
    %105 = vector.extract_strided_slice %92 {offsets = [0, 256], sizes = [8, 128], strides = [1, 1]} : vector<8x384xf32> to vector<8x128xf32>
    %106 = arith.mulf %103, %105 : vector<8x128xf32>
    %107 = arith.mulf %104, %81 : vector<8x128xf32>
    %108 = arith.addf %106, %107 : vector<8x128xf32>
    %109 = math.tanh %108 : vector<8x128xf32>
    %110 = arith.addf %109, %89 : vector<8x128xf32>
    %c4_42 = arith.constant 4 : index
    %c0_43 = arith.constant 0 : index
    %c0_44 = arith.constant 0 : index
    %111 = vector.load %arg7[%c4_42, %c0_43, %c0_44] : memref<8x8x128xf32, #tpu.memory_space<vmem>>, vector<1x8x128xf32>
    %112 = vector.shape_cast %111 : vector<1x8x128xf32> to vector<8x128xf32>
    %113 = vector.shape_cast %110 : vector<8x128xf32> to vector<1x8x128xf32>
    tpu.vector_store %arg7[%c4_42, %c0_43, %c0_44], %113 {strides = array<i32>} : memref<8x8x128xf32, #tpu.memory_space<vmem>>, vector<1x8x128xf32>,
    %c3 = arith.constant 3 : index
    %c0_45 = arith.constant 0 : index
    %c0_46 = arith.constant 0 : index
    %114 = vector.load %arg2[%c3, %c0_45, %c0_46] : memref<8x8x128xbf16, #tpu.memory_space<vmem>>, vector<1x8x128xbf16>
    %115 = vector.shape_cast %114 : vector<1x8x128xbf16> to vector<8x128xbf16>
    %116 = arith.extf %115 : vector<8x128xbf16> to vector<8x128xf32>
    %c3_47 = arith.constant 3 : index
    %c0_48 = arith.constant 0 : index
    %c0_49 = arith.constant 0 : index
    %117 = vector.load %arg3[%c3_47, %c0_48, %c0_49] : memref<8x8x384xbf16, #tpu.memory_space<vmem>>, vector<1x8x384xbf16>
    %118 = vector.shape_cast %117 : vector<1x8x384xbf16> to vector<8x384xbf16>
    %119 = arith.extf %118 : vector<8x384xbf16> to vector<8x384xf32>
    %cst_50 = arith.constant dense<0.000000e+00> : vector<8x256xf32>
    %120 = tpu.matmul %108, %3, %cst_50 {dimension_numbers = #tpu.dot_dimension_numbers<[1], [0], [0], [1], [0, 0, 1, 1], [], []>} : vector<8x128xf32>, vector<128x256xf32>, vector<8x256xf32> -> vector<8x256xf32>
    %121 = vector.extract_strided_slice %119 {offsets = [0, 0], sizes = [8, 256], strides = [1, 1]} : vector<8x384xf32> to vector<8x256xf32>
    %122 = arith.addf %121, %120 : vector<8x256xf32>
    %123 = vector.broadcast %4 : vector<1x256xf32> to vector<8x256xf32>
    %124 = arith.addf %122, %123 : vector<8x256xf32>
    %125 = arith.negf %124 : vector<8x256xf32>
    %126 = math.exp %125 : vector<8x256xf32>
    %cst_51 = arith.constant 1.000000e+00 : f32
    %127 = vector.broadcast %cst_51 : f32 to vector<8x256xf32>
    %128 = arith.addf %127, %126 : vector<8x256xf32>
    %129 = arith.divf %127, %128 : vector<8x256xf32>
    %130 = vector.extract_strided_slice %129 {offsets = [0, 0], sizes = [8, 128], strides = [1, 1]} : vector<8x256xf32> to vector<8x128xf32>
    %131 = vector.extract_strided_slice %129 {offsets = [0, 128], sizes = [8, 128], strides = [1, 1]} : vector<8x256xf32> to vector<8x128xf32>
    %132 = vector.extract_strided_slice %119 {offsets = [0, 256], sizes = [8, 128], strides = [1, 1]} : vector<8x384xf32> to vector<8x128xf32>
    %133 = arith.mulf %130, %132 : vector<8x128xf32>
    %134 = arith.mulf %131, %108 : vector<8x128xf32>
    %135 = arith.addf %133, %134 : vector<8x128xf32>
    %136 = math.tanh %135 : vector<8x128xf32>
    %137 = arith.addf %136, %116 : vector<8x128xf32>
    %c3_52 = arith.constant 3 : index
    %c0_53 = arith.constant 0 : index
    %c0_54 = arith.constant 0 : index
    %138 = vector.load %arg7[%c3_52, %c0_53, %c0_54] : memref<8x8x128xf32, #tpu.memory_space<vmem>>, vector<1x8x128xf32>
    %139 = vector.shape_cast %138 : vector<1x8x128xf32> to vector<8x128xf32>
    %140 = vector.shape_cast %137 : vector<8x128xf32> to vector<1x8x128xf32>
    tpu.vector_store %arg7[%c3_52, %c0_53, %c0_54], %140 {strides = array<i32>} : memref<8x8x128xf32, #tpu.memory_space<vmem>>, vector<1x8x128xf32>,
    %c2 = arith.constant 2 : index
    %c0_55 = arith.constant 0 : index
    %c0_56 = arith.constant 0 : index
    %141 = vector.load %arg2[%c2, %c0_55, %c0_56] : memref<8x8x128xbf16, #tpu.memory_space<vmem>>, vector<1x8x128xbf16>
    %142 = vector.shape_cast %141 : vector<1x8x128xbf16> to vector<8x128xbf16>
    %143 = arith.extf %142 : vector<8x128xbf16> to vector<8x128xf32>
    %c2_57 = arith.constant 2 : index
    %c0_58 = arith.constant 0 : index
    %c0_59 = arith.constant 0 : index
    %144 = vector.load %arg3[%c2_57, %c0_58, %c0_59] : memref<8x8x384xbf16, #tpu.memory_space<vmem>>, vector<1x8x384xbf16>
    %145 = vector.shape_cast %144 : vector<1x8x384xbf16> to vector<8x384xbf16>
    %146 = arith.extf %145 : vector<8x384xbf16> to vector<8x384xf32>
    %cst_60 = arith.constant dense<0.000000e+00> : vector<8x256xf32>
    %147 = tpu.matmul %135, %3, %cst_60 {dimension_numbers = #tpu.dot_dimension_numbers<[1], [0], [0], [1], [0, 0, 1, 1], [], []>} : vector<8x128xf32>, vector<128x256xf32>, vector<8x256xf32> -> vector<8x256xf32>
    %148 = vector.extract_strided_slice %146 {offsets = [0, 0], sizes = [8, 256], strides = [1, 1]} : vector<8x384xf32> to vector<8x256xf32>
    %149 = arith.addf %148, %147 : vector<8x256xf32>
    %150 = vector.broadcast %4 : vector<1x256xf32> to vector<8x256xf32>
    %151 = arith.addf %149, %150 : vector<8x256xf32>
    %152 = arith.negf %151 : vector<8x256xf32>
    %153 = math.exp %152 : vector<8x256xf32>
    %cst_61 = arith.constant 1.000000e+00 : f32
    %154 = vector.broadcast %cst_61 : f32 to vector<8x256xf32>
    %155 = arith.addf %154, %153 : vector<8x256xf32>
    %156 = arith.divf %154, %155 : vector<8x256xf32>
    %157 = vector.extract_strided_slice %156 {offsets = [0, 0], sizes = [8, 128], strides = [1, 1]} : vector<8x256xf32> to vector<8x128xf32>
    %158 = vector.extract_strided_slice %156 {offsets = [0, 128], sizes = [8, 128], strides = [1, 1]} : vector<8x256xf32> to vector<8x128xf32>
    %159 = vector.extract_strided_slice %146 {offsets = [0, 256], sizes = [8, 128], strides = [1, 1]} : vector<8x384xf32> to vector<8x128xf32>
    %160 = arith.mulf %157, %159 : vector<8x128xf32>
    %161 = arith.mulf %158, %135 : vector<8x128xf32>
    %162 = arith.addf %160, %161 : vector<8x128xf32>
    %163 = math.tanh %162 : vector<8x128xf32>
    %164 = arith.addf %163, %143 : vector<8x128xf32>
    %c2_62 = arith.constant 2 : index
    %c0_63 = arith.constant 0 : index
    %c0_64 = arith.constant 0 : index
    %165 = vector.load %arg7[%c2_62, %c0_63, %c0_64] : memref<8x8x128xf32, #tpu.memory_space<vmem>>, vector<1x8x128xf32>
    %166 = vector.shape_cast %165 : vector<1x8x128xf32> to vector<8x128xf32>
    %167 = vector.shape_cast %164 : vector<8x128xf32> to vector<1x8x128xf32>
    tpu.vector_store %arg7[%c2_62, %c0_63, %c0_64], %167 {strides = array<i32>} : memref<8x8x128xf32, #tpu.memory_space<vmem>>, vector<1x8x128xf32>,
    %c1 = arith.constant 1 : index
    %c0_65 = arith.constant 0 : index
    %c0_66 = arith.constant 0 : index
    %168 = vector.load %arg2[%c1, %c0_65, %c0_66] : memref<8x8x128xbf16, #tpu.memory_space<vmem>>, vector<1x8x128xbf16>
    %169 = vector.shape_cast %168 : vector<1x8x128xbf16> to vector<8x128xbf16>
    %170 = arith.extf %169 : vector<8x128xbf16> to vector<8x128xf32>
    %c1_67 = arith.constant 1 : index
    %c0_68 = arith.constant 0 : index
    %c0_69 = arith.constant 0 : index
    %171 = vector.load %arg3[%c1_67, %c0_68, %c0_69] : memref<8x8x384xbf16, #tpu.memory_space<vmem>>, vector<1x8x384xbf16>
    %172 = vector.shape_cast %171 : vector<1x8x384xbf16> to vector<8x384xbf16>
    %173 = arith.extf %172 : vector<8x384xbf16> to vector<8x384xf32>
    %cst_70 = arith.constant dense<0.000000e+00> : vector<8x256xf32>
    %174 = tpu.matmul %162, %3, %cst_70 {dimension_numbers = #tpu.dot_dimension_numbers<[1], [0], [0], [1], [0, 0, 1, 1], [], []>} : vector<8x128xf32>, vector<128x256xf32>, vector<8x256xf32> -> vector<8x256xf32>
    %175 = vector.extract_strided_slice %173 {offsets = [0, 0], sizes = [8, 256], strides = [1, 1]} : vector<8x384xf32> to vector<8x256xf32>
    %176 = arith.addf %175, %174 : vector<8x256xf32>
    %177 = vector.broadcast %4 : vector<1x256xf32> to vector<8x256xf32>
    %178 = arith.addf %176, %177 : vector<8x256xf32>
    %179 = arith.negf %178 : vector<8x256xf32>
    %180 = math.exp %179 : vector<8x256xf32>
    %cst_71 = arith.constant 1.000000e+00 : f32
    %181 = vector.broadcast %cst_71 : f32 to vector<8x256xf32>
    %182 = arith.addf %181, %180 : vector<8x256xf32>
    %183 = arith.divf %181, %182 : vector<8x256xf32>
    %184 = vector.extract_strided_slice %183 {offsets = [0, 0], sizes = [8, 128], strides = [1, 1]} : vector<8x256xf32> to vector<8x128xf32>
    %185 = vector.extract_strided_slice %183 {offsets = [0, 128], sizes = [8, 128], strides = [1, 1]} : vector<8x256xf32> to vector<8x128xf32>
    %186 = vector.extract_strided_slice %173 {offsets = [0, 256], sizes = [8, 128], strides = [1, 1]} : vector<8x384xf32> to vector<8x128xf32>
    %187 = arith.mulf %184, %186 : vector<8x128xf32>
    %188 = arith.mulf %185, %162 : vector<8x128xf32>
    %189 = arith.addf %187, %188 : vector<8x128xf32>
    %190 = math.tanh %189 : vector<8x128xf32>
    %191 = arith.addf %190, %170 : vector<8x128xf32>
    %c1_72 = arith.constant 1 : index
    %c0_73 = arith.constant 0 : index
    %c0_74 = arith.constant 0 : index
    %192 = vector.load %arg7[%c1_72, %c0_73, %c0_74] : memref<8x8x128xf32, #tpu.memory_space<vmem>>, vector<1x8x128xf32>
    %193 = vector.shape_cast %192 : vector<1x8x128xf32> to vector<8x128xf32>
    %194 = vector.shape_cast %191 : vector<8x128xf32> to vector<1x8x128xf32>
    tpu.vector_store %arg7[%c1_72, %c0_73, %c0_74], %194 {strides = array<i32>} : memref<8x8x128xf32, #tpu.memory_space<vmem>>, vector<1x8x128xf32>,
    %c0_75 = arith.constant 0 : index
    %c0_76 = arith.constant 0 : index
    %c0_77 = arith.constant 0 : index
    %195 = vector.load %arg2[%c0_75, %c0_76, %c0_77] : memref<8x8x128xbf16, #tpu.memory_space<vmem>>, vector<1x8x128xbf16>
    %196 = vector.shape_cast %195 : vector<1x8x128xbf16> to vector<8x128xbf16>
    %197 = arith.extf %196 : vector<8x128xbf16> to vector<8x128xf32>
    %c0_78 = arith.constant 0 : index
    %c0_79 = arith.constant 0 : index
    %c0_80 = arith.constant 0 : index
    %198 = vector.load %arg3[%c0_78, %c0_79, %c0_80] : memref<8x8x384xbf16, #tpu.memory_space<vmem>>, vector<1x8x384xbf16>
    %199 = vector.shape_cast %198 : vector<1x8x384xbf16> to vector<8x384xbf16>
    %200 = arith.extf %199 : vector<8x384xbf16> to vector<8x384xf32>
    %cst_81 = arith.constant dense<0.000000e+00> : vector<8x256xf32>
    %201 = tpu.matmul %189, %3, %cst_81 {dimension_numbers = #tpu.dot_dimension_numbers<[1], [0], [0], [1], [0, 0, 1, 1], [], []>} : vector<8x128xf32>, vector<128x256xf32>, vector<8x256xf32> -> vector<8x256xf32>
    %202 = vector.extract_strided_slice %200 {offsets = [0, 0], sizes = [8, 256], strides = [1, 1]} : vector<8x384xf32> to vector<8x256xf32>
    %203 = arith.addf %202, %201 : vector<8x256xf32>
    %204 = vector.broadcast %4 : vector<1x256xf32> to vector<8x256xf32>
    %205 = arith.addf %203, %204 : vector<8x256xf32>
    %206 = arith.negf %205 : vector<8x256xf32>
    %207 = math.exp %206 : vector<8x256xf32>
    %cst_82 = arith.constant 1.000000e+00 : f32
    %208 = vector.broadcast %cst_82 : f32 to vector<8x256xf32>
    %209 = arith.addf %208, %207 : vector<8x256xf32>
    %210 = arith.divf %208, %209 : vector<8x256xf32>
    %211 = vector.extract_strided_slice %210 {offsets = [0, 0], sizes = [8, 128], strides = [1, 1]} : vector<8x256xf32> to vector<8x128xf32>
    %212 = vector.extract_strided_slice %210 {offsets = [0, 128], sizes = [8, 128], strides = [1, 1]} : vector<8x256xf32> to vector<8x128xf32>
    %213 = vector.extract_strided_slice %200 {offsets = [0, 256], sizes = [8, 128], strides = [1, 1]} : vector<8x384xf32> to vector<8x128xf32>
    %214 = arith.mulf %211, %213 : vector<8x128xf32>
    %215 = arith.mulf %212, %189 : vector<8x128xf32>
    %216 = arith.addf %214, %215 : vector<8x128xf32>
    %217 = math.tanh %216 : vector<8x128xf32>
    %218 = arith.addf %217, %197 : vector<8x128xf32>
    %c0_83 = arith.constant 0 : index
    %c0_84 = arith.constant 0 : index
    %c0_85 = arith.constant 0 : index
    %219 = vector.load %arg7[%c0_83, %c0_84, %c0_85] : memref<8x8x128xf32, #tpu.memory_space<vmem>>, vector<1x8x128xf32>
    %220 = vector.shape_cast %219 : vector<1x8x128xf32> to vector<8x128xf32>
    %221 = vector.shape_cast %218 : vector<8x128xf32> to vector<1x8x128xf32>
    tpu.vector_store %arg7[%c0_83, %c0_84, %c0_85], %221 {strides = array<i32>} : memref<8x8x128xf32, #tpu.memory_space<vmem>>, vector<1x8x128xf32>,
    %c0_86 = arith.constant 0 : index
    %c0_87 = arith.constant 0 : index
    %222 = vector.load %arg9[%c0_86, %c0_87] : memref<8x128xf32, #tpu.memory_space<vmem>>, vector<8x128xf32>
    tpu.vector_store %arg9[%c0_86, %c0_87], %216 {strides = array<i32>} : memref<8x128xf32, #tpu.memory_space<vmem>>, vector<8x128xf32>,
    %c0_i32_88 = arith.constant 0 : i32
    %223 = arith.cmpi eq, %arg1, %c0_i32_88 : i32
    %224 = arith.extui %223 : i1 to i32
    %c0_i32_89 = arith.constant 0 : i32
    %225 = arith.cmpi ne, %224, %c0_i32_89 : i32
    scf.if %225 {
      %c0_90 = arith.constant 0 : index
      %c0_91 = arith.constant 0 : index
      %226 = vector.load %arg8[%c0_90, %c0_91] : memref<8x128xf32, #tpu.memory_space<vmem>>, vector<8x128xf32>
      tpu.vector_store %arg8[%c0_90, %c0_91], %216 {strides = array<i32>} : memref<8x128xf32, #tpu.memory_space<vmem>>, vector<8x128xf32>,
    } else {
    }
    return
  }
  func.func @transform_0(%arg0: i32, %arg1: i32) -> (i32, i32, i32) {
    %c0_i32 = arith.constant 0 : i32
    %0 = arith.subi %c0_i32, %arg1 : i32
    %c0_i32_0 = arith.constant 0 : i32
    %c0_i32_1 = arith.constant 0 : i32
    return %0, %arg0, %c0_i32_0 : i32, i32, i32
  }
  func.func @transform_1(%arg0: i32, %arg1: i32) -> (i32, i32, i32) {
    %c0_i32 = arith.constant 0 : i32
    %0 = arith.subi %c0_i32, %arg1 : i32
    %c0_i32_0 = arith.constant 0 : i32
    %c0_i32_1 = arith.constant 0 : i32
    return %0, %arg0, %c0_i32_0 : i32, i32, i32
  }
  func.func @transform_2(%arg0: i32, %arg1: i32) -> (i32, i32) {
    %c0_i32 = arith.constant 0 : i32
    %c0_i32_0 = arith.constant 0 : i32
    return %arg0, %c0_i32 : i32, i32
  }
  func.func @transform_3(%arg0: i32, %arg1: i32) -> (i32, i32) {
    %c0_i32 = arith.constant 0 : i32
    %c0_i32_0 = arith.constant 0 : i32
    %c0_i32_1 = arith.constant 0 : i32
    return %c0_i32, %c0_i32_0 : i32, i32
  }
  func.func @transform_4(%arg0: i32, %arg1: i32) -> (i32, i32) {
    %c0_i32 = arith.constant 0 : i32
    %c0_i32_0 = arith.constant 0 : i32
    %c0_i32_1 = arith.constant 0 : i32
    return %c0_i32, %c0_i32_0 : i32, i32
  }
  func.func @transform_5(%arg0: i32, %arg1: i32) -> (i32, i32, i32) {
    %c0_i32 = arith.constant 0 : i32
    %0 = arith.subi %c0_i32, %arg1 : i32
    %c0_i32_0 = arith.constant 0 : i32
    %c0_i32_1 = arith.constant 0 : i32
    return %0, %arg0, %c0_i32_0 : i32, i32, i32
  }
  func.func @transform_6(%arg0: i32, %arg1: i32) -> (i32, i32) {
    %c0_i32 = arith.constant 0 : i32
    %c0_i32_0 = arith.constant 0 : i32
    return %arg0, %c0_i32 : i32, i32
  }
}

</mosaic_0001>

<llo_original>
// kernel: encoder_forward.4
$region0: #{encoder_forward.4}
  #allocation0 [shape = 'u32[]', space=smem, size = 0x4, offset = 0x4, fixed_abs, tag = 'smem constant byte address 0x4 - core index']
  #allocation1 [shape = 'u32[144,128]{1,0:T(1,128)}', space=vmem, size = 0x12000, scoped, tag = 'internal scratch']
  #allocation2 [shape = 'f32[8,128]{1,0:T(8,128)}', space=vmem, size = 0x1000, scoped, tag = 'scratch operand']
  %s0 = inlined_call_operand.vmem [shape: bf16[8,8,128], index: 0, kind: input, shape index: {}]
  %s1 = inlined_call_operand.vmem [shape: bf16[8,8,384], index: 1, kind: input, shape index: {}]
  %s2 = inlined_call_operand.vmem [shape: f32[8,128], index: 2, kind: input, shape index: {}]
  %s3 = inlined_call_operand.vmem [shape: f32[128,256], index: 3, kind: input, shape index: {}]
  %s4 = inlined_call_operand.vmem [shape: f32[1,256], index: 4, kind: input, shape index: {}]
  %s5 = inlined_call_operand.vmem [shape: f32[8,8,128], index: 5, kind: output, shape index: {0}]
  %s6 = inlined_call_operand.vmem [shape: f32[8,128], index: 6, kind: output, shape index: {1}]
  %7 = xla_tuple %s5, %s6
  %s8 = sld [smem:[#allocation0]]
  $region46: #{encoder_forward.4} parent=0
    _
  %s10 = ssub.s32 1, %s8
  %s11 = scalar_select 0, %s10, %s8
  // Predicated region
  $region2: #{encoder_forward.4} parent=0 // pred_check
    _
  $region3: #{encoder_forward.4} parent=0 // pred_check_branch
    %13 = sbr.rel (0) target = $region5
  $region4: #{encoder_forward.4} parent=0 // pred_region
    _
  $region5: #{encoder_forward.4} parent=0 // pred_fallthru
    _
  // Predicated region
  $region6: #{encoder_forward.4} parent=0 // pred_check
    _
  $region7: #{encoder_forward.4} parent=0 // pred_check_branch
    %15 = sbr.rel (0) target = $region9
  $region8: #{encoder_forward.4} parent=0 // pred_region
    _
  $region9: #{encoder_forward.4} parent=0 // pred_fallthru
    _
  // Predicated region
  $region10: #{encoder_forward.4} parent=0 // pred_check
    _
  $region11: #{encoder_forward.4} parent=0 // pred_check_branch
    %17 = sbr.rel (0) target = $region13
  $region12: #{encoder_forward.4} parent=0 // pred_region
    _
  $region13: #{encoder_forward.4} parent=0 // pred_fallthru
    _
  // Predicated region
  $region14: #{encoder_forward.4} parent=0 // pred_check
    _
  $region15: #{encoder_forward.4} parent=0 // pred_check_branch
    %19 = sbr.rel (0) target = $region17
  $region16: #{encoder_forward.4} parent=0 // pred_region
    _
  $region17: #{encoder_forward.4} parent=0 // pred_fallthru
    _
  // Predicated region
  $region18: #{encoder_forward.4} parent=0 // pred_check
    _
  $region19: #{encoder_forward.4} parent=0 // pred_check_branch
    %21 = sbr.rel (0) target = $region21
  $region20: #{encoder_forward.4} parent=0 // pred_region
    _
  $region21: #{encoder_forward.4} parent=0 // pred_fallthru
    _
  %p22 = scmp.eq.s32.totalorder 0, 0
  // Predicated region
  $region22: #{encoder_forward.4} parent=0 // pred_check
    %p23 = pneg %p22
  $region23: #{encoder_forward.4} parent=0 // pred_check_branch
    %25 = sbr.rel (%p23) target = $region25
  $region24: #{encoder_forward.4} parent=0 // pred_region
    %v26 = vld [vmem:[%s2] sm:$0xff]
    %27 = vst [vmem:[#allocation2] sm:$0xff] %v26
  $region25: #{encoder_forward.4} parent=0 // pred_fallthru
    _
  %v28 = vld [vmem:[%s3] sm:$0xff]
  %v29 = vld [vmem:[%s3 + $0x8] sm:$0xff]
  %v30 = vld [vmem:[%s3 + $0x10] sm:$0xff]
  %v31 = vld [vmem:[%s3 + $0x18] sm:$0xff]
  %v32 = vld [vmem:[%s3 + $0x20] sm:$0xff]
  %v33 = vld [vmem:[%s3 + $0x28] sm:$0xff]
  %v34 = vld [vmem:[%s3 + $0x30] sm:$0xff]
  %v35 = vld [vmem:[%s3 + $0x38] sm:$0xff]
  %v36 = vld [vmem:[%s3 + $0x40] sm:$0xff]
  %v37 = vld [vmem:[%s3 + $0x48] sm:$0xff]
  %v38 = vld [vmem:[%s3 + $0x50] sm:$0xff]
  %v39 = vld [vmem:[%s3 + $0x58] sm:$0xff]
  %v40 = vld [vmem:[%s3 + $0x60] sm:$0xff]
  %v41 = vld [vmem:[%s3 + $0x68] sm:$0xff]
  %v42 = vld [vmem:[%s3 + $0x70] sm:$0xff]
  %v43 = vld [vmem:[%s3 + $0x78] sm:$0xff]
  %v44 = vld [vmem:[%s3 + $0x80] sm:$0xff]
  %v45 = vld [vmem:[%s3 + $0x88] sm:$0xff]
  %v46 = vld [vmem:[%s3 + $0x90] sm:$0xff]
  %v47 = vld [vmem:[%s3 + $0x98] sm:$0xff]
  %v48 = vld [vmem:[%s3 + $0xa0] sm:$0xff]
  %v49 = vld [vmem:[%s3 + $0xa8] sm:$0xff]
  %v50 = vld [vmem:[%s3 + $0xb0] sm:$0xff]
  %v51 = vld [vmem:[%s3 + $0xb8] sm:$0xff]
  %v52 = vld [vmem:[%s3 + $0xc0] sm:$0xff]
  %v53 = vld [vmem:[%s3 + $0xc8] sm:$0xff]
  %v54 = vld [vmem:[%s3 + $0xd0] sm:$0xff]
  %v55 = vld [vmem:[%s3 + $0xd8] sm:$0xff]
  %v56 = vld [vmem:[%s3 + $0xe0] sm:$0xff]
  %v57 = vld [vmem:[%s3 + $0xe8] sm:$0xff]
  %v58 = vld [vmem:[%s3 + $0xf0] sm:$0xff]
  %v59 = vld [vmem:[%s3 + $0xf8] sm:$0xff]
  %v60 = vld [vmem:[%s4] sm:$0x3]
  %v61 = vld [vmem:[#allocation2] sm:$0xff]
  %v62 = vld [vmem:[%s0] sm:$0xf]
  %v63 = vunpack.c.l.bf16 %v62
  %v64 = vld [vmem:[%s1] sm:$0xff]
  %v65 = vld [vmem:[%s1 + $0x8] sm:$0xf]
  %v66 = vunpack.c.l.bf16 %v64
  %v67 = vunpack.c.h.bf16 %v64
  %v68 = vunpack.c.l.bf16 %v65
  %69 = vmatprep.subr.mxu0 %v29
  %70 = vmatpush1.msra.mxu0 %v28
  %71 = vmatprep.subr.mxu0 %v31
  %72 = vmatpush1.msra.mxu0 %v30
  %73 = vmatprep.subr.mxu0 %v33
  %74 = vmatpush1.msra.mxu0 %v32
  %75 = vmatprep.subr.mxu0 %v35
  %76 = vmatpush1.msra.mxu0 %v34
  %77 = vmatprep.subr.mxu0 %v37
  %78 = vmatpush1.msra.mxu0 %v36
  %79 = vmatprep.subr.mxu0 %v39
  %80 = vmatpush1.msra.mxu0 %v38
  %81 = vmatprep.subr.mxu0 %v41
  %82 = vmatpush1.msra.mxu0 %v40
  %83 = vmatprep.subr.mxu0 %v43
  %84 = vmatpush1.msra.mxu0 %v42
  %85 = vmatprep.subr.mxu0 %v45
  %86 = vmatpush1.msra.mxu0 %v44
  %87 = vmatprep.subr.mxu0 %v47
  %88 = vmatpush1.msra.mxu0 %v46
  %89 = vmatprep.subr.mxu0 %v49
  %90 = vmatpush1.msra.mxu0 %v48
  %91 = vmatprep.subr.mxu0 %v51
  %92 = vmatpush1.msra.mxu0 %v50
  %93 = vmatprep.subr.mxu0 %v53
  %94 = vmatpush1.msra.mxu0 %v52
  %95 = vmatprep.subr.mxu0 %v55
  %96 = vmatpush1.msra.mxu0 %v54
  %97 = vmatprep.subr.mxu0 %v57
  %98 = vmatpush1.msra.mxu0 %v56
  %99 = vmatprep.subr.mxu0 %v59
  %100 = vmatpush1.msra.mxu0 %v58
  %101 = vmatprep.subr.mxu0 0.0
  %102 = vmatpush1.msra.mxu0 0.0
  %103 = vmatprep.subr.mxu0 0.0
  %104 = vmatpush1.msra.mxu0 0.0
  %105 = vmatprep.subr.mxu0 0.0
  %106 = vmatpush1.msra.mxu0 0.0
  %107 = vmatprep.subr.mxu0 0.0
  %108 = vmatpush1.msra.mxu0 0.0
  %109 = vmatprep.subr.mxu0 0.0
  %110 = vmatpush1.msra.mxu0 0.0
  %111 = vmatprep.subr.mxu0 0.0
  %112 = vmatpush1.msra.mxu0 0.0
  %113 = vmatprep.subr.mxu0 0.0
  %114 = vmatpush1.msra.mxu0 0.0
  %115 = vmatprep.subr.mxu0 0.0
  %116 = vmatpush1.msra.mxu0 0.0
  %117 = vmatprep.subr.mxu0 0.0
  %118 = vmatpush1.msra.mxu0 0.0
  %119 = vmatprep.subr.mxu0 0.0
  %120 = vmatpush1.msra.mxu0 0.0
  %121 = vmatprep.subr.mxu0 0.0
  %122 = vmatpush1.msra.mxu0 0.0
  %123 = vmatprep.subr.mxu0 0.0
  %124 = vmatpush1.msra.mxu0 0.0
  %125 = vmatprep.subr.mxu0 0.0
  %126 = vmatpush1.msra.mxu0 0.0
  %127 = vmatprep.subr.mxu0 0.0
  %128 = vmatpush1.msra.mxu0 0.0
  %129 = vmatprep.subr.mxu0 0.0
  %130 = vmatpush1.msra.mxu0 0.0
  %131 = vmatprep.subr.mxu0 0.0
  %132 = vmatpush1.msra.mxu0 0.0
  %133 = vmatprep.mubr.f32.mxu0 0.0
  %134 = vmatmul.mubr.f32.gmra.mrb[0].mxu0 %v61
  %v135 = vpop.f32.mrb[0].mxu0
  %v136 = vadd.f32 0.0, %v135
  %v137 = vpop.f32.mrb[0].mxu0
  %v138 = vadd.f32 0.0, %v137
  %139 = vdwg.mxu0
  %v140 = vadd.f32 %v66, %v136
  %v141 = vadd.f32 %v67, %v138
  %v143 = vlaneseq
  %v144 = vshrl.u32 %v143, 7
  %v145 = vsub.s32 0, %v144
  %v146 = vrot.slane %v60, %v145
  %v147 = vlaneseq
  %v148 = vshrl.u32 %v147, 7
  %v149 = vsub.s32 1, %v148
  %v150 = vrot.slane %v60, %v149
  %v153 = vadd.f32 %v140, %v146
  %v154 = vadd.f32 %v141, %v150
  %v155 = vxor.u32 %v153, 2147483648
  %v156 = vxor.u32 %v154, 2147483648
  %v157 = vmul.f32 %v155, 1.442695
  %v158 = vpow.pop %v157
  %v159 = vmul.f32 %v156, 1.442695
  %v160 = vpow.pop %v159
  %v161 = vadd.f32 %v158, 1.0
  %v162 = vadd.f32 %v160, 1.0
  %v163 = vrcp.pop %v161
  %v164 = vmul.f32 1.0, %v163
  %v165 = vrcp.pop %v162
  %v166 = vmul.f32 1.0, %v165
  %v167 = vmul.f32 %v164, %v68
  %v168 = vmul.f32 %v166, %v61
  %v169 = vadd.f32 %v167, %v168
  %v170 = vtanh.pop %v169
  %v171 = vadd.f32 %v170, %v63
  %172 = vst [vmem:[%s5] sm:$0xff] %v171
  %s173 = scalar_lea.vmem %s0, 4
  %v174 = vld [vmem:[%s173] sm:$0xf]
  %v175 = vunpack.c.l.bf16 %v174
  %s176 = scalar_lea.vmem %s1, 12
  %v177 = vld [vmem:[%s176] sm:$0xff]
  %v178 = vld [vmem:[%s176 + $0x8] sm:$0xf]
  %v179 = vunpack.c.l.bf16 %v177
  %v180 = vunpack.c.h.bf16 %v177
  %v181 = vunpack.c.l.bf16 %v178
  %182 = vmatprep.subr.mxu0 %v29
  %183 = vmatpush1.msra.mxu0 %v28
  %184 = vmatprep.subr.mxu0 %v31
  %185 = vmatpush1.msra.mxu0 %v30
  %186 = vmatprep.subr.mxu0 %v33
  %187 = vmatpush1.msra.mxu0 %v32
  %188 = vmatprep.subr.mxu0 %v35
  %189 = vmatpush1.msra.mxu0 %v34
  %190 = vmatprep.subr.mxu0 %v37
  %191 = vmatpush1.msra.mxu0 %v36
  %192 = vmatprep.subr.mxu0 %v39
  %193 = vmatpush1.msra.mxu0 %v38
  %194 = vmatprep.subr.mxu0 %v41
  %195 = vmatpush1.msra.mxu0 %v40
  %196 = vmatprep.subr.mxu0 %v43
  %197 = vmatpush1.msra.mxu0 %v42
  %198 = vmatprep.subr.mxu0 %v45
  %199 = vmatpush1.msra.mxu0 %v44
  %200 = vmatprep.subr.mxu0 %v47
  %201 = vmatpush1.msra.mxu0 %v46
  %202 = vmatprep.subr.mxu0 %v49
  %203 = vmatpush1.msra.mxu0 %v48
  %204 = vmatprep.subr.mxu0 %v51
  %205 = vmatpush1.msra.mxu0 %v50
  %206 = vmatprep.subr.mxu0 %v53
  %207 = vmatpush1.msra.mxu0 %v52
  %208 = vmatprep.subr.mxu0 %v55
  %209 = vmatpush1.msra.mxu0 %v54
  %210 = vmatprep.subr.mxu0 %v57
  %211 = vmatpush1.msra.mxu0 %v56
  %212 = vmatprep.subr.mxu0 %v59
  %213 = vmatpush1.msra.mxu0 %v58
  %214 = vmatprep.subr.mxu0 0.0
  %215 = vmatpush1.msra.mxu0 0.0
  %216 = vmatprep.subr.mxu0 0.0
  %217 = vmatpush1.msra.mxu0 0.0
  %218 = vmatprep.subr.mxu0 0.0
  %219 = vmatpush1.msra.mxu0 0.0
  %220 = vmatprep.subr.mxu0 0.0
  %221 = vmatpush1.msra.mxu0 0.0
  %222 = vmatprep.subr.mxu0 0.0
  %223 = vmatpush1.msra.mxu0 0.0
  %224 = vmatprep.subr.mxu0 0.0
  %225 = vmatpush1.msra.mxu0 0.0
  %226 = vmatprep.subr.mxu0 0.0
  %227 = vmatpush1.msra.mxu0 0.0
  %228 = vmatprep.subr.mxu0 0.0
  %229 = vmatpush1.msra.mxu0 0.0
  %230 = vmatprep.subr.mxu0 0.0
  %231 = vmatpush1.msra.mxu0 0.0
  %232 = vmatprep.subr.mxu0 0.0
  %233 = vmatpush1.msra.mxu0 0.0
  %234 = vmatprep.subr.mxu0 0.0
  %235 = vmatpush1.msra.mxu0 0.0
  %236 = vmatprep.subr.mxu0 0.0
  %237 = vmatpush1.msra.mxu0 0.0
  %238 = vmatprep.subr.mxu0 0.0
  %239 = vmatpush1.msra.mxu0 0.0
  %240 = vmatprep.subr.mxu0 0.0
  %241 = vmatpush1.msra.mxu0 0.0
  %242 = vmatprep.subr.mxu0 0.0
  %243 = vmatpush1.msra.mxu0 0.0
  %244 = vmatprep.subr.mxu0 0.0
  %245 = vmatpush1.msra.mxu0 0.0
  %246 = vmatprep.mubr.f32.mxu0 0.0
  %247 = vmatmul.mubr.f32.gmra.mrb[0].mxu0 %v169
  %v248 = vpop.f32.mrb[0].mxu0
  %v249 = vadd.f32 0.0, %v248
  %v250 = vpop.f32.mrb[0].mxu0
  %v251 = vadd.f32 0.0, %v250
  %252 = vdwg.mxu0
  %v253 = vadd.f32 %v179, %v249
  %v254 = vadd.f32 %v180, %v251
  %v255 = vadd.f32 %v253, %v146
  %v256 = vadd.f32 %v254, %v150
  %v257 = vxor.u32 %v255, 2147483648
  %v258 = vxor.u32 %v256, 2147483648
  %v259 = vmul.f32 %v257, 1.442695
  %v260 = vpow.pop %v259
  %v261 = vmul.f32 %v258, 1.442695
  %v262 = vpow.pop %v261
  %v263 = vadd.f32 %v260, 1.0
  %v264 = vadd.f32 %v262, 1.0
  %v265 = vrcp.pop %v263
  %v266 = vmul.f32 1.0, %v265
  %v267 = vrcp.pop %v264
  %v268 = vmul.f32 1.0, %v267
  %v269 = vmul.f32 %v266, %v181
  %v270 = vmul.f32 %v268, %v169
  %v271 = vadd.f32 %v269, %v270
  %v272 = vtanh.pop %v271
  %v273 = vadd.f32 %v272, %v175
  %s274 = scalar_lea.vmem %s5, 8
  %275 = vst [vmem:[%s274] sm:$0xff] %v273
  %s276 = scalar_lea.vmem %s0, 8
  %v277 = vld [vmem:[%s276] sm:$0xf]
  %v278 = vunpack.c.l.bf16 %v277
  %s279 = scalar_lea.vmem %s1, 24
  %v280 = vld [vmem:[%s279] sm:$0xff]
  %v281 = vld [vmem:[%s279 + $0x8] sm:$0xf]
  %v282 = vunpack.c.l.bf16 %v280
  %v283 = vunpack.c.h.bf16 %v280
  %v284 = vunpack.c.l.bf16 %v281
  %285 = vmatprep.subr.mxu0 %v29
  %286 = vmatpush1.msra.mxu0 %v28
  %287 = vmatprep.subr.mxu0 %v31
  %288 = vmatpush1.msra.mxu0 %v30
  %289 = vmatprep.subr.mxu0 %v33
  %290 = vmatpush1.msra.mxu0 %v32
  %291 = vmatprep.subr.mxu0 %v35
  %292 = vmatpush1.msra.mxu0 %v34
  %293 = vmatprep.subr.mxu0 %v37
  %294 = vmatpush1.msra.mxu0 %v36
  %295 = vmatprep.subr.mxu0 %v39
  %296 = vmatpush1.msra.mxu0 %v38
  %297 = vmatprep.subr.mxu0 %v41
  %298 = vmatpush1.msra.mxu0 %v40
  %299 = vmatprep.subr.mxu0 %v43
  %300 = vmatpush1.msra.mxu0 %v42
  %301 = vmatprep.subr.mxu0 %v45
  %302 = vmatpush1.msra.mxu0 %v44
  %303 = vmatprep.subr.mxu0 %v47
  %304 = vmatpush1.msra.mxu0 %v46
  %305 = vmatprep.subr.mxu0 %v49
  %306 = vmatpush1.msra.mxu0 %v48
  %307 = vmatprep.subr.mxu0 %v51
  %308 = vmatpush1.msra.mxu0 %v50
  %309 = vmatprep.subr.mxu0 %v53
  %310 = vmatpush1.msra.mxu0 %v52
  %311 = vmatprep.subr.mxu0 %v55
  %312 = vmatpush1.msra.mxu0 %v54
  %313 = vmatprep.subr.mxu0 %v57
  %314 = vmatpush1.msra.mxu0 %v56
  %315 = vmatprep.subr.mxu0 %v59
  %316 = vmatpush1.msra.mxu0 %v58
  %317 = vmatprep.subr.mxu0 0.0
  %318 = vmatpush1.msra.mxu0 0.0
  %319 = vmatprep.subr.mxu0 0.0
  %320 = vmatpush1.msra.mxu0 0.0
  %321 = vmatprep.subr.mxu0 0.0
  %322 = vmatpush1.msra.mxu0 0.0
  %323 = vmatprep.subr.mxu0 0.0
  %324 = vmatpush1.msra.mxu0 0.0
  %325 = vmatprep.subr.mxu0 0.0
  %326 = vmatpush1.msra.mxu0 0.0
  %327 = vmatprep.subr.mxu0 0.0
  %328 = vmatpush1.msra.mxu0 0.0
  %329 = vmatprep.subr.mxu0 0.0
  %330 = vmatpush1.msra.mxu0 0.0
  %331 = vmatprep.subr.mxu0 0.0
  %332 = vmatpush1.msra.mxu0 0.0
  %333 = vmatprep.subr.mxu0 0.0
  %334 = vmatpush1.msra.mxu0 0.0
  %335 = vmatprep.subr.mxu0 0.0
  %336 = vmatpush1.msra.mxu0 0.0
  %337 = vmatprep.subr.mxu0 0.0
  %338 = vmatpush1.msra.mxu0 0.0
  %339 = vmatprep.subr.mxu0 0.0
  %340 = vmatpush1.msra.mxu0 0.0
  %341 = vmatprep.subr.mxu0 0.0
  %342 = vmatpush1.msra.mxu0 0.0
  %343 = vmatprep.subr.mxu0 0.0
  %344 = vmatpush1.msra.mxu0 0.0
  %345 = vmatprep.subr.mxu0 0.0
  %346 = vmatpush1.msra.mxu0 0.0
  %347 = vmatprep.subr.mxu0 0.0
  %348 = vmatpush1.msra.mxu0 0.0
  %349 = vmatprep.mubr.f32.mxu0 0.0
  %350 = vmatmul.mubr.f32.gmra.mrb[0].mxu0 %v271
  %v351 = vpop.f32.mrb[0].mxu0
  %v352 = vadd.f32 0.0, %v351
  %v353 = vpop.f32.mrb[0].mxu0
  %v354 = vadd.f32 0.0, %v353
  %355 = vdwg.mxu0
  %v356 = vadd.f32 %v282, %v352
  %v357 = vadd.f32 %v283, %v354
  %v358 = vadd.f32 %v356, %v146
  %v359 = vadd.f32 %v357, %v150
  %v360 = vxor.u32 %v358, 2147483648
  %v361 = vxor.u32 %v359, 2147483648
  %v362 = vmul.f32 %v360, 1.442695
  %v363 = vpow.pop %v362
  %v364 = vmul.f32 %v361, 1.442695
  %v365 = vpow.pop %v364
  %v366 = vadd.f32 %v363, 1.0
  %v367 = vadd.f32 %v365, 1.0
  %v368 = vrcp.pop %v366
  %v369 = vmul.f32 1.0, %v368
  %v370 = vrcp.pop %v367
  %v371 = vmul.f32 1.0, %v370
  %v372 = vmul.f32 %v369, %v284
  %v373 = vmul.f32 %v371, %v271
  %v374 = vadd.f32 %v372, %v373
  %v375 = vtanh.pop %v374
  %v376 = vadd.f32 %v375, %v278
  %s377 = scalar_lea.vmem %s5, 16
  %378 = vst [vmem:[%s377] sm:$0xff] %v376
  %s379 = scalar_lea.vmem %s0, 12
  %v380 = vld [vmem:[%s379] sm:$0xf]
  %v381 = vunpack.c.l.bf16 %v380
  %s382 = scalar_lea.vmem %s1, 36
  %v383 = vld [vmem:[%s382] sm:$0xff]
  %v384 = vld [vmem:[%s382 + $0x8] sm:$0xf]
  %v385 = vunpack.c.l.bf16 %v383
  %v386 = vunpack.c.h.bf16 %v383
  %v387 = vunpack.c.l.bf16 %v384
  %388 = vmatprep.subr.mxu0 %v29
  %389 = vmatpush1.msra.mxu0 %v28
  %390 = vmatprep.subr.mxu0 %v31
  %391 = vmatpush1.msra.mxu0 %v30
  %392 = vmatprep.subr.mxu0 %v33
  %393 = vmatpush1.msra.mxu0 %v32
  %394 = vmatprep.subr.mxu0 %v35
  %395 = vmatpush1.msra.mxu0 %v34
  %396 = vmatprep.subr.mxu0 %v37
  %397 = vmatpush1.msra.mxu0 %v36
  %398 = vmatprep.subr.mxu0 %v39
  %399 = vmatpush1.msra.mxu0 %v38
  %400 = vmatprep.subr.mxu0 %v41
  %401 = vmatpush1.msra.mxu0 %v40
  %402 = vmatprep.subr.mxu0 %v43
  %403 = vmatpush1.msra.mxu0 %v42
  %404 = vmatprep.subr.mxu0 %v45
  %405 = vmatpush1.msra.mxu0 %v44
  %406 = vmatprep.subr.mxu0 %v47
  %407 = vmatpush1.msra.mxu0 %v46
  %408 = vmatprep.subr.mxu0 %v49
  %409 = vmatpush1.msra.mxu0 %v48
  %410 = vmatprep.subr.mxu0 %v51
  %411 = vmatpush1.msra.mxu0 %v50
  %412 = vmatprep.subr.mxu0 %v53
  %413 = vmatpush1.msra.mxu0 %v52
  %414 = vmatprep.subr.mxu0 %v55
  %415 = vmatpush1.msra.mxu0 %v54
  %416 = vmatprep.subr.mxu0 %v57
  %417 = vmatpush1.msra.mxu0 %v56
  %418 = vmatprep.subr.mxu0 %v59
  %419 = vmatpush1.msra.mxu0 %v58
  %420 = vmatprep.subr.mxu0 0.0
  %421 = vmatpush1.msra.mxu0 0.0
  %422 = vmatprep.subr.mxu0 0.0
  %423 = vmatpush1.msra.mxu0 0.0
  %424 = vmatprep.subr.mxu0 0.0
  %425 = vmatpush1.msra.mxu0 0.0
  %426 = vmatprep.subr.mxu0 0.0
  %427 = vmatpush1.msra.mxu0 0.0
  %428 = vmatprep.subr.mxu0 0.0
  %429 = vmatpush1.msra.mxu0 0.0
  %430 = vmatprep.subr.mxu0 0.0
  %431 = vmatpush1.msra.mxu0 0.0
  %432 = vmatprep.subr.mxu0 0.0
  %433 = vmatpush1.msra.mxu0 0.0
  %434 = vmatprep.subr.mxu0 0.0
  %435 = vmatpush1.msra.mxu0 0.0
  %436 = vmatprep.subr.mxu0 0.0
  %437 = vmatpush1.msra.mxu0 0.0
  %438 = vmatprep.subr.mxu0 0.0
  %439 = vmatpush1.msra.mxu0 0.0
  %440 = vmatprep.subr.mxu0 0.0
  %441 = vmatpush1.msra.mxu0 0.0
  %442 = vmatprep.subr.mxu0 0.0
  %443 = vmatpush1.msra.mxu0 0.0
  %444 = vmatprep.subr.mxu0 0.0
  %445 = vmatpush1.msra.mxu0 0.0
  %446 = vmatprep.subr.mxu0 0.0
  %447 = vmatpush1.msra.mxu0 0.0
  %448 = vmatprep.subr.mxu0 0.0
  %449 = vmatpush1.msra.mxu0 0.0
  %450 = vmatprep.subr.mxu0 0.0
  %451 = vmatpush1.msra.mxu0 0.0
  %452 = vmatprep.mubr.f32.mxu0 0.0
  %453 = vmatmul.mubr.f32.gmra.mrb[0].mxu0 %v374
  %v454 = vpop.f32.mrb[0].mxu0
  %v455 = vadd.f32 0.0, %v454
  %v456 = vpop.f32.mrb[0].mxu0
  %v457 = vadd.f32 0.0, %v456
  %458 = vdwg.mxu0
  %v459 = vadd.f32 %v385, %v455
  %v460 = vadd.f32 %v386, %v457
  %v461 = vadd.f32 %v459, %v146
  %v462 = vadd.f32 %v460, %v150
  %v463 = vxor.u32 %v461, 2147483648
  %v464 = vxor.u32 %v462, 2147483648
  %v465 = vmul.f32 %v463, 1.442695
  %v466 = vpow.pop %v465
  %v467 = vmul.f32 %v464, 1.442695
  %v468 = vpow.pop %v467
  %v469 = vadd.f32 %v466, 1.0
  %v470 = vadd.f32 %v468, 1.0
  %v471 = vrcp.pop %v469
  %v472 = vmul.f32 1.0, %v471
  %v473 = vrcp.pop %v470
  %v474 = vmul.f32 1.0, %v473
  %v475 = vmul.f32 %v472, %v387
  %v476 = vmul.f32 %v474, %v374
  %v477 = vadd.f32 %v475, %v476
  %v478 = vtanh.pop %v477
  %v479 = vadd.f32 %v478, %v381
  %s480 = scalar_lea.vmem %s5, 24
  %481 = vst [vmem:[%s480] sm:$0xff] %v479
  %s482 = scalar_lea.vmem %s0, 16
  %v483 = vld [vmem:[%s482] sm:$0xf]
  %v484 = vunpack.c.l.bf16 %v483
  %s485 = scalar_lea.vmem %s1, 48
  %v486 = vld [vmem:[%s485] sm:$0xff]
  %v487 = vld [vmem:[%s485 + $0x8] sm:$0xf]
  %v488 = vunpack.c.l.bf16 %v486
  %v489 = vunpack.c.h.bf16 %v486
  %v490 = vunpack.c.l.bf16 %v487
  %491 = vmatprep.subr.mxu0 %v29
  %492 = vmatpush1.msra.mxu0 %v28
  %493 = vmatprep.subr.mxu0 %v31
  %494 = vmatpush1.msra.mxu0 %v30
  %495 = vmatprep.subr.mxu0 %v33
  %496 = vmatpush1.msra.mxu0 %v32
  %497 = vmatprep.subr.mxu0 %v35
  %498 = vmatpush1.msra.mxu0 %v34
  %499 = vmatprep.subr.mxu0 %v37
  %500 = vmatpush1.msra.mxu0 %v36
  %501 = vmatprep.subr.mxu0 %v39
  %502 = vmatpush1.msra.mxu0 %v38
  %503 = vmatprep.subr.mxu0 %v41
  %504 = vmatpush1.msra.mxu0 %v40
  %505 = vmatprep.subr.mxu0 %v43
  %506 = vmatpush1.msra.mxu0 %v42
  %507 = vmatprep.subr.mxu0 %v45
  %508 = vmatpush1.msra.mxu0 %v44
  %509 = vmatprep.subr.mxu0 %v47
  %510 = vmatpush1.msra.mxu0 %v46
  %511 = vmatprep.subr.mxu0 %v49
  %512 = vmatpush1.msra.mxu0 %v48
  %513 = vmatprep.subr.mxu0 %v51
  %514 = vmatpush1.msra.mxu0 %v50
  %515 = vmatprep.subr.mxu0 %v53
  %516 = vmatpush1.msra.mxu0 %v52
  %517 = vmatprep.subr.mxu0 %v55
  %518 = vmatpush1.msra.mxu0 %v54
  %519 = vmatprep.subr.mxu0 %v57
  %520 = vmatpush1.msra.mxu0 %v56
  %521 = vmatprep.subr.mxu0 %v59
  %522 = vmatpush1.msra.mxu0 %v58
  %523 = vmatprep.subr.mxu0 0.0
  %524 = vmatpush1.msra.mxu0 0.0
  %525 = vmatprep.subr.mxu0 0.0
  %526 = vmatpush1.msra.mxu0 0.0
  %527 = vmatprep.subr.mxu0 0.0
  %528 = vmatpush1.msra.mxu0 0.0
  %529 = vmatprep.subr.mxu0 0.0
  %530 = vmatpush1.msra.mxu0 0.0
  %531 = vmatprep.subr.mxu0 0.0
  %532 = vmatpush1.msra.mxu0 0.0
  %533 = vmatprep.subr.mxu0 0.0
  %534 = vmatpush1.msra.mxu0 0.0
  %535 = vmatprep.subr.mxu0 0.0
  %536 = vmatpush1.msra.mxu0 0.0
  %537 = vmatprep.subr.mxu0 0.0
  %538 = vmatpush1.msra.mxu0 0.0
  %539 = vmatprep.subr.mxu0 0.0
  %540 = vmatpush1.msra.mxu0 0.0
  %541 = vmatprep.subr.mxu0 0.0
  %542 = vmatpush1.msra.mxu0 0.0
  %543 = vmatprep.subr.mxu0 0.0
  %544 = vmatpush1.msra.mxu0 0.0
  %545 = vmatprep.subr.mxu0 0.0
  %546 = vmatpush1.msra.mxu0 0.0
  %547 = vmatprep.subr.mxu0 0.0
  %548 = vmatpush1.msra.mxu0 0.0
  %549 = vmatprep.subr.mxu0 0.0
  %550 = vmatpush1.msra.mxu0 0.0
  %551 = vmatprep.subr.mxu0 0.0
  %552 = vmatpush1.msra.mxu0 0.0
  %553 = vmatprep.subr.mxu0 0.0
  %554 = vmatpush1.msra.mxu0 0.0
  %555 = vmatprep.mubr.f32.mxu0 0.0
  %556 = vmatmul.mubr.f32.gmra.mrb[0].mxu0 %v477
  %v557 = vpop.f32.mrb[0].mxu0
  %v558 = vadd.f32 0.0, %v557
  %v559 = vpop.f32.mrb[0].mxu0
  %v560 = vadd.f32 0.0, %v559
  %561 = vdwg.mxu0
  %v562 = vadd.f32 %v488, %v558
  %v563 = vadd.f32 %v489, %v560
  %v564 = vadd.f32 %v562, %v146
  %v565 = vadd.f32 %v563, %v150
  %v566 = vxor.u32 %v564, 2147483648
  %v567 = vxor.u32 %v565, 2147483648
  %v568 = vmul.f32 %v566, 1.442695
  %v569 = vpow.pop %v568
  %v570 = vmul.f32 %v567, 1.442695
  %v571 = vpow.pop %v570
  %v572 = vadd.f32 %v569, 1.0
  %v573 = vadd.f32 %v571, 1.0
  %v574 = vrcp.pop %v572
  %v575 = vmul.f32 1.0, %v574
  %v576 = vrcp.pop %v573
  %v577 = vmul.f32 1.0, %v576
  %v578 = vmul.f32 %v575, %v490
  %v579 = vmul.f32 %v577, %v477
  %v580 = vadd.f32 %v578, %v579
  %v581 = vtanh.pop %v580
  %v582 = vadd.f32 %v581, %v484
  %s583 = scalar_lea.vmem %s5, 32
  %584 = vst [vmem:[%s583] sm:$0xff] %v582
  %s585 = scalar_lea.vmem %s0, 20
  %v586 = vld [vmem:[%s585] sm:$0xf]
  %v587 = vunpack.c.l.bf16 %v586
  %s588 = scalar_lea.vmem %s1, 60
  %v589 = vld [vmem:[%s588] sm:$0xff]
  %v590 = vld [vmem:[%s588 + $0x8] sm:$0xf]
  %v591 = vunpack.c.l.bf16 %v589
  %v592 = vunpack.c.h.bf16 %v589
  %v593 = vunpack.c.l.bf16 %v590
  %594 = vmatprep.subr.mxu0 %v29
  %595 = vmatpush1.msra.mxu0 %v28
  %596 = vmatprep.subr.mxu0 %v31
  %597 = vmatpush1.msra.mxu0 %v30
  %598 = vmatprep.subr.mxu0 %v33
  %599 = vmatpush1.msra.mxu0 %v32
  %600 = vmatprep.subr.mxu0 %v35
  %601 = vmatpush1.msra.mxu0 %v34
  %602 = vmatprep.subr.mxu0 %v37
  %603 = vmatpush1.msra.mxu0 %v36
  %604 = vmatprep.subr.mxu0 %v39
  %605 = vmatpush1.msra.mxu0 %v38
  %606 = vmatprep.subr.mxu0 %v41
  %607 = vmatpush1.msra.mxu0 %v40
  %608 = vmatprep.subr.mxu0 %v43
  %609 = vmatpush1.msra.mxu0 %v42
  %610 = vmatprep.subr.mxu0 %v45
  %611 = vmatpush1.msra.mxu0 %v44
  %612 = vmatprep.subr.mxu0 %v47
  %613 = vmatpush1.msra.mxu0 %v46
  %614 = vmatprep.subr.mxu0 %v49
  %615 = vmatpush1.msra.mxu0 %v48
  %616 = vmatprep.subr.mxu0 %v51
  %617 = vmatpush1.msra.mxu0 %v50
  %618 = vmatprep.subr.mxu0 %v53
  %619 = vmatpush1.msra.mxu0 %v52
  %620 = vmatprep.subr.mxu0 %v55
  %621 = vmatpush1.msra.mxu0 %v54
  %622 = vmatprep.subr.mxu0 %v57
  %623 = vmatpush1.msra.mxu0 %v56
  %624 = vmatprep.subr.mxu0 %v59
  %625 = vmatpush1.msra.mxu0 %v58
  %626 = vmatprep.subr.mxu0 0.0
  %627 = vmatpush1.msra.mxu0 0.0
  %628 = vmatprep.subr.mxu0 0.0
  %629 = vmatpush1.msra.mxu0 0.0
  %630 = vmatprep.subr.mxu0 0.0
  %631 = vmatpush1.msra.mxu0 0.0
  %632 = vmatprep.subr.mxu0 0.0
  %633 = vmatpush1.msra.mxu0 0.0
  %634 = vmatprep.subr.mxu0 0.0
  %635 = vmatpush1.msra.mxu0 0.0
  %636 = vmatprep.subr.mxu0 0.0
  %637 = vmatpush1.msra.mxu0 0.0
  %638 = vmatprep.subr.mxu0 0.0
  %639 = vmatpush1.msra.mxu0 0.0
  %640 = vmatprep.subr.mxu0 0.0
  %641 = vmatpush1.msra.mxu0 0.0
  %642 = vmatprep.subr.mxu0 0.0
  %643 = vmatpush1.msra.mxu0 0.0
  %644 = vmatprep.subr.mxu0 0.0
  %645 = vmatpush1.msra.mxu0 0.0
  %646 = vmatprep.subr.mxu0 0.0
  %647 = vmatpush1.msra.mxu0 0.0
  %648 = vmatprep.subr.mxu0 0.0
  %649 = vmatpush1.msra.mxu0 0.0
  %650 = vmatprep.subr.mxu0 0.0
  %651 = vmatpush1.msra.mxu0 0.0
  %652 = vmatprep.subr.mxu0 0.0
  %653 = vmatpush1.msra.mxu0 0.0
  %654 = vmatprep.subr.mxu0 0.0
  %655 = vmatpush1.msra.mxu0 0.0
  %656 = vmatprep.subr.mxu0 0.0
  %657 = vmatpush1.msra.mxu0 0.0
  %658 = vmatprep.mubr.f32.mxu0 0.0
  %659 = vmatmul.mubr.f32.gmra.mrb[0].mxu0 %v580
  %v660 = vpop.f32.mrb[0].mxu0
  %v661 = vadd.f32 0.0, %v660
  %v662 = vpop.f32.mrb[0].mxu0
  %v663 = vadd.f32 0.0, %v662
  %664 = vdwg.mxu0
  %v665 = vadd.f32 %v591, %v661
  %v666 = vadd.f32 %v592, %v663
  %v667 = vadd.f32 %v665, %v146
  %v668 = vadd.f32 %v666, %v150
  %v669 = vxor.u32 %v667, 2147483648
  %v670 = vxor.u32 %v668, 2147483648
  %v671 = vmul.f32 %v669, 1.442695
  %v672 = vpow.pop %v671
  %v673 = vmul.f32 %v670, 1.442695
  %v674 = vpow.pop %v673
  %v675 = vadd.f32 %v672, 1.0
  %v676 = vadd.f32 %v674, 1.0
  %v677 = vrcp.pop %v675
  %v678 = vmul.f32 1.0, %v677
  %v679 = vrcp.pop %v676
  %v680 = vmul.f32 1.0, %v679
  %v681 = vmul.f32 %v678, %v593
  %v682 = vmul.f32 %v680, %v580
  %v683 = vadd.f32 %v681, %v682
  %v684 = vtanh.pop %v683
  %v685 = vadd.f32 %v684, %v587
  %s686 = scalar_lea.vmem %s5, 40
  %687 = vst [vmem:[%s686] sm:$0xff] %v685
  %s688 = scalar_lea.vmem %s0, 24
  %v689 = vld [vmem:[%s688] sm:$0xf]
  %v690 = vunpack.c.l.bf16 %v689
  %s691 = scalar_lea.vmem %s1, 72
  %v692 = vld [vmem:[%s691] sm:$0xff]
  %v693 = vld [vmem:[%s691 + $0x8] sm:$0xf]
  %v694 = vunpack.c.l.bf16 %v692
  %v695 = vunpack.c.h.bf16 %v692
  %v696 = vunpack.c.l.bf16 %v693
  %697 = vmatprep.subr.mxu0 %v29
  %698 = vmatpush1.msra.mxu0 %v28
  %699 = vmatprep.subr.mxu0 %v31
  %700 = vmatpush1.msra.mxu0 %v30
  %701 = vmatprep.subr.mxu0 %v33
  %702 = vmatpush1.msra.mxu0 %v32
  %703 = vmatprep.subr.mxu0 %v35
  %704 = vmatpush1.msra.mxu0 %v34
  %705 = vmatprep.subr.mxu0 %v37
  %706 = vmatpush1.msra.mxu0 %v36
  %707 = vmatprep.subr.mxu0 %v39
  %708 = vmatpush1.msra.mxu0 %v38
  %709 = vmatprep.subr.mxu0 %v41
  %710 = vmatpush1.msra.mxu0 %v40
  %711 = vmatprep.subr.mxu0 %v43
  %712 = vmatpush1.msra.mxu0 %v42
  %713 = vmatprep.subr.mxu0 %v45
  %714 = vmatpush1.msra.mxu0 %v44
  %715 = vmatprep.subr.mxu0 %v47
  %716 = vmatpush1.msra.mxu0 %v46
  %717 = vmatprep.subr.mxu0 %v49
  %718 = vmatpush1.msra.mxu0 %v48
  %719 = vmatprep.subr.mxu0 %v51
  %720 = vmatpush1.msra.mxu0 %v50
  %721 = vmatprep.subr.mxu0 %v53
  %722 = vmatpush1.msra.mxu0 %v52
  %723 = vmatprep.subr.mxu0 %v55
  %724 = vmatpush1.msra.mxu0 %v54
  %725 = vmatprep.subr.mxu0 %v57
  %726 = vmatpush1.msra.mxu0 %v56
  %727 = vmatprep.subr.mxu0 %v59
  %728 = vmatpush1.msra.mxu0 %v58
  %729 = vmatprep.subr.mxu0 0.0
  %730 = vmatpush1.msra.mxu0 0.0
  %731 = vmatprep.subr.mxu0 0.0
  %732 = vmatpush1.msra.mxu0 0.0
  %733 = vmatprep.subr.mxu0 0.0
  %734 = vmatpush1.msra.mxu0 0.0
  %735 = vmatprep.subr.mxu0 0.0
  %736 = vmatpush1.msra.mxu0 0.0
  %737 = vmatprep.subr.mxu0 0.0
  %738 = vmatpush1.msra.mxu0 0.0
  %739 = vmatprep.subr.mxu0 0.0
  %740 = vmatpush1.msra.mxu0 0.0
  %741 = vmatprep.subr.mxu0 0.0
  %742 = vmatpush1.msra.mxu0 0.0
  %743 = vmatprep.subr.mxu0 0.0
  %744 = vmatpush1.msra.mxu0 0.0
  %745 = vmatprep.subr.mxu0 0.0
  %746 = vmatpush1.msra.mxu0 0.0
  %747 = vmatprep.subr.mxu0 0.0
  %748 = vmatpush1.msra.mxu0 0.0
  %749 = vmatprep.subr.mxu0 0.0
  %750 = vmatpush1.msra.mxu0 0.0
  %751 = vmatprep.subr.mxu0 0.0
  %752 = vmatpush1.msra.mxu0 0.0
  %753 = vmatprep.subr.mxu0 0.0
  %754 = vmatpush1.msra.mxu0 0.0
  %755 = vmatprep.subr.mxu0 0.0
  %756 = vmatpush1.msra.mxu0 0.0
  %757 = vmatprep.subr.mxu0 0.0
  %758 = vmatpush1.msra.mxu0 0.0
  %759 = vmatprep.subr.mxu0 0.0
  %760 = vmatpush1.msra.mxu0 0.0
  %761 = vmatprep.mubr.f32.mxu0 0.0
  %762 = vmatmul.mubr.f32.gmra.mrb[0].mxu0 %v683
  %v763 = vpop.f32.mrb[0].mxu0
  %v764 = vadd.f32 0.0, %v763
  %v765 = vpop.f32.mrb[0].mxu0
  %v766 = vadd.f32 0.0, %v765
  %767 = vdwg.mxu0
  %v768 = vadd.f32 %v694, %v764
  %v769 = vadd.f32 %v695, %v766
  %v770 = vadd.f32 %v768, %v146
  %v771 = vadd.f32 %v769, %v150
  %v772 = vxor.u32 %v770, 2147483648
  %v773 = vxor.u32 %v771, 2147483648
  %v774 = vmul.f32 %v772, 1.442695
  %v775 = vpow.pop %v774
  %v776 = vmul.f32 %v773, 1.442695
  %v777 = vpow.pop %v776
  %v778 = vadd.f32 %v775, 1.0
  %v779 = vadd.f32 %v777, 1.0
  %v780 = vrcp.pop %v778
  %v781 = vmul.f32 1.0, %v780
  %v782 = vrcp.pop %v779
  %v783 = vmul.f32 1.0, %v782
  %v784 = vmul.f32 %v781, %v696
  %v785 = vmul.f32 %v783, %v683
  %v786 = vadd.f32 %v784, %v785
  %v787 = vtanh.pop %v786
  %v788 = vadd.f32 %v787, %v690
  %s789 = scalar_lea.vmem %s5, 48
  %790 = vst [vmem:[%s789] sm:$0xff] %v788
  %s791 = scalar_lea.vmem %s0, 28
  %v792 = vld [vmem:[%s791] sm:$0xf]
  %v793 = vunpack.c.l.bf16 %v792
  %s794 = scalar_lea.vmem %s1, 84
  %v795 = vld [vmem:[%s794] sm:$0xff]
  %v796 = vld [vmem:[%s794 + $0x8] sm:$0xf]
  %v797 = vunpack.c.l.bf16 %v795
  %v798 = vunpack.c.h.bf16 %v795
  %v799 = vunpack.c.l.bf16 %v796
  %800 = vmatprep.subr.mxu0 %v29
  %801 = vmatpush1.msra.mxu0 %v28
  %802 = vmatprep.subr.mxu0 %v31
  %803 = vmatpush1.msra.mxu0 %v30
  %804 = vmatprep.subr.mxu0 %v33
  %805 = vmatpush1.msra.mxu0 %v32
  %806 = vmatprep.subr.mxu0 %v35
  %807 = vmatpush1.msra.mxu0 %v34
  %808 = vmatprep.subr.mxu0 %v37
  %809 = vmatpush1.msra.mxu0 %v36
  %810 = vmatprep.subr.mxu0 %v39
  %811 = vmatpush1.msra.mxu0 %v38
  %812 = vmatprep.subr.mxu0 %v41
  %813 = vmatpush1.msra.mxu0 %v40
  %814 = vmatprep.subr.mxu0 %v43
  %815 = vmatpush1.msra.mxu0 %v42
  %816 = vmatprep.subr.mxu0 %v45
  %817 = vmatpush1.msra.mxu0 %v44
  %818 = vmatprep.subr.mxu0 %v47
  %819 = vmatpush1.msra.mxu0 %v46
  %820 = vmatprep.subr.mxu0 %v49
  %821 = vmatpush1.msra.mxu0 %v48
  %822 = vmatprep.subr.mxu0 %v51
  %823 = vmatpush1.msra.mxu0 %v50
  %824 = vmatprep.subr.mxu0 %v53
  %825 = vmatpush1.msra.mxu0 %v52
  %826 = vmatprep.subr.mxu0 %v55
  %827 = vmatpush1.msra.mxu0 %v54
  %828 = vmatprep.subr.mxu0 %v57
  %829 = vmatpush1.msra.mxu0 %v56
  %830 = vmatprep.subr.mxu0 %v59
  %831 = vmatpush1.msra.mxu0 %v58
  %832 = vmatprep.subr.mxu0 0.0
  %833 = vmatpush1.msra.mxu0 0.0
  %834 = vmatprep.subr.mxu0 0.0
  %835 = vmatpush1.msra.mxu0 0.0
  %836 = vmatprep.subr.mxu0 0.0
  %837 = vmatpush1.msra.mxu0 0.0
  %838 = vmatprep.subr.mxu0 0.0
  %839 = vmatpush1.msra.mxu0 0.0
  %840 = vmatprep.subr.mxu0 0.0
  %841 = vmatpush1.msra.mxu0 0.0
  %842 = vmatprep.subr.mxu0 0.0
  %843 = vmatpush1.msra.mxu0 0.0
  %844 = vmatprep.subr.mxu0 0.0
  %845 = vmatpush1.msra.mxu0 0.0
  %846 = vmatprep.subr.mxu0 0.0
  %847 = vmatpush1.msra.mxu0 0.0
  %848 = vmatprep.subr.mxu0 0.0
  %849 = vmatpush1.msra.mxu0 0.0
  %850 = vmatprep.subr.mxu0 0.0
  %851 = vmatpush1.msra.mxu0 0.0
  %852 = vmatprep.subr.mxu0 0.0
  %853 = vmatpush1.msra.mxu0 0.0
  %854 = vmatprep.subr.mxu0 0.0
  %855 = vmatpush1.msra.mxu0 0.0
  %856 = vmatprep.subr.mxu0 0.0
  %857 = vmatpush1.msra.mxu0 0.0
  %858 = vmatprep.subr.mxu0 0.0
  %859 = vmatpush1.msra.mxu0 0.0
  %860 = vmatprep.subr.mxu0 0.0
  %861 = vmatpush1.msra.mxu0 0.0
  %862 = vmatprep.subr.mxu0 0.0
  %863 = vmatpush1.msra.mxu0 0.0
  %864 = vmatprep.mubr.f32.mxu0 0.0
  %865 = vmatmul.mubr.f32.gmra.mrb[0].mxu0 %v786
  %v866 = vpop.f32.mrb[0].mxu0
  %v867 = vadd.f32 0.0, %v866
  %v868 = vpop.f32.mrb[0].mxu0
  %v869 = vadd.f32 0.0, %v868
  %870 = vdwg.mxu0
  %v871 = vadd.f32 %v797, %v867
  %v872 = vadd.f32 %v798, %v869
  %v873 = vadd.f32 %v871, %v146
  %v874 = vadd.f32 %v872, %v150
  %v875 = vxor.u32 %v873, 2147483648
  %v876 = vxor.u32 %v874, 2147483648
  %v877 = vmul.f32 %v875, 1.442695
  %v878 = vpow.pop %v877
  %v879 = vmul.f32 %v876, 1.442695
  %v880 = vpow.pop %v879
  %v881 = vadd.f32 %v878, 1.0
  %v882 = vadd.f32 %v880, 1.0
  %v883 = vrcp.pop %v881
  %v884 = vmul.f32 1.0, %v883
  %v885 = vrcp.pop %v882
  %v886 = vmul.f32 1.0, %v885
  %v887 = vmul.f32 %v884, %v799
  %v888 = vmul.f32 %v886, %v786
  %v889 = vadd.f32 %v887, %v888
  %v890 = vtanh.pop %v889
  %v891 = vadd.f32 %v890, %v793
  %s892 = scalar_lea.vmem %s5, 56
  %893 = vst [vmem:[%s892] sm:$0xff] %v891
  %894 = vst [vmem:[#allocation2] sm:$0xff] %v889
  // Predicated region
  $region26: #{encoder_forward.4} parent=0 // pred_check
    %p895 = pneg %p22
  $region27: #{encoder_forward.4} parent=0 // pred_check_branch
    %897 = sbr.rel (%p895) target = $region29
  $region28: #{encoder_forward.4} parent=0 // pred_region
    %898 = vst [vmem:[%s6] sm:$0xff] %v889
  $region29: #{encoder_forward.4} parent=0 // pred_fallthru
    _
  // Predicated region
  $region30: #{encoder_forward.4} parent=0 // pred_check
    _
  $region31: #{encoder_forward.4} parent=0 // pred_check_branch
    %900 = sbr.rel (0) target = $region33
  $region32: #{encoder_forward.4} parent=0 // pred_region
    _
  $region33: #{encoder_forward.4} parent=0 // pred_fallthru
    _
  // Predicated region
  $region34: #{encoder_forward.4} parent=0 // pred_check
    _
  $region35: #{encoder_forward.4} parent=0 // pred_check_branch
    %902 = sbr.rel (0) target = $region37
  $region36: #{encoder_forward.4} parent=0 // pred_region
    _
  $region37: #{encoder_forward.4} parent=0 // pred_fallthru
    _
  // Predicated region
  $region38: #{encoder_forward.4} parent=0 // pred_check
    _
  $region39: #{encoder_forward.4} parent=0 // pred_check_branch
    %904 = sbr.rel (0) target = $region41
  $region40: #{encoder_forward.4} parent=0 // pred_region
    _
  $region41: #{encoder_forward.4} parent=0 // pred_fallthru
    _
  // Predicated region
  $region42: #{encoder_forward.4} parent=0 // pred_check
    _
  $region43: #{encoder_forward.4} parent=0 // pred_check_branch
    %906 = sbr.rel (0) target = $region45
  $region44: #{encoder_forward.4} parent=0 // pred_region
    _
  $region45: #{encoder_forward.4} parent=0 // pred_fallthru
    _

// kernel: encoder_forward.7
$region0: #{encoder_forward.7}
  #allocation0 [shape = 'u32[]', space=smem, size = 0x4, offset = 0x4, fixed_abs, tag = 'smem constant byte address 0x4 - core index']
  #allocation1 [shape = 'u32[144,128]{1,0:T(1,128)}', space=vmem, size = 0x12000, scoped, tag = 'internal scratch']
  #allocation2 [shape = 'f32[8,128]{1,0:T(8,128)}', space=vmem, size = 0x1000, scoped, tag = 'scratch operand']
  %s0 = inlined_call_operand.vmem [shape: bf16[8,8,128], index: 0, kind: input, shape index: {}]
  %s1 = inlined_call_operand.vmem [shape: bf16[8,8,384], index: 1, kind: input, shape index: {}]
  %s2 = inlined_call_operand.vmem [shape: f32[8,128], index: 2, kind: input, shape index: {}]
  %s3 = inlined_call_operand.vmem [shape: f32[128,256], index: 3, kind: input, shape index: {}]
  %s4 = inlined_call_operand.vmem [shape: f32[1,256], index: 4, kind: input, shape index: {}]
  %s5 = inlined_call_operand.hbm [shape: f32[8,8,128], index: 5, kind: output, shape index: {0}]
  %s6 = inlined_call_operand.hbm [shape: f32[8,128], index: 6, kind: output, shape index: {1}]
  %7 = xla_tuple %s5, %s6
  %s8 = sld [smem:[#allocation0]]
  $region46: #{encoder_forward.7} parent=0
    _
  %s10 = ssub.s32 1, %s8
  %s11 = scalar_select 0, %s10, %s8
  $region1: #{encoder_forward.7} parent=0
    #allocation3 [shape = 'u8[32768]{0}', space=vmem, size = 0x8000, scoped, tag = 'output window, operand 0, single buffered']
    #allocation4 [shape = 's32[1]{0}', space=sflag, size = 0x4, scoped, tag = 'scoped memory for encoder_forward.7']
    #allocation5 [shape = 'u8[4096]{0}', space=vmem, size = 0x1000, scoped, tag = 'output window, operand 1, single buffered']
    #allocation6 [shape = 's32[1]{0}', space=sflag, size = 0x4, scoped, tag = 'scoped memory for encoder_forward.7']
    %12 = vsyncpa [#allocation4], 0
    %13 = vsyncpa [#allocation6], 0
    // Predicated region
    $region2: #{encoder_forward.7} parent=1 // pred_check
      _
    $region3: #{encoder_forward.7} parent=1 // pred_check_branch
      %15 = sbr.rel (0) target = $region5
    $region4: #{encoder_forward.7} parent=1 // pred_region
      %s16 = ssub.s32 0, 0
      %s17 = smul.u32 8, %s16
      %p18 = scmp.lt.s32.totalorder %s17, 7
      %s19 = scalar_select %p18, %s17, 7
      %s20 = smul.addr %s19, 4
      %s21 = scalar_lea.vmem %s0, %s20
      %s22 = ssub.s32 0, 0
      %s23 = smul.u32 8, %s22
    $region5: #{encoder_forward.7} parent=1 // pred_fallthru
      _
    // Predicated region
    $region6: #{encoder_forward.7} parent=1 // pred_check
      _
    $region7: #{encoder_forward.7} parent=1 // pred_check_branch
      %25 = sbr.rel (0) target = $region9
    $region8: #{encoder_forward.7} parent=1 // pred_region
      %s26 = ssub.s32 0, 0
      %s27 = smul.u32 8, %s26
      %p28 = scmp.lt.s32.totalorder %s27, 7
      %s29 = scalar_select %p28, %s27, 7
      %s30 = smul.addr %s29, 3
      %s31 = smul.addr %s30, 4
      %s32 = scalar_lea.vmem %s1, %s31
      %s33 = ssub.s32 0, 0
      %s34 = smul.u32 8, %s33
    $region9: #{encoder_forward.7} parent=1 // pred_fallthru
      _
    // Predicated region
    $region10: #{encoder_forward.7} parent=1 // pred_check
      _
    $region11: #{encoder_forward.7} parent=1 // pred_check_branch
      %36 = sbr.rel (0) target = $region13
    $region12: #{encoder_forward.7} parent=1 // pred_region
      _
    $region13: #{encoder_forward.7} parent=1 // pred_fallthru
      _
    // Predicated region
    $region14: #{encoder_forward.7} parent=1 // pred_check
      _
    $region15: #{encoder_forward.7} parent=1 // pred_check_branch
      %38 = sbr.rel (0) target = $region17
    $region16: #{encoder_forward.7} parent=1 // pred_region
      _
    $region17: #{encoder_forward.7} parent=1 // pred_fallthru
      _
    // Predicated region
    $region18: #{encoder_forward.7} parent=1 // pred_check
      _
    $region19: #{encoder_forward.7} parent=1 // pred_check_branch
      %40 = sbr.rel (0) target = $region21
    $region20: #{encoder_forward.7} parent=1 // pred_region
      _
    $region21: #{encoder_forward.7} parent=1 // pred_fallthru
      _
    %s41 = ssub.s32 0, 0
    %s42 = smul.u32 8, %s41
    %p43 = scmp.lt.s32.totalorder %s42, 7
    %s44 = scalar_select %p43, %s42, 7
    %s45 = smul.addr %s44, 4
    %s46 = scalar_lea.vmem %s0, %s45
    %s47 = ssub.s32 0, 0
    %s48 = smul.u32 8, %s47
    %p49 = scmp.lt.s32.totalorder %s48, 7
    %s50 = scalar_select %p49, %s48, 7
    %s51 = smul.addr %s50, 3
    %s52 = smul.addr %s51, 4
    %s53 = scalar_lea.vmem %s1, %s52
    %s54 = ssub.s32 0, 0
    %s55 = smul.u32 8, %s54
    %p56 = scmp.lt.s32.totalorder %s55, 7
    %s57 = scalar_select %p56, %s55, 7
    %s58 = smul.addr %s57, 4
    %s59 = scalar_lea.vmem %s0, %s58
    %s60 = ssub.s32 0, 0
    %s61 = smul.u32 8, %s60
    %s62 = ssub.s32 0, 0
    %s63 = smul.u32 8, %s62
    %p64 = scmp.lt.s32.totalorder %s63, 7
    %s65 = scalar_select %p64, %s63, 7
    %s66 = smul.addr %s65, 3
    %s67 = smul.addr %s66, 4
    %s68 = scalar_lea.vmem %s1, %s67
    %s69 = ssub.s32 0, 0
    %s70 = smul.u32 8, %s69
    %s71 = ssub.s32 0, 0
    %s72 = smul.u32 8, %s71
    %p73 = scmp.eq.s32.totalorder 0, 0
    // Predicated region
    $region22: #{encoder_forward.7} parent=1 // pred_check
      %p74 = pneg %p73
    $region23: #{encoder_forward.7} parent=1 // pred_check_branch
      %76 = sbr.rel (%p74) target = $region25
    $region24: #{encoder_forward.7} parent=1 // pred_region
      %v77 = vld [vmem:[%s2] sm:$0xff]
      %78 = vst [vmem:[#allocation2] sm:$0xff] %v77
    $region25: #{encoder_forward.7} parent=1 // pred_fallthru
      _
    %v79 = vld [vmem:[%s3] sm:$0xff]
    %v80 = vld [vmem:[%s3 + $0x8] sm:$0xff]
    %v81 = vld [vmem:[%s3 + $0x10] sm:$0xff]
    %v82 = vld [vmem:[%s3 + $0x18] sm:$0xff]
    %v83 = vld [vmem:[%s3 + $0x20] sm:$0xff]
    %v84 = vld [vmem:[%s3 + $0x28] sm:$0xff]
    %v85 = vld [vmem:[%s3 + $0x30] sm:$0xff]
    %v86 = vld [vmem:[%s3 + $0x38] sm:$0xff]
    %v87 = vld [vmem:[%s3 + $0x40] sm:$0xff]
    %v88 = vld [vmem:[%s3 + $0x48] sm:$0xff]
    %v89 = vld [vmem:[%s3 + $0x50] sm:$0xff]
    %v90 = vld [vmem:[%s3 + $0x58] sm:$0xff]
    %v91 = vld [vmem:[%s3 + $0x60] sm:$0xff]
    %v92 = vld [vmem:[%s3 + $0x68] sm:$0xff]
    %v93 = vld [vmem:[%s3 + $0x70] sm:$0xff]
    %v94 = vld [vmem:[%s3 + $0x78] sm:$0xff]
    %v95 = vld [vmem:[%s3 + $0x80] sm:$0xff]
    %v96 = vld [vmem:[%s3 + $0x88] sm:$0xff]
    %v97 = vld [vmem:[%s3 + $0x90] sm:$0xff]
    %v98 = vld [vmem:[%s3 + $0x98] sm:$0xff]
    %v99 = vld [vmem:[%s3 + $0xa0] sm:$0xff]
    %v100 = vld [vmem:[%s3 + $0xa8] sm:$0xff]
    %v101 = vld [vmem:[%s3 + $0xb0] sm:$0xff]
    %v102 = vld [vmem:[%s3 + $0xb8] sm:$0xff]
    %v103 = vld [vmem:[%s3 + $0xc0] sm:$0xff]
    %v104 = vld [vmem:[%s3 + $0xc8] sm:$0xff]
    %v105 = vld [vmem:[%s3 + $0xd0] sm:$0xff]
    %v106 = vld [vmem:[%s3 + $0xd8] sm:$0xff]
    %v107 = vld [vmem:[%s3 + $0xe0] sm:$0xff]
    %v108 = vld [vmem:[%s3 + $0xe8] sm:$0xff]
    %v109 = vld [vmem:[%s3 + $0xf0] sm:$0xff]
    %v110 = vld [vmem:[%s3 + $0xf8] sm:$0xff]
    %v111 = vld [vmem:[%s4] sm:$0x3]
    %v112 = vld [vmem:[#allocation2] sm:$0xff]
    %s113 = scalar_lea.vmem %s59, 28
    %v114 = vld [vmem:[%s113] sm:$0xf]
    %v115 = vunpack.c.l.bf16 %v114
    %s116 = scalar_lea.vmem %s68, 84
    %v117 = vld [vmem:[%s116] sm:$0xff]
    %v118 = vld [vmem:[%s116 + $0x8] sm:$0xf]
    %v119 = vunpack.c.l.bf16 %v117
    %v120 = vunpack.c.h.bf16 %v117
    %v121 = vunpack.c.l.bf16 %v118
    %122 = vmatprep.subr.mxu0 %v80
    %123 = vmatpush1.msra.mxu0 %v79
    %124 = vmatprep.subr.mxu0 %v82
    %125 = vmatpush1.msra.mxu0 %v81
    %126 = vmatprep.subr.mxu0 %v84
    %127 = vmatpush1.msra.mxu0 %v83
    %128 = vmatprep.subr.mxu0 %v86
    %129 = vmatpush1.msra.mxu0 %v85
    %130 = vmatprep.subr.mxu0 %v88
    %131 = vmatpush1.msra.mxu0 %v87
    %132 = vmatprep.subr.mxu0 %v90
    %133 = vmatpush1.msra.mxu0 %v89
    %134 = vmatprep.subr.mxu0 %v92
    %135 = vmatpush1.msra.mxu0 %v91
    %136 = vmatprep.subr.mxu0 %v94
    %137 = vmatpush1.msra.mxu0 %v93
    %138 = vmatprep.subr.mxu0 %v96
    %139 = vmatpush1.msra.mxu0 %v95
    %140 = vmatprep.subr.mxu0 %v98
    %141 = vmatpush1.msra.mxu0 %v97
    %142 = vmatprep.subr.mxu0 %v100
    %143 = vmatpush1.msra.mxu0 %v99
    %144 = vmatprep.subr.mxu0 %v102
    %145 = vmatpush1.msra.mxu0 %v101
    %146 = vmatprep.subr.mxu0 %v104
    %147 = vmatpush1.msra.mxu0 %v103
    %148 = vmatprep.subr.mxu0 %v106
    %149 = vmatpush1.msra.mxu0 %v105
    %150 = vmatprep.subr.mxu0 %v108
    %151 = vmatpush1.msra.mxu0 %v107
    %152 = vmatprep.subr.mxu0 %v110
    %153 = vmatpush1.msra.mxu0 %v109
    %154 = vmatprep.subr.mxu0 0.0
    %155 = vmatpush1.msra.mxu0 0.0
    %156 = vmatprep.subr.mxu0 0.0
    %157 = vmatpush1.msra.mxu0 0.0
    %158 = vmatprep.subr.mxu0 0.0
    %159 = vmatpush1.msra.mxu0 0.0
    %160 = vmatprep.subr.mxu0 0.0
    %161 = vmatpush1.msra.mxu0 0.0
    %162 = vmatprep.subr.mxu0 0.0
    %163 = vmatpush1.msra.mxu0 0.0
    %164 = vmatprep.subr.mxu0 0.0
    %165 = vmatpush1.msra.mxu0 0.0
    %166 = vmatprep.subr.mxu0 0.0
    %167 = vmatpush1.msra.mxu0 0.0
    %168 = vmatprep.subr.mxu0 0.0
    %169 = vmatpush1.msra.mxu0 0.0
    %170 = vmatprep.subr.mxu0 0.0
    %171 = vmatpush1.msra.mxu0 0.0
    %172 = vmatprep.subr.mxu0 0.0
    %173 = vmatpush1.msra.mxu0 0.0
    %174 = vmatprep.subr.mxu0 0.0
    %175 = vmatpush1.msra.mxu0 0.0
    %176 = vmatprep.subr.mxu0 0.0
    %177 = vmatpush1.msra.mxu0 0.0
    %178 = vmatprep.subr.mxu0 0.0
    %179 = vmatpush1.msra.mxu0 0.0
    %180 = vmatprep.subr.mxu0 0.0
    %181 = vmatpush1.msra.mxu0 0.0
    %182 = vmatprep.subr.mxu0 0.0
    %183 = vmatpush1.msra.mxu0 0.0
    %184 = vmatprep.subr.mxu0 0.0
    %185 = vmatpush1.msra.mxu0 0.0
    %186 = vmatprep.mubr.f32.mxu0 0.0
    %187 = vmatmul.mubr.f32.gmra.mrb[0].mxu0 %v112
    %v188 = vpop.f32.mrb[0].mxu0
    %v189 = vadd.f32 0.0, %v188
    %v190 = vpop.f32.mrb[0].mxu0
    %v191 = vadd.f32 0.0, %v190
    %192 = vdwg.mxu0
    %v193 = vadd.f32 %v119, %v189
    %v194 = vadd.f32 %v120, %v191
    %v196 = vlaneseq
    %v197 = vshrl.u32 %v196, 7
    %v198 = vsub.s32 0, %v197
    %v199 = vrot.slane %v111, %v198
    %v200 = vlaneseq
    %v201 = vshrl.u32 %v200, 7
    %v202 = vsub.s32 1, %v201
    %v203 = vrot.slane %v111, %v202
    %v206 = vadd.f32 %v193, %v199
    %v207 = vadd.f32 %v194, %v203
    %v208 = vxor.u32 %v206, 2147483648
    %v209 = vxor.u32 %v207, 2147483648
    %v210 = vmul.f32 %v208, 1.442695
    %v211 = vpow.pop %v210
    %v212 = vmul.f32 %v209, 1.442695
    %v213 = vpow.pop %v212
    %v214 = vadd.f32 %v211, 1.0
    %v215 = vadd.f32 %v213, 1.0
    %v216 = vrcp.pop %v214
    %v217 = vmul.f32 1.0, %v216
    %v218 = vrcp.pop %v215
    %v219 = vmul.f32 1.0, %v218
    %v220 = vmul.f32 %v217, %v121
    %v221 = vmul.f32 %v219, %v112
    %v222 = vadd.f32 %v220, %v221
    %v223 = vtanh.pop %v222
    %v224 = vadd.f32 %v223, %v115
    %s225 = scalar_lea.vmem [#allocation3], 56
    %226 = vst [vmem:[%s225] sm:$0xff] %v224
    %s227 = scalar_lea.vmem %s59, 24
    %v228 = vld [vmem:[%s227] sm:$0xf]
    %v229 = vunpack.c.l.bf16 %v228
    %s230 = scalar_lea.vmem %s68, 72
    %v231 = vld [vmem:[%s230] sm:$0xff]
    %v232 = vld [vmem:[%s230 + $0x8] sm:$0xf]
    %v233 = vunpack.c.l.bf16 %v231
    %v234 = vunpack.c.h.bf16 %v231
    %v235 = vunpack.c.l.bf16 %v232
    %236 = vmatprep.subr.mxu0 %v80
    %237 = vmatpush1.msra.mxu0 %v79
    %238 = vmatprep.subr.mxu0 %v82
    %239 = vmatpush1.msra.mxu0 %v81
    %240 = vmatprep.subr.mxu0 %v84
    %241 = vmatpush1.msra.mxu0 %v83
    %242 = vmatprep.subr.mxu0 %v86
    %243 = vmatpush1.msra.mxu0 %v85
    %244 = vmatprep.subr.mxu0 %v88
    %245 = vmatpush1.msra.mxu0 %v87
    %246 = vmatprep.subr.mxu0 %v90
    %247 = vmatpush1.msra.mxu0 %v89
    %248 = vmatprep.subr.mxu0 %v92
    %249 = vmatpush1.msra.mxu0 %v91
    %250 = vmatprep.subr.mxu0 %v94
    %251 = vmatpush1.msra.mxu0 %v93
    %252 = vmatprep.subr.mxu0 %v96
    %253 = vmatpush1.msra.mxu0 %v95
    %254 = vmatprep.subr.mxu0 %v98
    %255 = vmatpush1.msra.mxu0 %v97
    %256 = vmatprep.subr.mxu0 %v100
    %257 = vmatpush1.msra.mxu0 %v99
    %258 = vmatprep.subr.mxu0 %v102
    %259 = vmatpush1.msra.mxu0 %v101
    %260 = vmatprep.subr.mxu0 %v104
    %261 = vmatpush1.msra.mxu0 %v103
    %262 = vmatprep.subr.mxu0 %v106
    %263 = vmatpush1.msra.mxu0 %v105
    %264 = vmatprep.subr.mxu0 %v108
    %265 = vmatpush1.msra.mxu0 %v107
    %266 = vmatprep.subr.mxu0 %v110
    %267 = vmatpush1.msra.mxu0 %v109
    %268 = vmatprep.subr.mxu0 0.0
    %269 = vmatpush1.msra.mxu0 0.0
    %270 = vmatprep.subr.mxu0 0.0
    %271 = vmatpush1.msra.mxu0 0.0
    %272 = vmatprep.subr.mxu0 0.0
    %273 = vmatpush1.msra.mxu0 0.0
    %274 = vmatprep.subr.mxu0 0.0
    %275 = vmatpush1.msra.mxu0 0.0
    %276 = vmatprep.subr.mxu0 0.0
    %277 = vmatpush1.msra.mxu0 0.0
    %278 = vmatprep.subr.mxu0 0.0
    %279 = vmatpush1.msra.mxu0 0.0
    %280 = vmatprep.subr.mxu0 0.0
    %281 = vmatpush1.msra.mxu0 0.0
    %282 = vmatprep.subr.mxu0 0.0
    %283 = vmatpush1.msra.mxu0 0.0
    %284 = vmatprep.subr.mxu0 0.0
    %285 = vmatpush1.msra.mxu0 0.0
    %286 = vmatprep.subr.mxu0 0.0
    %287 = vmatpush1.msra.mxu0 0.0
    %288 = vmatprep.subr.mxu0 0.0
    %289 = vmatpush1.msra.mxu0 0.0
    %290 = vmatprep.subr.mxu0 0.0
    %291 = vmatpush1.msra.mxu0 0.0
    %292 = vmatprep.subr.mxu0 0.0
    %293 = vmatpush1.msra.mxu0 0.0
    %294 = vmatprep.subr.mxu0 0.0
    %295 = vmatpush1.msra.mxu0 0.0
    %296 = vmatprep.subr.mxu0 0.0
    %297 = vmatpush1.msra.mxu0 0.0
    %298 = vmatprep.subr.mxu0 0.0
    %299 = vmatpush1.msra.mxu0 0.0
    %300 = vmatprep.mubr.f32.mxu0 0.0
    %301 = vmatmul.mubr.f32.gmra.mrb[0].mxu0 %v222
    %v302 = vpop.f32.mrb[0].mxu0
    %v303 = vadd.f32 0.0, %v302
    %v304 = vpop.f32.mrb[0].mxu0
    %v305 = vadd.f32 0.0, %v304
    %306 = vdwg.mxu0
    %v307 = vadd.f32 %v233, %v303
    %v308 = vadd.f32 %v234, %v305
    %v309 = vadd.f32 %v307, %v199
    %v310 = vadd.f32 %v308, %v203
    %v311 = vxor.u32 %v309, 2147483648
    %v312 = vxor.u32 %v310, 2147483648
    %v313 = vmul.f32 %v311, 1.442695
    %v314 = vpow.pop %v313
    %v315 = vmul.f32 %v312, 1.442695
    %v316 = vpow.pop %v315
    %v317 = vadd.f32 %v314, 1.0
    %v318 = vadd.f32 %v316, 1.0
    %v319 = vrcp.pop %v317
    %v320 = vmul.f32 1.0, %v319
    %v321 = vrcp.pop %v318
    %v322 = vmul.f32 1.0, %v321
    %v323 = vmul.f32 %v320, %v235
    %v324 = vmul.f32 %v322, %v222
    %v325 = vadd.f32 %v323, %v324
    %v326 = vtanh.pop %v325
    %v327 = vadd.f32 %v326, %v229
    %s328 = scalar_lea.vmem [#allocation3], 48
    %329 = vst [vmem:[%s328] sm:$0xff] %v327
    %s330 = scalar_lea.vmem %s59, 20
    %v331 = vld [vmem:[%s330] sm:$0xf]
    %v332 = vunpack.c.l.bf16 %v331
    %s333 = scalar_lea.vmem %s68, 60
    %v334 = vld [vmem:[%s333] sm:$0xff]
    %v335 = vld [vmem:[%s333 + $0x8] sm:$0xf]
    %v336 = vunpack.c.l.bf16 %v334
    %v337 = vunpack.c.h.bf16 %v334
    %v338 = vunpack.c.l.bf16 %v335
    %339 = vmatprep.subr.mxu0 %v80
    %340 = vmatpush1.msra.mxu0 %v79
    %341 = vmatprep.subr.mxu0 %v82
    %342 = vmatpush1.msra.mxu0 %v81
    %343 = vmatprep.subr.mxu0 %v84
    %344 = vmatpush1.msra.mxu0 %v83
    %345 = vmatprep.subr.mxu0 %v86
    %346 = vmatpush1.msra.mxu0 %v85
    %347 = vmatprep.subr.mxu0 %v88
    %348 = vmatpush1.msra.mxu0 %v87
    %349 = vmatprep.subr.mxu0 %v90
    %350 = vmatpush1.msra.mxu0 %v89
    %351 = vmatprep.subr.mxu0 %v92
    %352 = vmatpush1.msra.mxu0 %v91
    %353 = vmatprep.subr.mxu0 %v94
    %354 = vmatpush1.msra.mxu0 %v93
    %355 = vmatprep.subr.mxu0 %v96
    %356 = vmatpush1.msra.mxu0 %v95
    %357 = vmatprep.subr.mxu0 %v98
    %358 = vmatpush1.msra.mxu0 %v97
    %359 = vmatprep.subr.mxu0 %v100
    %360 = vmatpush1.msra.mxu0 %v99
    %361 = vmatprep.subr.mxu0 %v102
    %362 = vmatpush1.msra.mxu0 %v101
    %363 = vmatprep.subr.mxu0 %v104
    %364 = vmatpush1.msra.mxu0 %v103
    %365 = vmatprep.subr.mxu0 %v106
    %366 = vmatpush1.msra.mxu0 %v105
    %367 = vmatprep.subr.mxu0 %v108
    %368 = vmatpush1.msra.mxu0 %v107
    %369 = vmatprep.subr.mxu0 %v110
    %370 = vmatpush1.msra.mxu0 %v109
    %371 = vmatprep.subr.mxu0 0.0
    %372 = vmatpush1.msra.mxu0 0.0
    %373 = vmatprep.subr.mxu0 0.0
    %374 = vmatpush1.msra.mxu0 0.0
    %375 = vmatprep.subr.mxu0 0.0
    %376 = vmatpush1.msra.mxu0 0.0
    %377 = vmatprep.subr.mxu0 0.0
    %378 = vmatpush1.msra.mxu0 0.0
    %379 = vmatprep.subr.mxu0 0.0
    %380 = vmatpush1.msra.mxu0 0.0
    %381 = vmatprep.subr.mxu0 0.0
    %382 = vmatpush1.msra.mxu0 0.0
    %383 = vmatprep.subr.mxu0 0.0
    %384 = vmatpush1.msra.mxu0 0.0
    %385 = vmatprep.subr.mxu0 0.0
    %386 = vmatpush1.msra.mxu0 0.0
    %387 = vmatprep.subr.mxu0 0.0
    %388 = vmatpush1.msra.mxu0 0.0
    %389 = vmatprep.subr.mxu0 0.0
    %390 = vmatpush1.msra.mxu0 0.0
    %391 = vmatprep.subr.mxu0 0.0
    %392 = vmatpush1.msra.mxu0 0.0
    %393 = vmatprep.subr.mxu0 0.0
    %394 = vmatpush1.msra.mxu0 0.0
    %395 = vmatprep.subr.mxu0 0.0
    %396 = vmatpush1.msra.mxu0 0.0
    %397 = vmatprep.subr.mxu0 0.0
    %398 = vmatpush1.msra.mxu0 0.0
    %399 = vmatprep.subr.mxu0 0.0
    %400 = vmatpush1.msra.mxu0 0.0
    %401 = vmatprep.subr.mxu0 0.0
    %402 = vmatpush1.msra.mxu0 0.0
    %403 = vmatprep.mubr.f32.mxu0 0.0
    %404 = vmatmul.mubr.f32.gmra.mrb[0].mxu0 %v325
    %v405 = vpop.f32.mrb[0].mxu0
    %v406 = vadd.f32 0.0, %v405
    %v407 = vpop.f32.mrb[0].mxu0
    %v408 = vadd.f32 0.0, %v407
    %409 = vdwg.mxu0
    %v410 = vadd.f32 %v336, %v406
    %v411 = vadd.f32 %v337, %v408
    %v412 = vadd.f32 %v410, %v199
    %v413 = vadd.f32 %v411, %v203
    %v414 = vxor.u32 %v412, 2147483648
    %v415 = vxor.u32 %v413, 2147483648
    %v416 = vmul.f32 %v414, 1.442695
    %v417 = vpow.pop %v416
    %v418 = vmul.f32 %v415, 1.442695
    %v419 = vpow.pop %v418
    %v420 = vadd.f32 %v417, 1.0
    %v421 = vadd.f32 %v419, 1.0
    %v422 = vrcp.pop %v420
    %v423 = vmul.f32 1.0, %v422
    %v424 = vrcp.pop %v421
    %v425 = vmul.f32 1.0, %v424
    %v426 = vmul.f32 %v423, %v338
    %v427 = vmul.f32 %v425, %v325
    %v428 = vadd.f32 %v426, %v427
    %v429 = vtanh.pop %v428
    %v430 = vadd.f32 %v429, %v332
    %s431 = scalar_lea.vmem [#allocation3], 40
    %432 = vst [vmem:[%s431] sm:$0xff] %v430
    %s433 = scalar_lea.vmem %s59, 16
    %v434 = vld [vmem:[%s433] sm:$0xf]
    %v435 = vunpack.c.l.bf16 %v434
    %s436 = scalar_lea.vmem %s68, 48
    %v437 = vld [vmem:[%s436] sm:$0xff]
    %v438 = vld [vmem:[%s436 + $0x8] sm:$0xf]
    %v439 = vunpack.c.l.bf16 %v437
    %v440 = vunpack.c.h.bf16 %v437
    %v441 = vunpack.c.l.bf16 %v438
    %442 = vmatprep.subr.mxu0 %v80
    %443 = vmatpush1.msra.mxu0 %v79
    %444 = vmatprep.subr.mxu0 %v82
    %445 = vmatpush1.msra.mxu0 %v81
    %446 = vmatprep.subr.mxu0 %v84
    %447 = vmatpush1.msra.mxu0 %v83
    %448 = vmatprep.subr.mxu0 %v86
    %449 = vmatpush1.msra.mxu0 %v85
    %450 = vmatprep.subr.mxu0 %v88
    %451 = vmatpush1.msra.mxu0 %v87
    %452 = vmatprep.subr.mxu0 %v90
    %453 = vmatpush1.msra.mxu0 %v89
    %454 = vmatprep.subr.mxu0 %v92
    %455 = vmatpush1.msra.mxu0 %v91
    %456 = vmatprep.subr.mxu0 %v94
    %457 = vmatpush1.msra.mxu0 %v93
    %458 = vmatprep.subr.mxu0 %v96
    %459 = vmatpush1.msra.mxu0 %v95
    %460 = vmatprep.subr.mxu0 %v98
    %461 = vmatpush1.msra.mxu0 %v97
    %462 = vmatprep.subr.mxu0 %v100
    %463 = vmatpush1.msra.mxu0 %v99
    %464 = vmatprep.subr.mxu0 %v102
    %465 = vmatpush1.msra.mxu0 %v101
    %466 = vmatprep.subr.mxu0 %v104
    %467 = vmatpush1.msra.mxu0 %v103
    %468 = vmatprep.subr.mxu0 %v106
    %469 = vmatpush1.msra.mxu0 %v105
    %470 = vmatprep.subr.mxu0 %v108
    %471 = vmatpush1.msra.mxu0 %v107
    %472 = vmatprep.subr.mxu0 %v110
    %473 = vmatpush1.msra.mxu0 %v109
    %474 = vmatprep.subr.mxu0 0.0
    %475 = vmatpush1.msra.mxu0 0.0
    %476 = vmatprep.subr.mxu0 0.0
    %477 = vmatpush1.msra.mxu0 0.0
    %478 = vmatprep.subr.mxu0 0.0
    %479 = vmatpush1.msra.mxu0 0.0
    %480 = vmatprep.subr.mxu0 0.0
    %481 = vmatpush1.msra.mxu0 0.0
    %482 = vmatprep.subr.mxu0 0.0
    %483 = vmatpush1.msra.mxu0 0.0
    %484 = vmatprep.subr.mxu0 0.0
    %485 = vmatpush1.msra.mxu0 0.0
    %486 = vmatprep.subr.mxu0 0.0
    %487 = vmatpush1.msra.mxu0 0.0
    %488 = vmatprep.subr.mxu0 0.0
    %489 = vmatpush1.msra.mxu0 0.0
    %490 = vmatprep.subr.mxu0 0.0
    %491 = vmatpush1.msra.mxu0 0.0
    %492 = vmatprep.subr.mxu0 0.0
    %493 = vmatpush1.msra.mxu0 0.0
    %494 = vmatprep.subr.mxu0 0.0
    %495 = vmatpush1.msra.mxu0 0.0
    %496 = vmatprep.subr.mxu0 0.0
    %497 = vmatpush1.msra.mxu0 0.0
    %498 = vmatprep.subr.mxu0 0.0
    %499 = vmatpush1.msra.mxu0 0.0
    %500 = vmatprep.subr.mxu0 0.0
    %501 = vmatpush1.msra.mxu0 0.0
    %502 = vmatprep.subr.mxu0 0.0
    %503 = vmatpush1.msra.mxu0 0.0
    %504 = vmatprep.subr.mxu0 0.0
    %505 = vmatpush1.msra.mxu0 0.0
    %506 = vmatprep.mubr.f32.mxu0 0.0
    %507 = vmatmul.mubr.f32.gmra.mrb[0].mxu0 %v428
    %v508 = vpop.f32.mrb[0].mxu0
    %v509 = vadd.f32 0.0, %v508
    %v510 = vpop.f32.mrb[0].mxu0
    %v511 = vadd.f32 0.0, %v510
    %512 = vdwg.mxu0
    %v513 = vadd.f32 %v439, %v509
    %v514 = vadd.f32 %v440, %v511
    %v515 = vadd.f32 %v513, %v199
    %v516 = vadd.f32 %v514, %v203
    %v517 = vxor.u32 %v515, 2147483648
    %v518 = vxor.u32 %v516, 2147483648
    %v519 = vmul.f32 %v517, 1.442695
    %v520 = vpow.pop %v519
    %v521 = vmul.f32 %v518, 1.442695
    %v522 = vpow.pop %v521
    %v523 = vadd.f32 %v520, 1.0
    %v524 = vadd.f32 %v522, 1.0
    %v525 = vrcp.pop %v523
    %v526 = vmul.f32 1.0, %v525
    %v527 = vrcp.pop %v524
    %v528 = vmul.f32 1.0, %v527
    %v529 = vmul.f32 %v526, %v441
    %v530 = vmul.f32 %v528, %v428
    %v531 = vadd.f32 %v529, %v530
    %v532 = vtanh.pop %v531
    %v533 = vadd.f32 %v532, %v435
    %s534 = scalar_lea.vmem [#allocation3], 32
    %535 = vst [vmem:[%s534] sm:$0xff] %v533
    %s536 = scalar_lea.vmem %s59, 12
    %v537 = vld [vmem:[%s536] sm:$0xf]
    %v538 = vunpack.c.l.bf16 %v537
    %s539 = scalar_lea.vmem %s68, 36
    %v540 = vld [vmem:[%s539] sm:$0xff]
    %v541 = vld [vmem:[%s539 + $0x8] sm:$0xf]
    %v542 = vunpack.c.l.bf16 %v540
    %v543 = vunpack.c.h.bf16 %v540
    %v544 = vunpack.c.l.bf16 %v541
    %545 = vmatprep.subr.mxu0 %v80
    %546 = vmatpush1.msra.mxu0 %v79
    %547 = vmatprep.subr.mxu0 %v82
    %548 = vmatpush1.msra.mxu0 %v81
    %549 = vmatprep.subr.mxu0 %v84
    %550 = vmatpush1.msra.mxu0 %v83
    %551 = vmatprep.subr.mxu0 %v86
    %552 = vmatpush1.msra.mxu0 %v85
    %553 = vmatprep.subr.mxu0 %v88
    %554 = vmatpush1.msra.mxu0 %v87
    %555 = vmatprep.subr.mxu0 %v90
    %556 = vmatpush1.msra.mxu0 %v89
    %557 = vmatprep.subr.mxu0 %v92
    %558 = vmatpush1.msra.mxu0 %v91
    %559 = vmatprep.subr.mxu0 %v94
    %560 = vmatpush1.msra.mxu0 %v93
    %561 = vmatprep.subr.mxu0 %v96
    %562 = vmatpush1.msra.mxu0 %v95
    %563 = vmatprep.subr.mxu0 %v98
    %564 = vmatpush1.msra.mxu0 %v97
    %565 = vmatprep.subr.mxu0 %v100
    %566 = vmatpush1.msra.mxu0 %v99
    %567 = vmatprep.subr.mxu0 %v102
    %568 = vmatpush1.msra.mxu0 %v101
    %569 = vmatprep.subr.mxu0 %v104
    %570 = vmatpush1.msra.mxu0 %v103
    %571 = vmatprep.subr.mxu0 %v106
    %572 = vmatpush1.msra.mxu0 %v105
    %573 = vmatprep.subr.mxu0 %v108
    %574 = vmatpush1.msra.mxu0 %v107
    %575 = vmatprep.subr.mxu0 %v110
    %576 = vmatpush1.msra.mxu0 %v109
    %577 = vmatprep.subr.mxu0 0.0
    %578 = vmatpush1.msra.mxu0 0.0
    %579 = vmatprep.subr.mxu0 0.0
    %580 = vmatpush1.msra.mxu0 0.0
    %581 = vmatprep.subr.mxu0 0.0
    %582 = vmatpush1.msra.mxu0 0.0
    %583 = vmatprep.subr.mxu0 0.0
    %584 = vmatpush1.msra.mxu0 0.0
    %585 = vmatprep.subr.mxu0 0.0
    %586 = vmatpush1.msra.mxu0 0.0
    %587 = vmatprep.subr.mxu0 0.0
    %588 = vmatpush1.msra.mxu0 0.0
    %589 = vmatprep.subr.mxu0 0.0
    %590 = vmatpush1.msra.mxu0 0.0
    %591 = vmatprep.subr.mxu0 0.0
    %592 = vmatpush1.msra.mxu0 0.0
    %593 = vmatprep.subr.mxu0 0.0
    %594 = vmatpush1.msra.mxu0 0.0
    %595 = vmatprep.subr.mxu0 0.0
    %596 = vmatpush1.msra.mxu0 0.0
    %597 = vmatprep.subr.mxu0 0.0
    %598 = vmatpush1.msra.mxu0 0.0
    %599 = vmatprep.subr.mxu0 0.0
    %600 = vmatpush1.msra.mxu0 0.0
    %601 = vmatprep.subr.mxu0 0.0
    %602 = vmatpush1.msra.mxu0 0.0
    %603 = vmatprep.subr.mxu0 0.0
    %604 = vmatpush1.msra.mxu0 0.0
    %605 = vmatprep.subr.mxu0 0.0
    %606 = vmatpush1.msra.mxu0 0.0
    %607 = vmatprep.subr.mxu0 0.0
    %608 = vmatpush1.msra.mxu0 0.0
    %609 = vmatprep.mubr.f32.mxu0 0.0
    %610 = vmatmul.mubr.f32.gmra.mrb[0].mxu0 %v531
    %v611 = vpop.f32.mrb[0].mxu0
    %v612 = vadd.f32 0.0, %v611
    %v613 = vpop.f32.mrb[0].mxu0
    %v614 = vadd.f32 0.0, %v613
    %615 = vdwg.mxu0
    %v616 = vadd.f32 %v542, %v612
    %v617 = vadd.f32 %v543, %v614
    %v618 = vadd.f32 %v616, %v199
    %v619 = vadd.f32 %v617, %v203
    %v620 = vxor.u32 %v618, 2147483648
    %v621 = vxor.u32 %v619, 2147483648
    %v622 = vmul.f32 %v620, 1.442695
    %v623 = vpow.pop %v622
    %v624 = vmul.f32 %v621, 1.442695
    %v625 = vpow.pop %v624
    %v626 = vadd.f32 %v623, 1.0
    %v627 = vadd.f32 %v625, 1.0
    %v628 = vrcp.pop %v626
    %v629 = vmul.f32 1.0, %v628
    %v630 = vrcp.pop %v627
    %v631 = vmul.f32 1.0, %v630
    %v632 = vmul.f32 %v629, %v544
    %v633 = vmul.f32 %v631, %v531
    %v634 = vadd.f32 %v632, %v633
    %v635 = vtanh.pop %v634
    %v636 = vadd.f32 %v635, %v538
    %s637 = scalar_lea.vmem [#allocation3], 24
    %638 = vst [vmem:[%s637] sm:$0xff] %v636
    %s639 = scalar_lea.vmem %s59, 8
    %v640 = vld [vmem:[%s639] sm:$0xf]
    %v641 = vunpack.c.l.bf16 %v640
    %s642 = scalar_lea.vmem %s68, 24
    %v643 = vld [vmem:[%s642] sm:$0xff]
    %v644 = vld [vmem:[%s642 + $0x8] sm:$0xf]
    %v645 = vunpack.c.l.bf16 %v643
    %v646 = vunpack.c.h.bf16 %v643
    %v647 = vunpack.c.l.bf16 %v644
    %648 = vmatprep.subr.mxu0 %v80
    %649 = vmatpush1.msra.mxu0 %v79
    %650 = vmatprep.subr.mxu0 %v82
    %651 = vmatpush1.msra.mxu0 %v81
    %652 = vmatprep.subr.mxu0 %v84
    %653 = vmatpush1.msra.mxu0 %v83
    %654 = vmatprep.subr.mxu0 %v86
    %655 = vmatpush1.msra.mxu0 %v85
    %656 = vmatprep.subr.mxu0 %v88
    %657 = vmatpush1.msra.mxu0 %v87
    %658 = vmatprep.subr.mxu0 %v90
    %659 = vmatpush1.msra.mxu0 %v89
    %660 = vmatprep.subr.mxu0 %v92
    %661 = vmatpush1.msra.mxu0 %v91
    %662 = vmatprep.subr.mxu0 %v94
    %663 = vmatpush1.msra.mxu0 %v93
    %664 = vmatprep.subr.mxu0 %v96
    %665 = vmatpush1.msra.mxu0 %v95
    %666 = vmatprep.subr.mxu0 %v98
    %667 = vmatpush1.msra.mxu0 %v97
    %668 = vmatprep.subr.mxu0 %v100
    %669 = vmatpush1.msra.mxu0 %v99
    %670 = vmatprep.subr.mxu0 %v102
    %671 = vmatpush1.msra.mxu0 %v101
    %672 = vmatprep.subr.mxu0 %v104
    %673 = vmatpush1.msra.mxu0 %v103
    %674 = vmatprep.subr.mxu0 %v106
    %675 = vmatpush1.msra.mxu0 %v105
    %676 = vmatprep.subr.mxu0 %v108
    %677 = vmatpush1.msra.mxu0 %v107
    %678 = vmatprep.subr.mxu0 %v110
    %679 = vmatpush1.msra.mxu0 %v109
    %680 = vmatprep.subr.mxu0 0.0
    %681 = vmatpush1.msra.mxu0 0.0
    %682 = vmatprep.subr.mxu0 0.0
    %683 = vmatpush1.msra.mxu0 0.0
    %684 = vmatprep.subr.mxu0 0.0
    %685 = vmatpush1.msra.mxu0 0.0
    %686 = vmatprep.subr.mxu0 0.0
    %687 = vmatpush1.msra.mxu0 0.0
    %688 = vmatprep.subr.mxu0 0.0
    %689 = vmatpush1.msra.mxu0 0.0
    %690 = vmatprep.subr.mxu0 0.0
    %691 = vmatpush1.msra.mxu0 0.0
    %692 = vmatprep.subr.mxu0 0.0
    %693 = vmatpush1.msra.mxu0 0.0
    %694 = vmatprep.subr.mxu0 0.0
    %695 = vmatpush1.msra.mxu0 0.0
    %696 = vmatprep.subr.mxu0 0.0
    %697 = vmatpush1.msra.mxu0 0.0
    %698 = vmatprep.subr.mxu0 0.0
    %699 = vmatpush1.msra.mxu0 0.0
    %700 = vmatprep.subr.mxu0 0.0
    %701 = vmatpush1.msra.mxu0 0.0
    %702 = vmatprep.subr.mxu0 0.0
    %703 = vmatpush1.msra.mxu0 0.0
    %704 = vmatprep.subr.mxu0 0.0
    %705 = vmatpush1.msra.mxu0 0.0
    %706 = vmatprep.subr.mxu0 0.0
    %707 = vmatpush1.msra.mxu0 0.0
    %708 = vmatprep.subr.mxu0 0.0
    %709 = vmatpush1.msra.mxu0 0.0
    %710 = vmatprep.subr.mxu0 0.0
    %711 = vmatpush1.msra.mxu0 0.0
    %712 = vmatprep.mubr.f32.mxu0 0.0
    %713 = vmatmul.mubr.f32.gmra.mrb[0].mxu0 %v634
    %v714 = vpop.f32.mrb[0].mxu0
    %v715 = vadd.f32 0.0, %v714
    %v716 = vpop.f32.mrb[0].mxu0
    %v717 = vadd.f32 0.0, %v716
    %718 = vdwg.mxu0
    %v719 = vadd.f32 %v645, %v715
    %v720 = vadd.f32 %v646, %v717
    %v721 = vadd.f32 %v719, %v199
    %v722 = vadd.f32 %v720, %v203
    %v723 = vxor.u32 %v721, 2147483648
    %v724 = vxor.u32 %v722, 2147483648
    %v725 = vmul.f32 %v723, 1.442695
    %v726 = vpow.pop %v725
    %v727 = vmul.f32 %v724, 1.442695
    %v728 = vpow.pop %v727
    %v729 = vadd.f32 %v726, 1.0
    %v730 = vadd.f32 %v728, 1.0
    %v731 = vrcp.pop %v729
    %v732 = vmul.f32 1.0, %v731
    %v733 = vrcp.pop %v730
    %v734 = vmul.f32 1.0, %v733
    %v735 = vmul.f32 %v732, %v647
    %v736 = vmul.f32 %v734, %v634
    %v737 = vadd.f32 %v735, %v736
    %v738 = vtanh.pop %v737
    %v739 = vadd.f32 %v738, %v641
    %s740 = scalar_lea.vmem [#allocation3], 16
    %741 = vst [vmem:[%s740] sm:$0xff] %v739
    %s742 = scalar_lea.vmem %s59, 4
    %v743 = vld [vmem:[%s742] sm:$0xf]
    %v744 = vunpack.c.l.bf16 %v743
    %s745 = scalar_lea.vmem %s68, 12
    %v746 = vld [vmem:[%s745] sm:$0xff]
    %v747 = vld [vmem:[%s745 + $0x8] sm:$0xf]
    %v748 = vunpack.c.l.bf16 %v746
    %v749 = vunpack.c.h.bf16 %v746
    %v750 = vunpack.c.l.bf16 %v747
    %751 = vmatprep.subr.mxu0 %v80
    %752 = vmatpush1.msra.mxu0 %v79
    %753 = vmatprep.subr.mxu0 %v82
    %754 = vmatpush1.msra.mxu0 %v81
    %755 = vmatprep.subr.mxu0 %v84
    %756 = vmatpush1.msra.mxu0 %v83
    %757 = vmatprep.subr.mxu0 %v86
    %758 = vmatpush1.msra.mxu0 %v85
    %759 = vmatprep.subr.mxu0 %v88
    %760 = vmatpush1.msra.mxu0 %v87
    %761 = vmatprep.subr.mxu0 %v90
    %762 = vmatpush1.msra.mxu0 %v89
    %763 = vmatprep.subr.mxu0 %v92
    %764 = vmatpush1.msra.mxu0 %v91
    %765 = vmatprep.subr.mxu0 %v94
    %766 = vmatpush1.msra.mxu0 %v93
    %767 = vmatprep.subr.mxu0 %v96
    %768 = vmatpush1.msra.mxu0 %v95
    %769 = vmatprep.subr.mxu0 %v98
    %770 = vmatpush1.msra.mxu0 %v97
    %771 = vmatprep.subr.mxu0 %v100
    %772 = vmatpush1.msra.mxu0 %v99
    %773 = vmatprep.subr.mxu0 %v102
    %774 = vmatpush1.msra.mxu0 %v101
    %775 = vmatprep.subr.mxu0 %v104
    %776 = vmatpush1.msra.mxu0 %v103
    %777 = vmatprep.subr.mxu0 %v106
    %778 = vmatpush1.msra.mxu0 %v105
    %779 = vmatprep.subr.mxu0 %v108
    %780 = vmatpush1.msra.mxu0 %v107
    %781 = vmatprep.subr.mxu0 %v110
    %782 = vmatpush1.msra.mxu0 %v109
    %783 = vmatprep.subr.mxu0 0.0
    %784 = vmatpush1.msra.mxu0 0.0
    %785 = vmatprep.subr.mxu0 0.0
    %786 = vmatpush1.msra.mxu0 0.0
    %787 = vmatprep.subr.mxu0 0.0
    %788 = vmatpush1.msra.mxu0 0.0
    %789 = vmatprep.subr.mxu0 0.0
    %790 = vmatpush1.msra.mxu0 0.0
    %791 = vmatprep.subr.mxu0 0.0
    %792 = vmatpush1.msra.mxu0 0.0
    %793 = vmatprep.subr.mxu0 0.0
    %794 = vmatpush1.msra.mxu0 0.0
    %795 = vmatprep.subr.mxu0 0.0
    %796 = vmatpush1.msra.mxu0 0.0
    %797 = vmatprep.subr.mxu0 0.0
    %798 = vmatpush1.msra.mxu0 0.0
    %799 = vmatprep.subr.mxu0 0.0
    %800 = vmatpush1.msra.mxu0 0.0
    %801 = vmatprep.subr.mxu0 0.0
    %802 = vmatpush1.msra.mxu0 0.0
    %803 = vmatprep.subr.mxu0 0.0
    %804 = vmatpush1.msra.mxu0 0.0
    %805 = vmatprep.subr.mxu0 0.0
    %806 = vmatpush1.msra.mxu0 0.0
    %807 = vmatprep.subr.mxu0 0.0
    %808 = vmatpush1.msra.mxu0 0.0
    %809 = vmatprep.subr.mxu0 0.0
    %810 = vmatpush1.msra.mxu0 0.0
    %811 = vmatprep.subr.mxu0 0.0
    %812 = vmatpush1.msra.mxu0 0.0
    %813 = vmatprep.subr.mxu0 0.0
    %814 = vmatpush1.msra.mxu0 0.0
    %815 = vmatprep.mubr.f32.mxu0 0.0
    %816 = vmatmul.mubr.f32.gmra.mrb[0].mxu0 %v737
    %v817 = vpop.f32.mrb[0].mxu0
    %v818 = vadd.f32 0.0, %v817
    %v819 = vpop.f32.mrb[0].mxu0
    %v820 = vadd.f32 0.0, %v819
    %821 = vdwg.mxu0
    %v822 = vadd.f32 %v748, %v818
    %v823 = vadd.f32 %v749, %v820
    %v824 = vadd.f32 %v822, %v199
    %v825 = vadd.f32 %v823, %v203
    %v826 = vxor.u32 %v824, 2147483648
    %v827 = vxor.u32 %v825, 2147483648
    %v828 = vmul.f32 %v826, 1.442695
    %v829 = vpow.pop %v828
    %v830 = vmul.f32 %v827, 1.442695
    %v831 = vpow.pop %v830
    %v832 = vadd.f32 %v829, 1.0
    %v833 = vadd.f32 %v831, 1.0
    %v834 = vrcp.pop %v832
    %v835 = vmul.f32 1.0, %v834
    %v836 = vrcp.pop %v833
    %v837 = vmul.f32 1.0, %v836
    %v838 = vmul.f32 %v835, %v750
    %v839 = vmul.f32 %v837, %v737
    %v840 = vadd.f32 %v838, %v839
    %v841 = vtanh.pop %v840
    %v842 = vadd.f32 %v841, %v744
    %s843 = scalar_lea.vmem [#allocation3], 8
    %844 = vst [vmem:[%s843] sm:$0xff] %v842
    %v845 = vld [vmem:[%s59] sm:$0xf]
    %v846 = vunpack.c.l.bf16 %v845
    %v847 = vld [vmem:[%s68] sm:$0xff]
    %v848 = vld [vmem:[%s68 + $0x8] sm:$0xf]
    %v849 = vunpack.c.l.bf16 %v847
    %v850 = vunpack.c.h.bf16 %v847
    %v851 = vunpack.c.l.bf16 %v848
    %852 = vmatprep.subr.mxu0 %v80
    %853 = vmatpush1.msra.mxu0 %v79
    %854 = vmatprep.subr.mxu0 %v82
    %855 = vmatpush1.msra.mxu0 %v81
    %856 = vmatprep.subr.mxu0 %v84
    %857 = vmatpush1.msra.mxu0 %v83
    %858 = vmatprep.subr.mxu0 %v86
    %859 = vmatpush1.msra.mxu0 %v85
    %860 = vmatprep.subr.mxu0 %v88
    %861 = vmatpush1.msra.mxu0 %v87
    %862 = vmatprep.subr.mxu0 %v90
    %863 = vmatpush1.msra.mxu0 %v89
    %864 = vmatprep.subr.mxu0 %v92
    %865 = vmatpush1.msra.mxu0 %v91
    %866 = vmatprep.subr.mxu0 %v94
    %867 = vmatpush1.msra.mxu0 %v93
    %868 = vmatprep.subr.mxu0 %v96
    %869 = vmatpush1.msra.mxu0 %v95
    %870 = vmatprep.subr.mxu0 %v98
    %871 = vmatpush1.msra.mxu0 %v97
    %872 = vmatprep.subr.mxu0 %v100
    %873 = vmatpush1.msra.mxu0 %v99
    %874 = vmatprep.subr.mxu0 %v102
    %875 = vmatpush1.msra.mxu0 %v101
    %876 = vmatprep.subr.mxu0 %v104
    %877 = vmatpush1.msra.mxu0 %v103
    %878 = vmatprep.subr.mxu0 %v106
    %879 = vmatpush1.msra.mxu0 %v105
    %880 = vmatprep.subr.mxu0 %v108
    %881 = vmatpush1.msra.mxu0 %v107
    %882 = vmatprep.subr.mxu0 %v110
    %883 = vmatpush1.msra.mxu0 %v109
    %884 = vmatprep.subr.mxu0 0.0
    %885 = vmatpush1.msra.mxu0 0.0
    %886 = vmatprep.subr.mxu0 0.0
    %887 = vmatpush1.msra.mxu0 0.0
    %888 = vmatprep.subr.mxu0 0.0
    %889 = vmatpush1.msra.mxu0 0.0
    %890 = vmatprep.subr.mxu0 0.0
    %891 = vmatpush1.msra.mxu0 0.0
    %892 = vmatprep.subr.mxu0 0.0
    %893 = vmatpush1.msra.mxu0 0.0
    %894 = vmatprep.subr.mxu0 0.0
    %895 = vmatpush1.msra.mxu0 0.0
    %896 = vmatprep.subr.mxu0 0.0
    %897 = vmatpush1.msra.mxu0 0.0
    %898 = vmatprep.subr.mxu0 0.0
    %899 = vmatpush1.msra.mxu0 0.0
    %900 = vmatprep.subr.mxu0 0.0
    %901 = vmatpush1.msra.mxu0 0.0
    %902 = vmatprep.subr.mxu0 0.0
    %903 = vmatpush1.msra.mxu0 0.0
    %904 = vmatprep.subr.mxu0 0.0
    %905 = vmatpush1.msra.mxu0 0.0
    %906 = vmatprep.subr.mxu0 0.0
    %907 = vmatpush1.msra.mxu0 0.0
    %908 = vmatprep.subr.mxu0 0.0
    %909 = vmatpush1.msra.mxu0 0.0
    %910 = vmatprep.subr.mxu0 0.0
    %911 = vmatpush1.msra.mxu0 0.0
    %912 = vmatprep.subr.mxu0 0.0
    %913 = vmatpush1.msra.mxu0 0.0
    %914 = vmatprep.subr.mxu0 0.0
    %915 = vmatpush1.msra.mxu0 0.0
    %916 = vmatprep.mubr.f32.mxu0 0.0
    %917 = vmatmul.mubr.f32.gmra.mrb[0].mxu0 %v840
    %v918 = vpop.f32.mrb[0].mxu0
    %v919 = vadd.f32 0.0, %v918
    %v920 = vpop.f32.mrb[0].mxu0
    %v921 = vadd.f32 0.0, %v920
    %922 = vdwg.mxu0
    %v923 = vadd.f32 %v849, %v919
    %v924 = vadd.f32 %v850, %v921
    %v925 = vadd.f32 %v923, %v199
    %v926 = vadd.f32 %v924, %v203
    %v927 = vxor.u32 %v925, 2147483648
    %v928 = vxor.u32 %v926, 2147483648
    %v929 = vmul.f32 %v927, 1.442695
    %v930 = vpow.pop %v929
    %v931 = vmul.f32 %v928, 1.442695
    %v932 = vpow.pop %v931
    %v933 = vadd.f32 %v930, 1.0
    %v934 = vadd.f32 %v932, 1.0
    %v935 = vrcp.pop %v933
    %v936 = vmul.f32 1.0, %v935
    %v937 = vrcp.pop %v934
    %v938 = vmul.f32 1.0, %v937
    %v939 = vmul.f32 %v936, %v851
    %v940 = vmul.f32 %v938, %v840
    %v941 = vadd.f32 %v939, %v940
    %v942 = vtanh.pop %v941
    %v943 = vadd.f32 %v942, %v846
    %944 = vst [vmem:[#allocation3] sm:$0xff] %v943
    %945 = vst [vmem:[#allocation2] sm:$0xff] %v941
    // Predicated region
    $region26: #{encoder_forward.7} parent=1 // pred_check
      %p946 = pneg %p73
    $region27: #{encoder_forward.7} parent=1 // pred_check_branch
      %948 = sbr.rel (%p946) target = $region29
    $region28: #{encoder_forward.7} parent=1 // pred_region
      %949 = vst [vmem:[#allocation5] sm:$0xff] %v941
    $region29: #{encoder_forward.7} parent=1 // pred_fallthru
      _
    // Predicated region
    $region30: #{encoder_forward.7} parent=1 // pred_check
      _
    $region31: #{encoder_forward.7} parent=1 // pred_check_branch
      %951 = sbr.rel (0) target = $region33
    $region32: #{encoder_forward.7} parent=1 // pred_region
      %s952 = ssub.s32 0, 0
      %s953 = smul.u32 8, %s952
      %s955 = ssub.s32 1024, 1024
      %956 = vsyncadd [#allocation4], %s955
      %s957 = smul.addr %s953, 128
      %s958 = scalar_lea.hbm %s5, %s957
      %s959 = sshll.u32 [#allocation3], 4
      %s960 = int_to_ptr.vmem [resolvable:$true] %s959
      %965 = dma.vmem_to_hbm [thread:$0]  %s960, 1024, %s958, [#allocation4], 128, 128, 8
    $region33: #{encoder_forward.7} parent=1 // pred_fallthru
      _
    // Predicated region
    $region34: #{encoder_forward.7} parent=1 // pred_check
      _
    $region35: #{encoder_forward.7} parent=1 // pred_check_branch
      %967 = sbr.rel (0) target = $region37
    $region36: #{encoder_forward.7} parent=1 // pred_region
      %s969 = ssub.s32 128, 128
      %970 = vsyncadd [#allocation6], %s969
      %s972 = sshll.u32 [#allocation5], 4
      %s973 = int_to_ptr.vmem [resolvable:$true] %s972
      %975 = dma.vmem_to_hbm [thread:$0]  %s973, 128, %s6, [#allocation6]
    $region37: #{encoder_forward.7} parent=1 // pred_fallthru
      _
    // Predicated region
    $region38: #{encoder_forward.7} parent=1 // pred_check
      _
    $region39: #{encoder_forward.7} parent=1 // pred_check_branch
      %977 = sbr.rel (0) target = $region41
    $region40: #{encoder_forward.7} parent=1 // pred_region
      %978 = dma.done [#allocation4], 1024
    $region41: #{encoder_forward.7} parent=1 // pred_fallthru
      _
    // Predicated region
    $region42: #{encoder_forward.7} parent=1 // pred_check
      _
    $region43: #{encoder_forward.7} parent=1 // pred_check_branch
      %980 = sbr.rel (0) target = $region45
    $region44: #{encoder_forward.7} parent=1 // pred_region
      %981 = dma.done [#allocation6], 128
    $region45: #{encoder_forward.7} parent=1 // pred_fallthru
      _
    %982 = vsyncpa [#allocation4], 1
    %983 = vsyncpa [#allocation6], 1

// kernel: encoder_forward.5
$region0: #{encoder_forward.5}
  #allocation0 [shape = 'u32[]', space=smem, size = 0x4, offset = 0x4, fixed_abs, tag = 'smem constant byte address 0x4 - core index']
  #allocation1 [shape = 'u32[144,128]{1,0:T(1,128)}', space=vmem, size = 0x12000, scoped, tag = 'internal scratch']
  #allocation2 [shape = 'f32[8,128]{1,0:T(8,128)}', space=vmem, size = 0x1000, scoped, tag = 'scratch operand']
  %s0 = inlined_call_operand.vmem [shape: bf16[8,8,128], index: 0, kind: input, shape index: {}]
  %s1 = inlined_call_operand.vmem [shape: bf16[8,8,384], index: 1, kind: input, shape index: {}]
  %s2 = inlined_call_operand.vmem [shape: f32[8,128], index: 2, kind: input, shape index: {}]
  %s3 = inlined_call_operand.vmem [shape: f32[128,256], index: 3, kind: input, shape index: {}]
  %s4 = inlined_call_operand.vmem [shape: f32[1,256], index: 4, kind: input, shape index: {}]
  %s5 = inlined_call_operand.vmem [shape: f32[8,8,128], index: 5, kind: output, shape index: {0}]
  %s6 = inlined_call_operand.vmem [shape: f32[8,128], index: 6, kind: output, shape index: {1}]
  %7 = xla_tuple %s5, %s6
  %s8 = sld [smem:[#allocation0]]
  $region46: #{encoder_forward.5} parent=0
    _
  %s10 = ssub.s32 1, %s8
  %s11 = scalar_select 0, %s10, %s8
  // Predicated region
  $region2: #{encoder_forward.5} parent=0 // pred_check
    _
  $region3: #{encoder_forward.5} parent=0 // pred_check_branch
    %13 = sbr.rel (0) target = $region5
  $region4: #{encoder_forward.5} parent=0 // pred_region
    %s14 = ssub.s32 0, 0
    %s15 = smul.u32 8, %s14
    %p16 = scmp.lt.s32.totalorder %s15, 7
    %s17 = scalar_select %p16, %s15, 7
    %s18 = smul.addr %s17, 4
    %s19 = scalar_lea.vmem %s0, %s18
    %s20 = ssub.s32 0, 0
    %s21 = smul.u32 8, %s20
  $region5: #{encoder_forward.5} parent=0 // pred_fallthru
    _
  // Predicated region
  $region6: #{encoder_forward.5} parent=0 // pred_check
    _
  $region7: #{encoder_forward.5} parent=0 // pred_check_branch
    %23 = sbr.rel (0) target = $region9
  $region8: #{encoder_forward.5} parent=0 // pred_region
    %s24 = ssub.s32 0, 0
    %s25 = smul.u32 8, %s24
    %p26 = scmp.lt.s32.totalorder %s25, 7
    %s27 = scalar_select %p26, %s25, 7
    %s28 = smul.addr %s27, 3
    %s29 = smul.addr %s28, 4
    %s30 = scalar_lea.vmem %s1, %s29
    %s31 = ssub.s32 0, 0
    %s32 = smul.u32 8, %s31
  $region9: #{encoder_forward.5} parent=0 // pred_fallthru
    _
  // Predicated region
  $region10: #{encoder_forward.5} parent=0 // pred_check
    _
  $region11: #{encoder_forward.5} parent=0 // pred_check_branch
    %34 = sbr.rel (0) target = $region13
  $region12: #{encoder_forward.5} parent=0 // pred_region
    _
  $region13: #{encoder_forward.5} parent=0 // pred_fallthru
    _
  // Predicated region
  $region14: #{encoder_forward.5} parent=0 // pred_check
    _
  $region15: #{encoder_forward.5} parent=0 // pred_check_branch
    %36 = sbr.rel (0) target = $region17
  $region16: #{encoder_forward.5} parent=0 // pred_region
    _
  $region17: #{encoder_forward.5} parent=0 // pred_fallthru
    _
  // Predicated region
  $region18: #{encoder_forward.5} parent=0 // pred_check
    _
  $region19: #{encoder_forward.5} parent=0 // pred_check_branch
    %38 = sbr.rel (0) target = $region21
  $region20: #{encoder_forward.5} parent=0 // pred_region
    _
  $region21: #{encoder_forward.5} parent=0 // pred_fallthru
    _
  %s39 = ssub.s32 0, 0
  %s40 = smul.u32 8, %s39
  %p41 = scmp.lt.s32.totalorder %s40, 7
  %s42 = scalar_select %p41, %s40, 7
  %s43 = smul.addr %s42, 4
  %s44 = scalar_lea.vmem %s0, %s43
  %s45 = ssub.s32 0, 0
  %s46 = smul.u32 8, %s45
  %p47 = scmp.lt.s32.totalorder %s46, 7
  %s48 = scalar_select %p47, %s46, 7
  %s49 = smul.addr %s48, 3
  %s50 = smul.addr %s49, 4
  %s51 = scalar_lea.vmem %s1, %s50
  %s52 = ssub.s32 0, 0
  %s53 = smul.u32 8, %s52
  %p54 = scmp.lt.s32.totalorder %s53, 7
  %s55 = scalar_select %p54, %s53, 7
  %s56 = smul.addr %s55, 8
  %s57 = scalar_lea.vmem %s5, %s56
  %s58 = ssub.s32 0, 0
  %s59 = smul.u32 8, %s58
  %p60 = scmp.lt.s32.totalorder %s59, 7
  %s61 = scalar_select %p60, %s59, 7
  %s62 = smul.addr %s61, 4
  %s63 = scalar_lea.vmem %s0, %s62
  %s64 = ssub.s32 0, 0
  %s65 = smul.u32 8, %s64
  %s66 = ssub.s32 0, 0
  %s67 = smul.u32 8, %s66
  %p68 = scmp.lt.s32.totalorder %s67, 7
  %s69 = scalar_select %p68, %s67, 7
  %s70 = smul.addr %s69, 3
  %s71 = smul.addr %s70, 4
  %s72 = scalar_lea.vmem %s1, %s71
  %s73 = ssub.s32 0, 0
  %s74 = smul.u32 8, %s73
  %s75 = ssub.s32 0, 0
  %s76 = smul.u32 8, %s75
  %p77 = scmp.lt.s32.totalorder %s76, 7
  %s78 = scalar_select %p77, %s76, 7
  %s79 = smul.addr %s78, 8
  %s80 = scalar_lea.vmem %s5, %s79
  %s81 = ssub.s32 0, 0
  %s82 = smul.u32 8, %s81
  %p83 = scmp.eq.s32.totalorder 0, 0
  // Predicated region
  $region22: #{encoder_forward.5} parent=0 // pred_check
    %p84 = pneg %p83
  $region23: #{encoder_forward.5} parent=0 // pred_check_branch
    %86 = sbr.rel (%p84) target = $region25
  $region24: #{encoder_forward.5} parent=0 // pred_region
    %v87 = vld [vmem:[%s2] sm:$0xff]
    %88 = vst [vmem:[#allocation2] sm:$0xff] %v87
  $region25: #{encoder_forward.5} parent=0 // pred_fallthru
    _
  %v89 = vld [vmem:[%s3] sm:$0xff]
  %v90 = vld [vmem:[%s3 + $0x8] sm:$0xff]
  %v91 = vld [vmem:[%s3 + $0x10] sm:$0xff]
  %v92 = vld [vmem:[%s3 + $0x18] sm:$0xff]
  %v93 = vld [vmem:[%s3 + $0x20] sm:$0xff]
  %v94 = vld [vmem:[%s3 + $0x28] sm:$0xff]
  %v95 = vld [vmem:[%s3 + $0x30] sm:$0xff]
  %v96 = vld [vmem:[%s3 + $0x38] sm:$0xff]
  %v97 = vld [vmem:[%s3 + $0x40] sm:$0xff]
  %v98 = vld [vmem:[%s3 + $0x48] sm:$0xff]
  %v99 = vld [vmem:[%s3 + $0x50] sm:$0xff]
  %v100 = vld [vmem:[%s3 + $0x58] sm:$0xff]
  %v101 = vld [vmem:[%s3 + $0x60] sm:$0xff]
  %v102 = vld [vmem:[%s3 + $0x68] sm:$0xff]
  %v103 = vld [vmem:[%s3 + $0x70] sm:$0xff]
  %v104 = vld [vmem:[%s3 + $0x78] sm:$0xff]
  %v105 = vld [vmem:[%s3 + $0x80] sm:$0xff]
  %v106 = vld [vmem:[%s3 + $0x88] sm:$0xff]
  %v107 = vld [vmem:[%s3 + $0x90] sm:$0xff]
  %v108 = vld [vmem:[%s3 + $0x98] sm:$0xff]
  %v109 = vld [vmem:[%s3 + $0xa0] sm:$0xff]
  %v110 = vld [vmem:[%s3 + $0xa8] sm:$0xff]
  %v111 = vld [vmem:[%s3 + $0xb0] sm:$0xff]
  %v112 = vld [vmem:[%s3 + $0xb8] sm:$0xff]
  %v113 = vld [vmem:[%s3 + $0xc0] sm:$0xff]
  %v114 = vld [vmem:[%s3 + $0xc8] sm:$0xff]
  %v115 = vld [vmem:[%s3 + $0xd0] sm:$0xff]
  %v116 = vld [vmem:[%s3 + $0xd8] sm:$0xff]
  %v117 = vld [vmem:[%s3 + $0xe0] sm:$0xff]
  %v118 = vld [vmem:[%s3 + $0xe8] sm:$0xff]
  %v119 = vld [vmem:[%s3 + $0xf0] sm:$0xff]
  %v120 = vld [vmem:[%s3 + $0xf8] sm:$0xff]
  %v121 = vld [vmem:[%s4] sm:$0x3]
  %v122 = vld [vmem:[#allocation2] sm:$0xff]
  %s123 = scalar_lea.vmem %s63, 28
  %v124 = vld [vmem:[%s123] sm:$0xf]
  %v125 = vunpack.c.l.bf16 %v124
  %s126 = scalar_lea.vmem %s72, 84
  %v127 = vld [vmem:[%s126] sm:$0xff]
  %v128 = vld [vmem:[%s126 + $0x8] sm:$0xf]
  %v129 = vunpack.c.l.bf16 %v127
  %v130 = vunpack.c.h.bf16 %v127
  %v131 = vunpack.c.l.bf16 %v128
  %132 = vmatprep.subr.mxu0 %v90
  %133 = vmatpush1.msra.mxu0 %v89
  %134 = vmatprep.subr.mxu0 %v92
  %135 = vmatpush1.msra.mxu0 %v91
  %136 = vmatprep.subr.mxu0 %v94
  %137 = vmatpush1.msra.mxu0 %v93
  %138 = vmatprep.subr.mxu0 %v96
  %139 = vmatpush1.msra.mxu0 %v95
  %140 = vmatprep.subr.mxu0 %v98
  %141 = vmatpush1.msra.mxu0 %v97
  %142 = vmatprep.subr.mxu0 %v100
  %143 = vmatpush1.msra.mxu0 %v99
  %144 = vmatprep.subr.mxu0 %v102
  %145 = vmatpush1.msra.mxu0 %v101
  %146 = vmatprep.subr.mxu0 %v104
  %147 = vmatpush1.msra.mxu0 %v103
  %148 = vmatprep.subr.mxu0 %v106
  %149 = vmatpush1.msra.mxu0 %v105
  %150 = vmatprep.subr.mxu0 %v108
  %151 = vmatpush1.msra.mxu0 %v107
  %152 = vmatprep.subr.mxu0 %v110
  %153 = vmatpush1.msra.mxu0 %v109
  %154 = vmatprep.subr.mxu0 %v112
  %155 = vmatpush1.msra.mxu0 %v111
  %156 = vmatprep.subr.mxu0 %v114
  %157 = vmatpush1.msra.mxu0 %v113
  %158 = vmatprep.subr.mxu0 %v116
  %159 = vmatpush1.msra.mxu0 %v115
  %160 = vmatprep.subr.mxu0 %v118
  %161 = vmatpush1.msra.mxu0 %v117
  %162 = vmatprep.subr.mxu0 %v120
  %163 = vmatpush1.msra.mxu0 %v119
  %164 = vmatprep.subr.mxu0 0.0
  %165 = vmatpush1.msra.mxu0 0.0
  %166 = vmatprep.subr.mxu0 0.0
  %167 = vmatpush1.msra.mxu0 0.0
  %168 = vmatprep.subr.mxu0 0.0
  %169 = vmatpush1.msra.mxu0 0.0
  %170 = vmatprep.subr.mxu0 0.0
  %171 = vmatpush1.msra.mxu0 0.0
  %172 = vmatprep.subr.mxu0 0.0
  %173 = vmatpush1.msra.mxu0 0.0
  %174 = vmatprep.subr.mxu0 0.0
  %175 = vmatpush1.msra.mxu0 0.0
  %176 = vmatprep.subr.mxu0 0.0
  %177 = vmatpush1.msra.mxu0 0.0
  %178 = vmatprep.subr.mxu0 0.0
  %179 = vmatpush1.msra.mxu0 0.0
  %180 = vmatprep.subr.mxu0 0.0
  %181 = vmatpush1.msra.mxu0 0.0
  %182 = vmatprep.subr.mxu0 0.0
  %183 = vmatpush1.msra.mxu0 0.0
  %184 = vmatprep.subr.mxu0 0.0
  %185 = vmatpush1.msra.mxu0 0.0
  %186 = vmatprep.subr.mxu0 0.0
  %187 = vmatpush1.msra.mxu0 0.0
  %188 = vmatprep.subr.mxu0 0.0
  %189 = vmatpush1.msra.mxu0 0.0
  %190 = vmatprep.subr.mxu0 0.0
  %191 = vmatpush1.msra.mxu0 0.0
  %192 = vmatprep.subr.mxu0 0.0
  %193 = vmatpush1.msra.mxu0 0.0
  %194 = vmatprep.subr.mxu0 0.0
  %195 = vmatpush1.msra.mxu0 0.0
  %196 = vmatprep.mubr.f32.mxu0 0.0
  %197 = vmatmul.mubr.f32.gmra.mrb[0].mxu0 %v122
  %v198 = vpop.f32.mrb[0].mxu0
  %v199 = vadd.f32 0.0, %v198
  %v200 = vpop.f32.mrb[0].mxu0
  %v201 = vadd.f32 0.0, %v200
  %202 = vdwg.mxu0
  %v203 = vadd.f32 %v129, %v199
  %v204 = vadd.f32 %v130, %v201
  %v206 = vlaneseq
  %v207 = vshrl.u32 %v206, 7
  %v208 = vsub.s32 0, %v207
  %v209 = vrot.slane %v121, %v208
  %v210 = vlaneseq
  %v211 = vshrl.u32 %v210, 7
  %v212 = vsub.s32 1, %v211
  %v213 = vrot.slane %v121, %v212
  %v216 = vadd.f32 %v203, %v209
  %v217 = vadd.f32 %v204, %v213
  %v218 = vxor.u32 %v216, 2147483648
  %v219 = vxor.u32 %v217, 2147483648
  %v220 = vmul.f32 %v218, 1.442695
  %v221 = vpow.pop %v220
  %v222 = vmul.f32 %v219, 1.442695
  %v223 = vpow.pop %v222
  %v224 = vadd.f32 %v221, 1.0
  %v225 = vadd.f32 %v223, 1.0
  %v226 = vrcp.pop %v224
  %v227 = vmul.f32 1.0, %v226
  %v228 = vrcp.pop %v225
  %v229 = vmul.f32 1.0, %v228
  %v230 = vmul.f32 %v227, %v131
  %v231 = vmul.f32 %v229, %v122
  %v232 = vadd.f32 %v230, %v231
  %v233 = vtanh.pop %v232
  %v234 = vadd.f32 %v233, %v125
  %s235 = scalar_lea.vmem %s80, 56
  %236 = vst [vmem:[%s235] sm:$0xff] %v234
  %s237 = scalar_lea.vmem %s63, 24
  %v238 = vld [vmem:[%s237] sm:$0xf]
  %v239 = vunpack.c.l.bf16 %v238
  %s240 = scalar_lea.vmem %s72, 72
  %v241 = vld [vmem:[%s240] sm:$0xff]
  %v242 = vld [vmem:[%s240 + $0x8] sm:$0xf]
  %v243 = vunpack.c.l.bf16 %v241
  %v244 = vunpack.c.h.bf16 %v241
  %v245 = vunpack.c.l.bf16 %v242
  %246 = vmatprep.subr.mxu0 %v90
  %247 = vmatpush1.msra.mxu0 %v89
  %248 = vmatprep.subr.mxu0 %v92
  %249 = vmatpush1.msra.mxu0 %v91
  %250 = vmatprep.subr.mxu0 %v94
  %251 = vmatpush1.msra.mxu0 %v93
  %252 = vmatprep.subr.mxu0 %v96
  %253 = vmatpush1.msra.mxu0 %v95
  %254 = vmatprep.subr.mxu0 %v98
  %255 = vmatpush1.msra.mxu0 %v97
  %256 = vmatprep.subr.mxu0 %v100
  %257 = vmatpush1.msra.mxu0 %v99
  %258 = vmatprep.subr.mxu0 %v102
  %259 = vmatpush1.msra.mxu0 %v101
  %260 = vmatprep.subr.mxu0 %v104
  %261 = vmatpush1.msra.mxu0 %v103
  %262 = vmatprep.subr.mxu0 %v106
  %263 = vmatpush1.msra.mxu0 %v105
  %264 = vmatprep.subr.mxu0 %v108
  %265 = vmatpush1.msra.mxu0 %v107
  %266 = vmatprep.subr.mxu0 %v110
  %267 = vmatpush1.msra.mxu0 %v109
  %268 = vmatprep.subr.mxu0 %v112
  %269 = vmatpush1.msra.mxu0 %v111
  %270 = vmatprep.subr.mxu0 %v114
  %271 = vmatpush1.msra.mxu0 %v113
  %272 = vmatprep.subr.mxu0 %v116
  %273 = vmatpush1.msra.mxu0 %v115
  %274 = vmatprep.subr.mxu0 %v118
  %275 = vmatpush1.msra.mxu0 %v117
  %276 = vmatprep.subr.mxu0 %v120
  %277 = vmatpush1.msra.mxu0 %v119
  %278 = vmatprep.subr.mxu0 0.0
  %279 = vmatpush1.msra.mxu0 0.0
  %280 = vmatprep.subr.mxu0 0.0
  %281 = vmatpush1.msra.mxu0 0.0
  %282 = vmatprep.subr.mxu0 0.0
  %283 = vmatpush1.msra.mxu0 0.0
  %284 = vmatprep.subr.mxu0 0.0
  %285 = vmatpush1.msra.mxu0 0.0
  %286 = vmatprep.subr.mxu0 0.0
  %287 = vmatpush1.msra.mxu0 0.0
  %288 = vmatprep.subr.mxu0 0.0
  %289 = vmatpush1.msra.mxu0 0.0
  %290 = vmatprep.subr.mxu0 0.0
  %291 = vmatpush1.msra.mxu0 0.0
  %292 = vmatprep.subr.mxu0 0.0
  %293 = vmatpush1.msra.mxu0 0.0
  %294 = vmatprep.subr.mxu0 0.0
  %295 = vmatpush1.msra.mxu0 0.0
  %296 = vmatprep.subr.mxu0 0.0
  %297 = vmatpush1.msra.mxu0 0.0
  %298 = vmatprep.subr.mxu0 0.0
  %299 = vmatpush1.msra.mxu0 0.0
  %300 = vmatprep.subr.mxu0 0.0
  %301 = vmatpush1.msra.mxu0 0.0
  %302 = vmatprep.subr.mxu0 0.0
  %303 = vmatpush1.msra.mxu0 0.0
  %304 = vmatprep.subr.mxu0 0.0
  %305 = vmatpush1.msra.mxu0 0.0
  %306 = vmatprep.subr.mxu0 0.0
  %307 = vmatpush1.msra.mxu0 0.0
  %308 = vmatprep.subr.mxu0 0.0
  %309 = vmatpush1.msra.mxu0 0.0
  %310 = vmatprep.mubr.f32.mxu0 0.0
  %311 = vmatmul.mubr.f32.gmra.mrb[0].mxu0 %v232
  %v312 = vpop.f32.mrb[0].mxu0
  %v313 = vadd.f32 0.0, %v312
  %v314 = vpop.f32.mrb[0].mxu0
  %v315 = vadd.f32 0.0, %v314
  %316 = vdwg.mxu0
  %v317 = vadd.f32 %v243, %v313
  %v318 = vadd.f32 %v244, %v315
  %v319 = vadd.f32 %v317, %v209
  %v320 = vadd.f32 %v318, %v213
  %v321 = vxor.u32 %v319, 2147483648
  %v322 = vxor.u32 %v320, 2147483648
  %v323 = vmul.f32 %v321, 1.442695
  %v324 = vpow.pop %v323
  %v325 = vmul.f32 %v322, 1.442695
  %v326 = vpow.pop %v325
  %v327 = vadd.f32 %v324, 1.0
  %v328 = vadd.f32 %v326, 1.0
  %v329 = vrcp.pop %v327
  %v330 = vmul.f32 1.0, %v329
  %v331 = vrcp.pop %v328
  %v332 = vmul.f32 1.0, %v331
  %v333 = vmul.f32 %v330, %v245
  %v334 = vmul.f32 %v332, %v232
  %v335 = vadd.f32 %v333, %v334
  %v336 = vtanh.pop %v335
  %v337 = vadd.f32 %v336, %v239
  %s338 = scalar_lea.vmem %s80, 48
  %339 = vst [vmem:[%s338] sm:$0xff] %v337
  %s340 = scalar_lea.vmem %s63, 20
  %v341 = vld [vmem:[%s340] sm:$0xf]
  %v342 = vunpack.c.l.bf16 %v341
  %s343 = scalar_lea.vmem %s72, 60
  %v344 = vld [vmem:[%s343] sm:$0xff]
  %v345 = vld [vmem:[%s343 + $0x8] sm:$0xf]
  %v346 = vunpack.c.l.bf16 %v344
  %v347 = vunpack.c.h.bf16 %v344
  %v348 = vunpack.c.l.bf16 %v345
  %349 = vmatprep.subr.mxu0 %v90
  %350 = vmatpush1.msra.mxu0 %v89
  %351 = vmatprep.subr.mxu0 %v92
  %352 = vmatpush1.msra.mxu0 %v91
  %353 = vmatprep.subr.mxu0 %v94
  %354 = vmatpush1.msra.mxu0 %v93
  %355 = vmatprep.subr.mxu0 %v96
  %356 = vmatpush1.msra.mxu0 %v95
  %357 = vmatprep.subr.mxu0 %v98
  %358 = vmatpush1.msra.mxu0 %v97
  %359 = vmatprep.subr.mxu0 %v100
  %360 = vmatpush1.msra.mxu0 %v99
  %361 = vmatprep.subr.mxu0 %v102
  %362 = vmatpush1.msra.mxu0 %v101
  %363 = vmatprep.subr.mxu0 %v104
  %364 = vmatpush1.msra.mxu0 %v103
  %365 = vmatprep.subr.mxu0 %v106
  %366 = vmatpush1.msra.mxu0 %v105
  %367 = vmatprep.subr.mxu0 %v108
  %368 = vmatpush1.msra.mxu0 %v107
  %369 = vmatprep.subr.mxu0 %v110
  %370 = vmatpush1.msra.mxu0 %v109
  %371 = vmatprep.subr.mxu0 %v112
  %372 = vmatpush1.msra.mxu0 %v111
  %373 = vmatprep.subr.mxu0 %v114
  %374 = vmatpush1.msra.mxu0 %v113
  %375 = vmatprep.subr.mxu0 %v116
  %376 = vmatpush1.msra.mxu0 %v115
  %377 = vmatprep.subr.mxu0 %v118
  %378 = vmatpush1.msra.mxu0 %v117
  %379 = vmatprep.subr.mxu0 %v120
  %380 = vmatpush1.msra.mxu0 %v119
  %381 = vmatprep.subr.mxu0 0.0
  %382 = vmatpush1.msra.mxu0 0.0
  %383 = vmatprep.subr.mxu0 0.0
  %384 = vmatpush1.msra.mxu0 0.0
  %385 = vmatprep.subr.mxu0 0.0
  %386 = vmatpush1.msra.mxu0 0.0
  %387 = vmatprep.subr.mxu0 0.0
  %388 = vmatpush1.msra.mxu0 0.0
  %389 = vmatprep.subr.mxu0 0.0
  %390 = vmatpush1.msra.mxu0 0.0
  %391 = vmatprep.subr.mxu0 0.0
  %392 = vmatpush1.msra.mxu0 0.0
  %393 = vmatprep.subr.mxu0 0.0
  %394 = vmatpush1.msra.mxu0 0.0
  %395 = vmatprep.subr.mxu0 0.0
  %396 = vmatpush1.msra.mxu0 0.0
  %397 = vmatprep.subr.mxu0 0.0
  %398 = vmatpush1.msra.mxu0 0.0
  %399 = vmatprep.subr.mxu0 0.0
  %400 = vmatpush1.msra.mxu0 0.0
  %401 = vmatprep.subr.mxu0 0.0
  %402 = vmatpush1.msra.mxu0 0.0
  %403 = vmatprep.subr.mxu0 0.0
  %404 = vmatpush1.msra.mxu0 0.0
  %405 = vmatprep.subr.mxu0 0.0
  %406 = vmatpush1.msra.mxu0 0.0
  %407 = vmatprep.subr.mxu0 0.0
  %408 = vmatpush1.msra.mxu0 0.0
  %409 = vmatprep.subr.mxu0 0.0
  %410 = vmatpush1.msra.mxu0 0.0
  %411 = vmatprep.subr.mxu0 0.0
  %412 = vmatpush1.msra.mxu0 0.0
  %413 = vmatprep.mubr.f32.mxu0 0.0
  %414 = vmatmul.mubr.f32.gmra.mrb[0].mxu0 %v335
  %v415 = vpop.f32.mrb[0].mxu0
  %v416 = vadd.f32 0.0, %v415
  %v417 = vpop.f32.mrb[0].mxu0
  %v418 = vadd.f32 0.0, %v417
  %419 = vdwg.mxu0
  %v420 = vadd.f32 %v346, %v416
  %v421 = vadd.f32 %v347, %v418
  %v422 = vadd.f32 %v420, %v209
  %v423 = vadd.f32 %v421, %v213
  %v424 = vxor.u32 %v422, 2147483648
  %v425 = vxor.u32 %v423, 2147483648
  %v426 = vmul.f32 %v424, 1.442695
  %v427 = vpow.pop %v426
  %v428 = vmul.f32 %v425, 1.442695
  %v429 = vpow.pop %v428
  %v430 = vadd.f32 %v427, 1.0
  %v431 = vadd.f32 %v429, 1.0
  %v432 = vrcp.pop %v430
  %v433 = vmul.f32 1.0, %v432
  %v434 = vrcp.pop %v431
  %v435 = vmul.f32 1.0, %v434
  %v436 = vmul.f32 %v433, %v348
  %v437 = vmul.f32 %v435, %v335
  %v438 = vadd.f32 %v436, %v437
  %v439 = vtanh.pop %v438
  %v440 = vadd.f32 %v439, %v342
  %s441 = scalar_lea.vmem %s80, 40
  %442 = vst [vmem:[%s441] sm:$0xff] %v440
  %s443 = scalar_lea.vmem %s63, 16
  %v444 = vld [vmem:[%s443] sm:$0xf]
  %v445 = vunpack.c.l.bf16 %v444
  %s446 = scalar_lea.vmem %s72, 48
  %v447 = vld [vmem:[%s446] sm:$0xff]
  %v448 = vld [vmem:[%s446 + $0x8] sm:$0xf]
  %v449 = vunpack.c.l.bf16 %v447
  %v450 = vunpack.c.h.bf16 %v447
  %v451 = vunpack.c.l.bf16 %v448
  %452 = vmatprep.subr.mxu0 %v90
  %453 = vmatpush1.msra.mxu0 %v89
  %454 = vmatprep.subr.mxu0 %v92
  %455 = vmatpush1.msra.mxu0 %v91
  %456 = vmatprep.subr.mxu0 %v94
  %457 = vmatpush1.msra.mxu0 %v93
  %458 = vmatprep.subr.mxu0 %v96
  %459 = vmatpush1.msra.mxu0 %v95
  %460 = vmatprep.subr.mxu0 %v98
  %461 = vmatpush1.msra.mxu0 %v97
  %462 = vmatprep.subr.mxu0 %v100
  %463 = vmatpush1.msra.mxu0 %v99
  %464 = vmatprep.subr.mxu0 %v102
  %465 = vmatpush1.msra.mxu0 %v101
  %466 = vmatprep.subr.mxu0 %v104
  %467 = vmatpush1.msra.mxu0 %v103
  %468 = vmatprep.subr.mxu0 %v106
  %469 = vmatpush1.msra.mxu0 %v105
  %470 = vmatprep.subr.mxu0 %v108
  %471 = vmatpush1.msra.mxu0 %v107
  %472 = vmatprep.subr.mxu0 %v110
  %473 = vmatpush1.msra.mxu0 %v109
  %474 = vmatprep.subr.mxu0 %v112
  %475 = vmatpush1.msra.mxu0 %v111
  %476 = vmatprep.subr.mxu0 %v114
  %477 = vmatpush1.msra.mxu0 %v113
  %478 = vmatprep.subr.mxu0 %v116
  %479 = vmatpush1.msra.mxu0 %v115
  %480 = vmatprep.subr.mxu0 %v118
  %481 = vmatpush1.msra.mxu0 %v117
  %482 = vmatprep.subr.mxu0 %v120
  %483 = vmatpush1.msra.mxu0 %v119
  %484 = vmatprep.subr.mxu0 0.0
  %485 = vmatpush1.msra.mxu0 0.0
  %486 = vmatprep.subr.mxu0 0.0
  %487 = vmatpush1.msra.mxu0 0.0
  %488 = vmatprep.subr.mxu0 0.0
  %489 = vmatpush1.msra.mxu0 0.0
  %490 = vmatprep.subr.mxu0 0.0
  %491 = vmatpush1.msra.mxu0 0.0
  %492 = vmatprep.subr.mxu0 0.0
  %493 = vmatpush1.msra.mxu0 0.0
  %494 = vmatprep.subr.mxu0 0.0
  %495 = vmatpush1.msra.mxu0 0.0
  %496 = vmatprep.subr.mxu0 0.0
  %497 = vmatpush1.msra.mxu0 0.0
  %498 = vmatprep.subr.mxu0 0.0
  %499 = vmatpush1.msra.mxu0 0.0
  %500 = vmatprep.subr.mxu0 0.0
  %501 = vmatpush1.msra.mxu0 0.0
  %502 = vmatprep.subr.mxu0 0.0
  %503 = vmatpush1.msra.mxu0 0.0
  %504 = vmatprep.subr.mxu0 0.0
  %505 = vmatpush1.msra.mxu0 0.0
  %506 = vmatprep.subr.mxu0 0.0
  %507 = vmatpush1.msra.mxu0 0.0
  %508 = vmatprep.subr.mxu0 0.0
  %509 = vmatpush1.msra.mxu0 0.0
  %510 = vmatprep.subr.mxu0 0.0
  %511 = vmatpush1.msra.mxu0 0.0
  %512 = vmatprep.subr.mxu0 0.0
  %513 = vmatpush1.msra.mxu0 0.0
  %514 = vmatprep.subr.mxu0 0.0
  %515 = vmatpush1.msra.mxu0 0.0
  %516 = vmatprep.mubr.f32.mxu0 0.0
  %517 = vmatmul.mubr.f32.gmra.mrb[0].mxu0 %v438
  %v518 = vpop.f32.mrb[0].mxu0
  %v519 = vadd.f32 0.0, %v518
  %v520 = vpop.f32.mrb[0].mxu0
  %v521 = vadd.f32 0.0, %v520
  %522 = vdwg.mxu0
  %v523 = vadd.f32 %v449, %v519
  %v524 = vadd.f32 %v450, %v521
  %v525 = vadd.f32 %v523, %v209
  %v526 = vadd.f32 %v524, %v213
  %v527 = vxor.u32 %v525, 2147483648
  %v528 = vxor.u32 %v526, 2147483648
  %v529 = vmul.f32 %v527, 1.442695
  %v530 = vpow.pop %v529
  %v531 = vmul.f32 %v528, 1.442695
  %v532 = vpow.pop %v531
  %v533 = vadd.f32 %v530, 1.0
  %v534 = vadd.f32 %v532, 1.0
  %v535 = vrcp.pop %v533
  %v536 = vmul.f32 1.0, %v535
  %v537 = vrcp.pop %v534
  %v538 = vmul.f32 1.0, %v537
  %v539 = vmul.f32 %v536, %v451
  %v540 = vmul.f32 %v538, %v438
  %v541 = vadd.f32 %v539, %v540
  %v542 = vtanh.pop %v541
  %v543 = vadd.f32 %v542, %v445
  %s544 = scalar_lea.vmem %s80, 32
  %545 = vst [vmem:[%s544] sm:$0xff] %v543
  %s546 = scalar_lea.vmem %s63, 12
  %v547 = vld [vmem:[%s546] sm:$0xf]
  %v548 = vunpack.c.l.bf16 %v547
  %s549 = scalar_lea.vmem %s72, 36
  %v550 = vld [vmem:[%s549] sm:$0xff]
  %v551 = vld [vmem:[%s549 + $0x8] sm:$0xf]
  %v552 = vunpack.c.l.bf16 %v550
  %v553 = vunpack.c.h.bf16 %v550
  %v554 = vunpack.c.l.bf16 %v551
  %555 = vmatprep.subr.mxu0 %v90
  %556 = vmatpush1.msra.mxu0 %v89
  %557 = vmatprep.subr.mxu0 %v92
  %558 = vmatpush1.msra.mxu0 %v91
  %559 = vmatprep.subr.mxu0 %v94
  %560 = vmatpush1.msra.mxu0 %v93
  %561 = vmatprep.subr.mxu0 %v96
  %562 = vmatpush1.msra.mxu0 %v95
  %563 = vmatprep.subr.mxu0 %v98
  %564 = vmatpush1.msra.mxu0 %v97
  %565 = vmatprep.subr.mxu0 %v100
  %566 = vmatpush1.msra.mxu0 %v99
  %567 = vmatprep.subr.mxu0 %v102
  %568 = vmatpush1.msra.mxu0 %v101
  %569 = vmatprep.subr.mxu0 %v104
  %570 = vmatpush1.msra.mxu0 %v103
  %571 = vmatprep.subr.mxu0 %v106
  %572 = vmatpush1.msra.mxu0 %v105
  %573 = vmatprep.subr.mxu0 %v108
  %574 = vmatpush1.msra.mxu0 %v107
  %575 = vmatprep.subr.mxu0 %v110
  %576 = vmatpush1.msra.mxu0 %v109
  %577 = vmatprep.subr.mxu0 %v112
  %578 = vmatpush1.msra.mxu0 %v111
  %579 = vmatprep.subr.mxu0 %v114
  %580 = vmatpush1.msra.mxu0 %v113
  %581 = vmatprep.subr.mxu0 %v116
  %582 = vmatpush1.msra.mxu0 %v115
  %583 = vmatprep.subr.mxu0 %v118
  %584 = vmatpush1.msra.mxu0 %v117
  %585 = vmatprep.subr.mxu0 %v120
  %586 = vmatpush1.msra.mxu0 %v119
  %587 = vmatprep.subr.mxu0 0.0
  %588 = vmatpush1.msra.mxu0 0.0
  %589 = vmatprep.subr.mxu0 0.0
  %590 = vmatpush1.msra.mxu0 0.0
  %591 = vmatprep.subr.mxu0 0.0
  %592 = vmatpush1.msra.mxu0 0.0
  %593 = vmatprep.subr.mxu0 0.0
  %594 = vmatpush1.msra.mxu0 0.0
  %595 = vmatprep.subr.mxu0 0.0
  %596 = vmatpush1.msra.mxu0 0.0
  %597 = vmatprep.subr.mxu0 0.0
  %598 = vmatpush1.msra.mxu0 0.0
  %599 = vmatprep.subr.mxu0 0.0
  %600 = vmatpush1.msra.mxu0 0.0
  %601 = vmatprep.subr.mxu0 0.0
  %602 = vmatpush1.msra.mxu0 0.0
  %603 = vmatprep.subr.mxu0 0.0
  %604 = vmatpush1.msra.mxu0 0.0
  %605 = vmatprep.subr.mxu0 0.0
  %606 = vmatpush1.msra.mxu0 0.0
  %607 = vmatprep.subr.mxu0 0.0
  %608 = vmatpush1.msra.mxu0 0.0
  %609 = vmatprep.subr.mxu0 0.0
  %610 = vmatpush1.msra.mxu0 0.0
  %611 = vmatprep.subr.mxu0 0.0
  %612 = vmatpush1.msra.mxu0 0.0
  %613 = vmatprep.subr.mxu0 0.0
  %614 = vmatpush1.msra.mxu0 0.0
  %615 = vmatprep.subr.mxu0 0.0
  %616 = vmatpush1.msra.mxu0 0.0
  %617 = vmatprep.subr.mxu0 0.0
  %618 = vmatpush1.msra.mxu0 0.0
  %619 = vmatprep.mubr.f32.mxu0 0.0
  %620 = vmatmul.mubr.f32.gmra.mrb[0].mxu0 %v541
  %v621 = vpop.f32.mrb[0].mxu0
  %v622 = vadd.f32 0.0, %v621
  %v623 = vpop.f32.mrb[0].mxu0
  %v624 = vadd.f32 0.0, %v623
  %625 = vdwg.mxu0
  %v626 = vadd.f32 %v552, %v622
  %v627 = vadd.f32 %v553, %v624
  %v628 = vadd.f32 %v626, %v209
  %v629 = vadd.f32 %v627, %v213
  %v630 = vxor.u32 %v628, 2147483648
  %v631 = vxor.u32 %v629, 2147483648
  %v632 = vmul.f32 %v630, 1.442695
  %v633 = vpow.pop %v632
  %v634 = vmul.f32 %v631, 1.442695
  %v635 = vpow.pop %v634
  %v636 = vadd.f32 %v633, 1.0
  %v637 = vadd.f32 %v635, 1.0
  %v638 = vrcp.pop %v636
  %v639 = vmul.f32 1.0, %v638
  %v640 = vrcp.pop %v637
  %v641 = vmul.f32 1.0, %v640
  %v642 = vmul.f32 %v639, %v554
  %v643 = vmul.f32 %v641, %v541
  %v644 = vadd.f32 %v642, %v643
  %v645 = vtanh.pop %v644
  %v646 = vadd.f32 %v645, %v548
  %s647 = scalar_lea.vmem %s80, 24
  %648 = vst [vmem:[%s647] sm:$0xff] %v646
  %s649 = scalar_lea.vmem %s63, 8
  %v650 = vld [vmem:[%s649] sm:$0xf]
  %v651 = vunpack.c.l.bf16 %v650
  %s652 = scalar_lea.vmem %s72, 24
  %v653 = vld [vmem:[%s652] sm:$0xff]
  %v654 = vld [vmem:[%s652 + $0x8] sm:$0xf]
  %v655 = vunpack.c.l.bf16 %v653
  %v656 = vunpack.c.h.bf16 %v653
  %v657 = vunpack.c.l.bf16 %v654
  %658 = vmatprep.subr.mxu0 %v90
  %659 = vmatpush1.msra.mxu0 %v89
  %660 = vmatprep.subr.mxu0 %v92
  %661 = vmatpush1.msra.mxu0 %v91
  %662 = vmatprep.subr.mxu0 %v94
  %663 = vmatpush1.msra.mxu0 %v93
  %664 = vmatprep.subr.mxu0 %v96
  %665 = vmatpush1.msra.mxu0 %v95
  %666 = vmatprep.subr.mxu0 %v98
  %667 = vmatpush1.msra.mxu0 %v97
  %668 = vmatprep.subr.mxu0 %v100
  %669 = vmatpush1.msra.mxu0 %v99
  %670 = vmatprep.subr.mxu0 %v102
  %671 = vmatpush1.msra.mxu0 %v101
  %672 = vmatprep.subr.mxu0 %v104
  %673 = vmatpush1.msra.mxu0 %v103
  %674 = vmatprep.subr.mxu0 %v106
  %675 = vmatpush1.msra.mxu0 %v105
  %676 = vmatprep.subr.mxu0 %v108
  %677 = vmatpush1.msra.mxu0 %v107
  %678 = vmatprep.subr.mxu0 %v110
  %679 = vmatpush1.msra.mxu0 %v109
  %680 = vmatprep.subr.mxu0 %v112
  %681 = vmatpush1.msra.mxu0 %v111
  %682 = vmatprep.subr.mxu0 %v114
  %683 = vmatpush1.msra.mxu0 %v113
  %684 = vmatprep.subr.mxu0 %v116
  %685 = vmatpush1.msra.mxu0 %v115
  %686 = vmatprep.subr.mxu0 %v118
  %687 = vmatpush1.msra.mxu0 %v117
  %688 = vmatprep.subr.mxu0 %v120
  %689 = vmatpush1.msra.mxu0 %v119
  %690 = vmatprep.subr.mxu0 0.0
  %691 = vmatpush1.msra.mxu0 0.0
  %692 = vmatprep.subr.mxu0 0.0
  %693 = vmatpush1.msra.mxu0 0.0
  %694 = vmatprep.subr.mxu0 0.0
  %695 = vmatpush1.msra.mxu0 0.0
  %696 = vmatprep.subr.mxu0 0.0
  %697 = vmatpush1.msra.mxu0 0.0
  %698 = vmatprep.subr.mxu0 0.0
  %699 = vmatpush1.msra.mxu0 0.0
  %700 = vmatprep.subr.mxu0 0.0
  %701 = vmatpush1.msra.mxu0 0.0
  %702 = vmatprep.subr.mxu0 0.0
  %703 = vmatpush1.msra.mxu0 0.0
  %704 = vmatprep.subr.mxu0 0.0
  %705 = vmatpush1.msra.mxu0 0.0
  %706 = vmatprep.subr.mxu0 0.0
  %707 = vmatpush1.msra.mxu0 0.0
  %708 = vmatprep.subr.mxu0 0.0
  %709 = vmatpush1.msra.mxu0 0.0
  %710 = vmatprep.subr.mxu0 0.0
  %711 = vmatpush1.msra.mxu0 0.0
  %712 = vmatprep.subr.mxu0 0.0
  %713 = vmatpush1.msra.mxu0 0.0
  %714 = vmatprep.subr.mxu0 0.0
  %715 = vmatpush1.msra.mxu0 0.0
  %716 = vmatprep.subr.mxu0 0.0
  %717 = vmatpush1.msra.mxu0 0.0
  %718 = vmatprep.subr.mxu0 0.0
  %719 = vmatpush1.msra.mxu0 0.0
  %720 = vmatprep.subr.mxu0 0.0
  %721 = vmatpush1.msra.mxu0 0.0
  %722 = vmatprep.mubr.f32.mxu0 0.0
  %723 = vmatmul.mubr.f32.gmra.mrb[0].mxu0 %v644
  %v724 = vpop.f32.mrb[0].mxu0
  %v725 = vadd.f32 0.0, %v724
  %v726 = vpop.f32.mrb[0].mxu0
  %v727 = vadd.f32 0.0, %v726
  %728 = vdwg.mxu0
  %v729 = vadd.f32 %v655, %v725
  %v730 = vadd.f32 %v656, %v727
  %v731 = vadd.f32 %v729, %v209
  %v732 = vadd.f32 %v730, %v213
  %v733 = vxor.u32 %v731, 2147483648
  %v734 = vxor.u32 %v732, 2147483648
  %v735 = vmul.f32 %v733, 1.442695
  %v736 = vpow.pop %v735
  %v737 = vmul.f32 %v734, 1.442695
  %v738 = vpow.pop %v737
  %v739 = vadd.f32 %v736, 1.0
  %v740 = vadd.f32 %v738, 1.0
  %v741 = vrcp.pop %v739
  %v742 = vmul.f32 1.0, %v741
  %v743 = vrcp.pop %v740
  %v744 = vmul.f32 1.0, %v743
  %v745 = vmul.f32 %v742, %v657
  %v746 = vmul.f32 %v744, %v644
  %v747 = vadd.f32 %v745, %v746
  %v748 = vtanh.pop %v747
  %v749 = vadd.f32 %v748, %v651
  %s750 = scalar_lea.vmem %s80, 16
  %751 = vst [vmem:[%s750] sm:$0xff] %v749
  %s752 = scalar_lea.vmem %s63, 4
  %v753 = vld [vmem:[%s752] sm:$0xf]
  %v754 = vunpack.c.l.bf16 %v753
  %s755 = scalar_lea.vmem %s72, 12
  %v756 = vld [vmem:[%s755] sm:$0xff]
  %v757 = vld [vmem:[%s755 + $0x8] sm:$0xf]
  %v758 = vunpack.c.l.bf16 %v756
  %v759 = vunpack.c.h.bf16 %v756
  %v760 = vunpack.c.l.bf16 %v757
  %761 = vmatprep.subr.mxu0 %v90
  %762 = vmatpush1.msra.mxu0 %v89
  %763 = vmatprep.subr.mxu0 %v92
  %764 = vmatpush1.msra.mxu0 %v91
  %765 = vmatprep.subr.mxu0 %v94
  %766 = vmatpush1.msra.mxu0 %v93
  %767 = vmatprep.subr.mxu0 %v96
  %768 = vmatpush1.msra.mxu0 %v95
  %769 = vmatprep.subr.mxu0 %v98
  %770 = vmatpush1.msra.mxu0 %v97
  %771 = vmatprep.subr.mxu0 %v100
  %772 = vmatpush1.msra.mxu0 %v99
  %773 = vmatprep.subr.mxu0 %v102
  %774 = vmatpush1.msra.mxu0 %v101
  %775 = vmatprep.subr.mxu0 %v104
  %776 = vmatpush1.msra.mxu0 %v103
  %777 = vmatprep.subr.mxu0 %v106
  %778 = vmatpush1.msra.mxu0 %v105
  %779 = vmatprep.subr.mxu0 %v108
  %780 = vmatpush1.msra.mxu0 %v107
  %781 = vmatprep.subr.mxu0 %v110
  %782 = vmatpush1.msra.mxu0 %v109
  %783 = vmatprep.subr.mxu0 %v112
  %784 = vmatpush1.msra.mxu0 %v111
  %785 = vmatprep.subr.mxu0 %v114
  %786 = vmatpush1.msra.mxu0 %v113
  %787 = vmatprep.subr.mxu0 %v116
  %788 = vmatpush1.msra.mxu0 %v115
  %789 = vmatprep.subr.mxu0 %v118
  %790 = vmatpush1.msra.mxu0 %v117
  %791 = vmatprep.subr.mxu0 %v120
  %792 = vmatpush1.msra.mxu0 %v119
  %793 = vmatprep.subr.mxu0 0.0
  %794 = vmatpush1.msra.mxu0 0.0
  %795 = vmatprep.subr.mxu0 0.0
  %796 = vmatpush1.msra.mxu0 0.0
  %797 = vmatprep.subr.mxu0 0.0
  %798 = vmatpush1.msra.mxu0 0.0
  %799 = vmatprep.subr.mxu0 0.0
  %800 = vmatpush1.msra.mxu0 0.0
  %801 = vmatprep.subr.mxu0 0.0
  %802 = vmatpush1.msra.mxu0 0.0
  %803 = vmatprep.subr.mxu0 0.0
  %804 = vmatpush1.msra.mxu0 0.0
  %805 = vmatprep.subr.mxu0 0.0
  %806 = vmatpush1.msra.mxu0 0.0
  %807 = vmatprep.subr.mxu0 0.0
  %808 = vmatpush1.msra.mxu0 0.0
  %809 = vmatprep.subr.mxu0 0.0
  %810 = vmatpush1.msra.mxu0 0.0
  %811 = vmatprep.subr.mxu0 0.0
  %812 = vmatpush1.msra.mxu0 0.0
  %813 = vmatprep.subr.mxu0 0.0
  %814 = vmatpush1.msra.mxu0 0.0
  %815 = vmatprep.subr.mxu0 0.0
  %816 = vmatpush1.msra.mxu0 0.0
  %817 = vmatprep.subr.mxu0 0.0
  %818 = vmatpush1.msra.mxu0 0.0
  %819 = vmatprep.subr.mxu0 0.0
  %820 = vmatpush1.msra.mxu0 0.0
  %821 = vmatprep.subr.mxu0 0.0
  %822 = vmatpush1.msra.mxu0 0.0
  %823 = vmatprep.subr.mxu0 0.0
  %824 = vmatpush1.msra.mxu0 0.0
  %825 = vmatprep.mubr.f32.mxu0 0.0
  %826 = vmatmul.mubr.f32.gmra.mrb[0].mxu0 %v747
  %v827 = vpop.f32.mrb[0].mxu0
  %v828 = vadd.f32 0.0, %v827
  %v829 = vpop.f32.mrb[0].mxu0
  %v830 = vadd.f32 0.0, %v829
  %831 = vdwg.mxu0
  %v832 = vadd.f32 %v758, %v828
  %v833 = vadd.f32 %v759, %v830
  %v834 = vadd.f32 %v832, %v209
  %v835 = vadd.f32 %v833, %v213
  %v836 = vxor.u32 %v834, 2147483648
  %v837 = vxor.u32 %v835, 2147483648
  %v838 = vmul.f32 %v836, 1.442695
  %v839 = vpow.pop %v838
  %v840 = vmul.f32 %v837, 1.442695
  %v841 = vpow.pop %v840
  %v842 = vadd.f32 %v839, 1.0
  %v843 = vadd.f32 %v841, 1.0
  %v844 = vrcp.pop %v842
  %v845 = vmul.f32 1.0, %v844
  %v846 = vrcp.pop %v843
  %v847 = vmul.f32 1.0, %v846
  %v848 = vmul.f32 %v845, %v760
  %v849 = vmul.f32 %v847, %v747
  %v850 = vadd.f32 %v848, %v849
  %v851 = vtanh.pop %v850
  %v852 = vadd.f32 %v851, %v754
  %s853 = scalar_lea.vmem %s80, 8
  %854 = vst [vmem:[%s853] sm:$0xff] %v852
  %v855 = vld [vmem:[%s63] sm:$0xf]
  %v856 = vunpack.c.l.bf16 %v855
  %v857 = vld [vmem:[%s72] sm:$0xff]
  %v858 = vld [vmem:[%s72 + $0x8] sm:$0xf]
  %v859 = vunpack.c.l.bf16 %v857
  %v860 = vunpack.c.h.bf16 %v857
  %v861 = vunpack.c.l.bf16 %v858
  %862 = vmatprep.subr.mxu0 %v90
  %863 = vmatpush1.msra.mxu0 %v89
  %864 = vmatprep.subr.mxu0 %v92
  %865 = vmatpush1.msra.mxu0 %v91
  %866 = vmatprep.subr.mxu0 %v94
  %867 = vmatpush1.msra.mxu0 %v93
  %868 = vmatprep.subr.mxu0 %v96
  %869 = vmatpush1.msra.mxu0 %v95
  %870 = vmatprep.subr.mxu0 %v98
  %871 = vmatpush1.msra.mxu0 %v97
  %872 = vmatprep.subr.mxu0 %v100
  %873 = vmatpush1.msra.mxu0 %v99
  %874 = vmatprep.subr.mxu0 %v102
  %875 = vmatpush1.msra.mxu0 %v101
  %876 = vmatprep.subr.mxu0 %v104
  %877 = vmatpush1.msra.mxu0 %v103
  %878 = vmatprep.subr.mxu0 %v106
  %879 = vmatpush1.msra.mxu0 %v105
  %880 = vmatprep.subr.mxu0 %v108
  %881 = vmatpush1.msra.mxu0 %v107
  %882 = vmatprep.subr.mxu0 %v110
  %883 = vmatpush1.msra.mxu0 %v109
  %884 = vmatprep.subr.mxu0 %v112
  %885 = vmatpush1.msra.mxu0 %v111
  %886 = vmatprep.subr.mxu0 %v114
  %887 = vmatpush1.msra.mxu0 %v113
  %888 = vmatprep.subr.mxu0 %v116
  %889 = vmatpush1.msra.mxu0 %v115
  %890 = vmatprep.subr.mxu0 %v118
  %891 = vmatpush1.msra.mxu0 %v117
  %892 = vmatprep.subr.mxu0 %v120
  %893 = vmatpush1.msra.mxu0 %v119
  %894 = vmatprep.subr.mxu0 0.0
  %895 = vmatpush1.msra.mxu0 0.0
  %896 = vmatprep.subr.mxu0 0.0
  %897 = vmatpush1.msra.mxu0 0.0
  %898 = vmatprep.subr.mxu0 0.0
  %899 = vmatpush1.msra.mxu0 0.0
  %900 = vmatprep.subr.mxu0 0.0
  %901 = vmatpush1.msra.mxu0 0.0
  %902 = vmatprep.subr.mxu0 0.0
  %903 = vmatpush1.msra.mxu0 0.0
  %904 = vmatprep.subr.mxu0 0.0
  %905 = vmatpush1.msra.mxu0 0.0
  %906 = vmatprep.subr.mxu0 0.0
  %907 = vmatpush1.msra.mxu0 0.0
  %908 = vmatprep.subr.mxu0 0.0
  %909 = vmatpush1.msra.mxu0 0.0
  %910 = vmatprep.subr.mxu0 0.0
  %911 = vmatpush1.msra.mxu0 0.0
  %912 = vmatprep.subr.mxu0 0.0
  %913 = vmatpush1.msra.mxu0 0.0
  %914 = vmatprep.subr.mxu0 0.0
  %915 = vmatpush1.msra.mxu0 0.0
  %916 = vmatprep.subr.mxu0 0.0
  %917 = vmatpush1.msra.mxu0 0.0
  %918 = vmatprep.subr.mxu0 0.0
  %919 = vmatpush1.msra.mxu0 0.0
  %920 = vmatprep.subr.mxu0 0.0
  %921 = vmatpush1.msra.mxu0 0.0
  %922 = vmatprep.subr.mxu0 0.0
  %923 = vmatpush1.msra.mxu0 0.0
  %924 = vmatprep.subr.mxu0 0.0
  %925 = vmatpush1.msra.mxu0 0.0
  %926 = vmatprep.mubr.f32.mxu0 0.0
  %927 = vmatmul.mubr.f32.gmra.mrb[0].mxu0 %v850
  %v928 = vpop.f32.mrb[0].mxu0
  %v929 = vadd.f32 0.0, %v928
  %v930 = vpop.f32.mrb[0].mxu0
  %v931 = vadd.f32 0.0, %v930
  %932 = vdwg.mxu0
  %v933 = vadd.f32 %v859, %v929
  %v934 = vadd.f32 %v860, %v931
  %v935 = vadd.f32 %v933, %v209
  %v936 = vadd.f32 %v934, %v213
  %v937 = vxor.u32 %v935, 2147483648
  %v938 = vxor.u32 %v936, 2147483648
  %v939 = vmul.f32 %v937, 1.442695
  %v940 = vpow.pop %v939
  %v941 = vmul.f32 %v938, 1.442695
  %v942 = vpow.pop %v941
  %v943 = vadd.f32 %v940, 1.0
  %v944 = vadd.f32 %v942, 1.0
  %v945 = vrcp.pop %v943
  %v946 = vmul.f32 1.0, %v945
  %v947 = vrcp.pop %v944
  %v948 = vmul.f32 1.0, %v947
  %v949 = vmul.f32 %v946, %v861
  %v950 = vmul.f32 %v948, %v850
  %v951 = vadd.f32 %v949, %v950
  %v952 = vtanh.pop %v951
  %v953 = vadd.f32 %v952, %v856
  %954 = vst [vmem:[%s80] sm:$0xff] %v953
  %955 = vst [vmem:[#allocation2] sm:$0xff] %v951
  // Predicated region
  $region26: #{encoder_forward.5} parent=0 // pred_check
    %p956 = pneg %p83
  $region27: #{encoder_forward.5} parent=0 // pred_check_branch
    %958 = sbr.rel (%p956) target = $region29
  $region28: #{encoder_forward.5} parent=0 // pred_region
    %959 = vst [vmem:[%s6] sm:$0xff] %v951
  $region29: #{encoder_forward.5} parent=0 // pred_fallthru
    _
  %s960 = ssub.s32 0, 0
  %s961 = smul.u32 8, %s960
  %p962 = scmp.lt.s32.totalorder %s961, 7
  %s963 = scalar_select %p962, %s961, 7
  %s964 = smul.addr %s963, 8
  %s965 = scalar_lea.vmem %s5, %s964
  // Predicated region
  $region30: #{encoder_forward.5} parent=0 // pred_check
    _
  $region31: #{encoder_forward.5} parent=0 // pred_check_branch
    %967 = sbr.rel (0) target = $region33
  $region32: #{encoder_forward.5} parent=0 // pred_region
    %s968 = ssub.s32 0, 0
    %s969 = smul.u32 8, %s968
  $region33: #{encoder_forward.5} parent=0 // pred_fallthru
    _
  // Predicated region
  $region34: #{encoder_forward.5} parent=0 // pred_check
    _
  $region35: #{encoder_forward.5} parent=0 // pred_check_branch
    %971 = sbr.rel (0) target = $region37
  $region36: #{encoder_forward.5} parent=0 // pred_region
    _
  $region37: #{encoder_forward.5} parent=0 // pred_fallthru
    _
  // Predicated region
  $region38: #{encoder_forward.5} parent=0 // pred_check
    _
  $region39: #{encoder_forward.5} parent=0 // pred_check_branch
    %973 = sbr.rel (0) target = $region41
  $region40: #{encoder_forward.5} parent=0 // pred_region
    %s974 = ssub.s32 0, 0
    %s975 = smul.u32 8, %s974
    %p976 = scmp.lt.s32.totalorder %s975, 7
    %s977 = scalar_select %p976, %s975, 7
    %s978 = smul.addr %s977, 8
    %s979 = scalar_lea.vmem %s5, %s978
  $region41: #{encoder_forward.5} parent=0 // pred_fallthru
    _
  // Predicated region
  $region42: #{encoder_forward.5} parent=0 // pred_check
    _
  $region43: #{encoder_forward.5} parent=0 // pred_check_branch
    %981 = sbr.rel (0) target = $region45
  $region44: #{encoder_forward.5} parent=0 // pred_region
    _
  $region45: #{encoder_forward.5} parent=0 // pred_fallthru
    _

</llo_original>
